<compile_context>
chip_gen: v7x
topology: tpu7x:2x2x1
jax: 0.10.0
libtpu: 0.0.40
codegen_flags: <defaults>
</compile_context>

<pallas_src>
import functools

import jax
import jax.numpy as jnp
from jax import lax
from jax.experimental import pallas as pl
from jax.experimental.pallas import tpu as pltpu

LN_EPS = 1e-5
_SQRT1_2 = 0.7071067811865476


# ----------------------------------------------------------------------------
# Kernel: one grid step processes `bb` batch elements entirely in VMEM.
# ----------------------------------------------------------------------------
def _share_refiner_kernel(sq_ref, fcl_ref, flc_ref, wn_ref, ww_ref, v_ref,
                          out_ref, *, num_heads, bb, nq, dim,
                          lay_n, lay_w, lay_v):
    f32 = jnp.float32
    H, C = num_heads, dim
    hc = C // H

    def W(name):                       # matrix block from a packed slab
        if name in lay_n:
            r0, r, cl = lay_n[name]
            return wn_ref[r0:r0 + r, 0:cl]
        r0, r, cl = lay_w[name]
        return ww_ref[r0:r0 + r, 0:cl]

    def V(name):                       # (1, width) vector row from the slab
        i, cl = lay_v[name]
        return v_ref[i:i + 1, 0:cl]

    def ln(x, gname, bname):
        mu = jnp.mean(x, axis=-1, keepdims=True)
        xc = x - mu
        var = jnp.mean(xc * xc, axis=-1, keepdims=True)
        return xc * lax.rsqrt(var + LN_EPS) * V(gname) + V(bname)

    def gelu(x):                       # exact erf-GELU == torch.nn.GELU default
        return 0.5 * x * (1.0 + lax.erf(x * _SQRT1_2))

    def mlp(x, w1, b1, w2, b2):
        h = gelu(jnp.dot(x, W(w1), preferred_element_type=f32) + V(b1))
        return jnp.dot(h, W(w2), preferred_element_type=f32) + V(b2)

    def softmax_rows(s, approx):
        s = s - jnp.max(s, axis=-1, keepdims=True)
        e = jnp.exp(s)
        d = jnp.sum(e, axis=-1, keepdims=True)
        if approx:
            return e * pl.reciprocal(d, approx=True)
        return e / d

    # ---- project_layer (Linear + GELU) + norm_x: all bb*nq rows at once ----
    x_in = sq_ref[...].astype(f32)                                       # (R, Fin)
    sq = gelu(jnp.dot(x_in, W("proj_w"), preferred_element_type=f32) + V("proj_b"))
    sq = ln(sq, "nx_g", "nx_b")                                          # (R, C)

    # ---- pre_assign_attn: CrossAttnBlock(post_norm=True) -------------------
    q = jnp.dot(sq, W("wq_s"), preferred_element_type=f32) + V("bq_s")   # scale folded
    wkT, bk_col = W("wkT"), W("bk_col")
    pf_rows = []
    for b in range(bb):
        fcl = fcl_ref[b].astype(f32)                                     # (C, L)
        flc = flc_ref[b].astype(f32)                                     # (L, C)
        kT = jnp.dot(wkT, fcl, preferred_element_type=f32) + bk_col      # (C, L) all heads
        qb = q[b * nq:(b + 1) * nq, :]
        pf_h = []
        for h in range(H):
            s = jnp.dot(qb[:, h * hc:(h + 1) * hc],
                        kT[h * hc:(h + 1) * hc, :],
                        preferred_element_type=f32)                      # (nq, L)
            p = softmax_rows(s, approx=False)    # exact: keeps folded bv@Wo bias exact
            pf_h.append(jnp.dot(p, flc, preferred_element_type=f32))     # (nq, C)
        pf_rows.append(jnp.concatenate(pf_h, axis=-1))                   # (nq, H*C)
    pf = jnp.concatenate(pf_rows, axis=0)                                # (R, H*C=128)
    attn = jnp.dot(pf, W("wvo"), preferred_element_type=f32) + V("battn")
    x = sq + attn
    x = x + mlp(ln(x, "pre_n2g", "pre_n2b"), "pre_w1", "pre_b1", "pre_w2", "pre_b2")
    x = ln(x, "pre_pg", "pre_pb")
    q1 = x + sq                                                          # += seg_query

    # ---- post_assign_attn: SelfAttnBlock(post_norm=True, fused qkv) --------
    qkv = jnp.dot(q1, W("wqkv_s"), preferred_element_type=f32) + V("bqkv_s")  # (R, 3C)
    qs, ks, vs = qkv[:, 0:C], qkv[:, C:2 * C], qkv[:, 2 * C:3 * C]
    so_rows = []
    for b in range(bb):
        r0 = b * nq
        oh = []
        for h in range(H):
            c0 = h * hc
            qh = qs[r0:r0 + nq, c0:c0 + hc]
            kh = ks[r0:r0 + nq, c0:c0 + hc]
            vh = vs[r0:r0 + nq, c0:c0 + hc]
            s = lax.dot_general(qh, kh, (((1,), (1,)), ((), ())),
                                preferred_element_type=f32)              # (nq, nq)
            p = softmax_rows(s, approx=True)
            oh.append(jnp.dot(p, vh, preferred_element_type=f32))        # (nq, hc)
        so_rows.append(jnp.concatenate(oh, axis=-1))                     # (nq, C)
    so = jnp.concatenate(so_rows, axis=0)                                # (R, C)
    y = q1 + jnp.dot(so, W("post_wo"), preferred_element_type=f32) + V("post_bo")
    y = y + mlp(ln(y, "post_n2g", "post_n2b"),
                "post_w1", "post_b1", "post_w2", "post_b2")
    y = ln(y, "post_pg", "post_pb")

    # ---- head: reduction(y) + mlp_channels(norm_out(y)) --------------------
    red = jnp.dot(ln(y, "red_g", "red_b"), W("red_w"), preferred_element_type=f32)
    mc = mlp(ln(y, "no_g", "no_b"), "mlpc_w1", "mlpc_b1", "mlpc_w2", "mlpc_b2")
    out_ref[...] = (red + mc).astype(out_ref.dtype)


# ----------------------------------------------------------------------------
# Host-side packing: fold scales / Wv@Wo / biases and build 3 slabs.
# ----------------------------------------------------------------------------
def _pad2(a, rows, cols):
    r, c = a.shape
    return jnp.pad(a, ((0, rows - r), (0, cols - c)))


def _build_matrix_slab(entries, width):
    layout, blocks, row = {}, [], 0
    for name, a in entries:
        r, c = a.shape
        rp = r + (-r) % 8
        blocks.append(_pad2(a.astype(jnp.float32), rp, width))
        layout[name] = (row, r, c)
        row += rp
    return jnp.concatenate(blocks, axis=0), layout


def _build_vector_slab(entries, width):
    layout, rows = {}, []
    for i, (name, a) in enumerate(entries):
        a = a.reshape(1, -1).astype(jnp.float32)
        layout[name] = (i, a.shape[1])
        rows.append(_pad2(a, 1, width))
    slab = jnp.concatenate(rows, axis=0)
    pad = (-slab.shape[0]) % 8
    if pad:
        slab = jnp.pad(slab, ((0, pad), (0, 0)))
    return slab, layout


def _pack_params(P, num_heads):
    pa = P["pre_attn"]
    C = pa["wq"].shape[0]
    H = num_heads
    hc = C // H
    scale = hc ** (-0.5)

    wq_s = pa["wq"] * scale                       # q scale folded
    bq_s = pa["bq"] * scale
    wkT = pa["wk"].T                              # (C, C): kT = wkT @ feat_cl
    bk_col = pa["bk"].reshape(C, 1)
    wvo = jnp.concatenate(                        # (H*C, C): head-stacked Wv@Wo
        [pa["wv"][:, h * hc:(h + 1) * hc] @ pa["wo"][h * hc:(h + 1) * hc, :]
         for h in range(H)], axis=0)
    battn = pa["bv"] @ pa["wo"] + pa["bo"]        # exact when softmax rows sum to 1

    wqkv, bqkv = P["post_wqkv"], P["post_bqkv"]
    wqkv_s = jnp.concatenate([wqkv[:, :C] * scale, wqkv[:, C:]], axis=1)
    bqkv_s = jnp.concatenate([bqkv[:, :C] * scale, bqkv[:, C:]], axis=1)

    mats = [
        ("proj_w", P["proj_w"]),
        ("wq_s", wq_s), ("wkT", wkT), ("bk_col", bk_col), ("wvo", wvo),
        ("pre_w1", P["pre_mlp_w1"]), ("pre_w2", P["pre_mlp_w2"]),
        ("wqkv_s", wqkv_s), ("post_wo", P["post_wo"]),
        ("post_w1", P["post_mlp_w1"]), ("post_w2", P["post_mlp_w2"]),
        ("red_w", P["red_w"]),
        ("mlpc_w1", P["mlpc_w1"]), ("mlpc_w2", P["mlpc_w2"]),
    ]
    narrow = [(n, a) for n, a in mats if a.shape[1] <= C]
    wide = [(n, a) for n, a in mats if a.shape[1] > C]
    assert narrow and wide, "expected both narrow and wide weight matrices"
    wn_slab, lay_n = _build_matrix_slab(narrow, C)
    ww_slab, lay_w = _build_matrix_slab(wide, max(a.shape[1] for _, a in wide))

    vecs = [
        ("proj_b", P["proj_b"]),
        ("nx_g", P["norm_x_g"]), ("nx_b", P["norm_x_b"]),
        ("bq_s", bq_s), ("battn", battn),
        ("pre_n2g", P["pre_norm2_g"]), ("pre_n2b", P["pre_norm2_b"]),
        ("pre_b1", P["pre_mlp_b1"]), ("pre_b2", P["pre_mlp_b2"]),
        ("pre_pg", P["pre_post_g"]), ("pre_pb", P["pre_post_b"]),
        ("bqkv_s", bqkv_s), ("post_bo", P["post_bo"]),
        ("post_n2g", P["post_norm2_g"]), ("post_n2b", P["post_norm2_b"]),
        ("post_b1", P["post_mlp_b1"]), ("post_b2", P["post_mlp_b2"]),
        ("post_pg", P["post_post_g"]), ("post_pb", P["post_post_b"]),
        ("red_g", P["red_g"]), ("red_b", P["red_b"]),
        ("no_g", P["norm_out_g"]), ("no_b", P["norm_out_b"]),
        ("mlpc_b1", P["mlpc_b1"]), ("mlpc_b2", P["mlpc_b2"]),
    ]
    v_slab, lay_v = _build_vector_slab(vecs, max(a.shape[1] for _, a in vecs))
    return (wn_slab, ww_slab, v_slab), (lay_n, lay_w, lay_v)


def share_refiner_forward(feat, seg_query, P, num_heads, grid_steps=1):
    """ShareRefiner_Layer.forward(..., is_seg=True) as one fused pallas_call.

    grid_steps=1 folds the whole batch into one grid step (best on single-TC
    v5e/v6e).  On v7x pass grid_steps=2 (for even B) so the two TensorCores
    each take half the batch; weights use constant index_maps either way.
    """
    B, C = feat.shape[0], feat.shape[1]
    L = feat.shape[2] * feat.shape[3] * feat.shape[4]
    _, Nq, Fin = seg_query.shape
    out_dim = P["mlpc_w2"].shape[1]
    assert C % num_heads == 0 and seg_query.shape[0] == B
    if B % grid_steps != 0:
        grid_steps = 1
    BB = B // grid_steps

    feat_cl = feat.reshape(B, C, L)                     # (B, C, L)  channel-major
    feat_lc = jnp.transpose(feat_cl, (0, 2, 1))         # (B, L, C)  row-major
    sq_flat = seg_query.reshape(B * Nq, Fin)            # batch folded into rows

    (wn_slab, ww_slab, v_slab), (lay_n, lay_w, lay_v) = _pack_params(P, num_heads)

    kernel = functools.partial(
        _share_refiner_kernel, num_heads=num_heads, bb=BB, nq=Nq, dim=C,
        lay_n=lay_n, lay_w=lay_w, lay_v=lay_v)

    out = pl.pallas_call(
        kernel,
        out_shape=jax.ShapeDtypeStruct((B * Nq, out_dim), seg_query.dtype),
        grid=(grid_steps,),
        in_specs=[
            pl.BlockSpec((BB * Nq, Fin), lambda g: (g, 0)),
            pl.BlockSpec((BB, C, L), lambda g: (g, 0, 0)),
            pl.BlockSpec((BB, L, C), lambda g: (g, 0, 0)),
            pl.BlockSpec(wn_slab.shape, lambda g: (0, 0)),   # constant: fetched once
            pl.BlockSpec(ww_slab.shape, lambda g: (0, 0)),
            pl.BlockSpec(v_slab.shape, lambda g: (0, 0)),
        ],
        out_specs=pl.BlockSpec((BB * Nq, out_dim), lambda g: (g, 0)),
        compiler_params=pltpu.CompilerParams(
            dimension_semantics=("parallel",)),
    )(sq_flat, feat_cl, feat_lc, wn_slab, ww_slab, v_slab)
    return out.reshape(B, Nq, out_dim)


# ----------------------------------------------------------------------------
# Deterministic parameter init (shapes from the module __init__)
# ----------------------------------------------------------------------------
def init_params(key, *, in_features, dim, out_dim, mlp_ratio=4):
    keys = iter(jax.random.split(key, 64))

    def w(shape, scale=0.02):
        return scale * jax.random.normal(next(keys), shape, jnp.float32)

    def ln_pair():
        g = 1.0 + 0.1 * jax.random.normal(next(keys), (1, dim), jnp.float32)
        b = 0.1 * jax.random.normal(next(keys), (1, dim), jnp.float32)
        return g, b

    hid = mlp_ratio * dim
    P = {}
    P["proj_w"] = w((in_features, dim)); P["proj_b"] = w((1, dim))
    P["norm_x_g"], P["norm_x_b"] = ln_pair()
    pre = {}
    for nm in ("q", "k", "v", "o"):
        pre["w" + nm] = w((dim, dim)); pre["b" + nm] = w((1, dim))
    P["pre_attn"] = pre
    P["pre_norm2_g"], P["pre_norm2_b"] = ln_pair()
    P["pre_mlp_w1"] = w((dim, hid)); P["pre_mlp_b1"] = w((1, hid))
    P["pre_mlp_w2"] = w((hid, dim)); P["pre_mlp_b2"] = w((1, dim))
    P["pre_post_g"], P["pre_post_b"] = ln_pair()
    P["post_wqkv"] = w((dim, 3 * dim)); P["post_bqkv"] = w((1, 3 * dim))
    P["post_wo"] = w((dim, dim)); P["post_bo"] = w((1, dim))
    P["post_norm2_g"], P["post_norm2_b"] = ln_pair()
    P["post_mlp_w1"] = w((dim, hid)); P["post_mlp_b1"] = w((1, hid))
    P["post_mlp_w2"] = w((hid, dim)); P["post_mlp_b2"] = w((1, dim))
    P["post_post_g"], P["post_post_b"] = ln_pair()
    P["norm_out_g"], P["norm_out_b"] = ln_pair()
    P["mlpc_w1"] = w((dim, hid)); P["mlpc_b1"] = w((1, hid))
    P["mlpc_w2"] = w((hid, out_dim)); P["mlpc_b2"] = w((1, out_dim))
    P["red_g"], P["red_b"] = ln_pair()
    P["red_w"] = w((dim, out_dim))
    return P


# ----------------------------------------------------------------------------
# Pure-JAX reference (mirrors PyTorch semantics) for sanity checking
# ----------------------------------------------------------------------------
def reference_forward(feat, seg_query, P, num_heads):
    def lin(x, w, b=None):
        y = jnp.einsum("...k,kn->...n", x, w, precision="highest")
        return y if b is None else y + b[0]

    def gelu(x):
        return 0.5 * x * (1.0 + lax.erf(x * _SQRT1_2))

    def ln(x, g, b):
        m = jnp.mean(x, -1, keepdims=True)
        v = jnp.mean((x - m) ** 2, -1, keepdims=True)
        return (x - m) * lax.rsqrt(v + LN_EPS) * g[0] + b[0]

    def softmax(x):
        x = x - jnp.max(x, -1, keepdims=True)
        e = jnp.exp(x)
        return e / jnp.sum(e, -1, keepdims=True)

    def mha(xq, xkv, wq, bq, wk, bk, wv, bv, wo, bo, h):
        B, N, C = xq.shape
        S = xkv.shape[1]
        c = C // h
        sc = c ** (-0.5)
        q = lin(xq, wq, bq).reshape(B, N, h, c).transpose(0, 2, 1, 3)
        k = lin(xkv, wk, bk).reshape(B, S, h, c).transpose(0, 2, 1, 3)
        v = lin(xkv, wv, bv).reshape(B, S, h, c).transpose(0, 2, 1, 3)
        att = softmax(jnp.einsum("bhnc,bhsc->bhns", q, k, precision="highest") * sc)
        o = jnp.einsum("bhns,bhsc->bhnc", att, v, precision="highest")
        return lin(o.transpose(0, 2, 1, 3).reshape(B, N, C), wo, bo)

    B, C = feat.shape[0], feat.shape[1]
    L = feat.shape[2] * feat.shape[3] * feat.shape[4]
    feat_flat = jnp.transpose(feat.reshape(B, C, L), (0, 2, 1))

    sq = ln(gelu(lin(seg_query, P["proj_w"], P["proj_b"])), P["norm_x_g"], P["norm_x_b"])

    x = sq
    pa = P["pre_attn"]
    x = x + mha(x, feat_flat, pa["wq"], pa["bq"], pa["wk"], pa["bk"],
                pa["wv"], pa["bv"], pa["wo"], pa["bo"], num_heads)
    m = ln(x, P["pre_norm2_g"], P["pre_norm2_b"])
    m = lin(gelu(lin(m, P["pre_mlp_w1"], P["pre_mlp_b1"])), P["pre_mlp_w2"], P["pre_mlp_b2"])
    x = x + m
    x = ln(x, P["pre_post_g"], P["pre_post_b"])
    query_out = x + sq

    y = query_out
    B2, N2, _ = y.shape
    h = num_heads
    c = C // h
    qkv = lin(y, P["post_wqkv"], P["post_bqkv"]).reshape(B2, N2, 3, h, c).transpose(2, 0, 3, 1, 4)
    q, k, v = qkv[0], qkv[1], qkv[2]
    att = softmax(jnp.einsum("bhnc,bhsc->bhns", q, k, precision="highest") * (c ** (-0.5)))
    ao = jnp.einsum("bhns,bhsc->bhnc", att, v, precision="highest")
    ao = lin(ao.transpose(0, 2, 1, 3).reshape(B2, N2, C), P["post_wo"], P["post_bo"])
    y = y + ao
    m = ln(y, P["post_norm2_g"], P["post_norm2_b"])
    m = lin(gelu(lin(m, P["post_mlp_w1"], P["post_mlp_b1"])), P["post_mlp_w2"], P["post_mlp_b2"])
    y = y + m
    y = ln(y, P["post_post_g"], P["post_post_b"])
    query_out = y

    red = lin(ln(query_out, P["red_g"], P["red_b"]), P["red_w"])
    mc = lin(gelu(lin(ln(query_out, P["norm_out_g"], P["norm_out_b"]),
                      P["mlpc_w1"], P["mlpc_b1"])), P["mlpc_w2"], P["mlpc_b2"])
    return red + mc


# ----------------------------------------------------------------------------
if __name__ == "__main__":
    key = jax.random.PRNGKey(0)
    B, dim, out_dim, in_features, num_heads = 2, 32, 16, 24, 4
    D = H = W = 4          # feat spatial dims (flattened: L = 64)
    Nq = 8                 # number of segmentation queries

    k1, k2, k3 = jax.random.split(key, 3)
    feat = jax.random.normal(k1, (B, dim, D, H, W), jnp.float32)        # NCDHW
    seg_query = jax.random.normal(k2, (B, Nq, in_features), jnp.float32)
    params = init_params(k3, in_features=in_features, dim=dim, out_dim=out_dim)

    fwd = jax.jit(functools.partial(share_refiner_forward, num_heads=num_heads))
    out = jax.block_until_ready(fwd(feat, seg_query, params))

    ref = reference_forward(feat, seg_query, params, num_heads)
    assert out.shape == (B, Nq, out_dim)
    assert bool(jnp.all(jnp.isfinite(out)))
    if not jnp.allclose(out, ref, atol=3e-2, rtol=3e-2):
        raise AssertionError("Pallas output does not match JAX reference")

    print("KERNEL_OK")
</pallas_src>

<mosaic_0001>
module attributes {stable_mosaic.version = 11 : i64} {
  func.func @_share_refiner_kernel(%arg0: i32, %arg1: memref<16x24xf32, #tpu.memory_space<vmem>>, %arg2: memref<2x32x64xf32, #tpu.memory_space<vmem>>, %arg3: memref<2x64x32xf32, #tpu.memory_space<vmem>>, %arg4: memref<696x32xf32, #tpu.memory_space<vmem>>, %arg5: memref<128x128xf32, #tpu.memory_space<vmem>>, %arg6: memref<32x128xf32, #tpu.memory_space<vmem>>, %arg7: memref<16x16xf32, #tpu.memory_space<vmem>>) attributes {dimension_semantics = [#tpu.dimension_semantics<parallel>], iteration_bounds = array<i64: 1>, scalar_prefetch = 0 : i64, scratch_operands = 0 : i64, tpu.core_type = #tpu.core_type<tc>, window_params = [{transform_indices = @transform_0, window_bounds = array<i64: 16, 24>}, {transform_indices = @transform_1, window_bounds = array<i64: 2, 32, 64>}, {transform_indices = @transform_2, window_bounds = array<i64: 2, 64, 32>}, {pipeline_mode = #tpu.pipeline_mode<synchronous>, transform_indices = @transform_3, window_bounds = array<i64: 696, 32>}, {pipeline_mode = #tpu.pipeline_mode<synchronous>, transform_indices = @transform_4, window_bounds = array<i64: 128, 128>}, {pipeline_mode = #tpu.pipeline_mode<synchronous>, transform_indices = @transform_5, window_bounds = array<i64: 32, 128>}, {transform_indices = @transform_6, window_bounds = array<i64: 16, 16>}]} {
    %c0 = arith.constant 0 : index
    %c0_0 = arith.constant 0 : index
    %0 = vector.load %arg1[%c0, %c0_0] : memref<16x24xf32, #tpu.memory_space<vmem>>, vector<16x24xf32>
    %c0_1 = arith.constant 0 : index
    %c0_2 = arith.constant 0 : index
    %1 = vector.load %arg4[%c0_1, %c0_2] : memref<696x32xf32, #tpu.memory_space<vmem>>, vector<24x32xf32>
    %cst = arith.constant dense<0.000000e+00> : vector<16x32xf32>
    %2 = tpu.matmul %0, %1, %cst {dimension_numbers = #tpu.dot_dimension_numbers<[1], [0], [0], [1], [0, 0, 1, 1], [], []>} : vector<16x24xf32>, vector<24x32xf32>, vector<16x32xf32> -> vector<16x32xf32>
    %c0_3 = arith.constant 0 : index
    %c0_4 = arith.constant 0 : index
    %3 = vector.load %arg6[%c0_3, %c0_4] : memref<32x128xf32, #tpu.memory_space<vmem>>, vector<1x32xf32>
    %4 = vector.broadcast %3 : vector<1x32xf32> to vector<16x32xf32>
    %5 = arith.addf %2, %4 : vector<16x32xf32>
    %cst_5 = arith.constant 5.000000e-01 : f32
    %6 = vector.broadcast %cst_5 : f32 to vector<16x32xf32>
    %7 = arith.mulf %6, %5 : vector<16x32xf32>
    %cst_6 = arith.constant 0.707106769 : f32
    %8 = vector.broadcast %cst_6 : f32 to vector<16x32xf32>
    %9 = arith.mulf %5, %8 : vector<16x32xf32>
    %10 = math.erf %9 : vector<16x32xf32>
    %cst_7 = arith.constant 1.000000e+00 : f32
    %11 = vector.broadcast %cst_7 : f32 to vector<16x32xf32>
    %12 = arith.addf %11, %10 : vector<16x32xf32>
    %13 = arith.mulf %7, %12 : vector<16x32xf32>
    %cst_8 = arith.constant dense<0.000000e+00> : vector<16xf32>
    %14 = vector.multi_reduction <add>, %13, %cst_8 [1] : vector<16x32xf32> to vector<16xf32>
    %15 = vector.shape_cast %14 : vector<16xf32> to vector<16x1xf32>
    %cst_9 = arith.constant 3.200000e+01 : f32
    %16 = vector.broadcast %cst_9 : f32 to vector<16x1xf32>
    %17 = arith.divf %15, %16 : vector<16x1xf32>
    %18 = vector.broadcast %17 : vector<16x1xf32> to vector<16x32xf32>
    %19 = arith.subf %13, %18 : vector<16x32xf32>
    %20 = arith.mulf %19, %19 : vector<16x32xf32>
    %cst_10 = arith.constant dense<0.000000e+00> : vector<16xf32>
    %21 = vector.multi_reduction <add>, %20, %cst_10 [1] : vector<16x32xf32> to vector<16xf32>
    %22 = vector.shape_cast %21 : vector<16xf32> to vector<16x1xf32>
    %cst_11 = arith.constant 3.200000e+01 : f32
    %23 = vector.broadcast %cst_11 : f32 to vector<16x1xf32>
    %24 = arith.divf %22, %23 : vector<16x1xf32>
    %cst_12 = arith.constant 9.99999974E-6 : f32
    %25 = vector.broadcast %cst_12 : f32 to vector<16x1xf32>
    %26 = arith.addf %24, %25 : vector<16x1xf32>
    %27 = math.rsqrt %26 : vector<16x1xf32>
    %28 = vector.broadcast %27 : vector<16x1xf32> to vector<16x32xf32>
    %29 = arith.mulf %19, %28 : vector<16x32xf32>
    %c1 = arith.constant 1 : index
    %c0_13 = arith.constant 0 : index
    %30 = vector.load %arg6[%c1, %c0_13] : memref<32x128xf32, #tpu.memory_space<vmem>>, vector<1x32xf32>
    %31 = vector.broadcast %30 : vector<1x32xf32> to vector<16x32xf32>
    %32 = arith.mulf %29, %31 : vector<16x32xf32>
    %c2 = arith.constant 2 : index
    %c0_14 = arith.constant 0 : index
    %33 = vector.load %arg6[%c2, %c0_14] : memref<32x128xf32, #tpu.memory_space<vmem>>, vector<1x32xf32>
    %34 = vector.broadcast %33 : vector<1x32xf32> to vector<16x32xf32>
    %35 = arith.addf %32, %34 : vector<16x32xf32>
    %c24 = arith.constant 24 : index
    %c0_15 = arith.constant 0 : index
    %36 = vector.load %arg4[%c24, %c0_15] : memref<696x32xf32, #tpu.memory_space<vmem>>, vector<32x32xf32>
    %cst_16 = arith.constant dense<0.000000e+00> : vector<16x32xf32>
    %37 = tpu.matmul %35, %36, %cst_16 {dimension_numbers = #tpu.dot_dimension_numbers<[1], [0], [0], [1], [0, 0, 1, 1], [], []>} : vector<16x32xf32>, vector<32x32xf32>, vector<16x32xf32> -> vector<16x32xf32>
    %c3 = arith.constant 3 : index
    %c0_17 = arith.constant 0 : index
    %38 = vector.load %arg6[%c3, %c0_17] : memref<32x128xf32, #tpu.memory_space<vmem>>, vector<1x32xf32>
    %39 = vector.broadcast %38 : vector<1x32xf32> to vector<16x32xf32>
    %40 = arith.addf %37, %39 : vector<16x32xf32>
    %c56 = arith.constant 56 : index
    %c0_18 = arith.constant 0 : index
    %41 = vector.load %arg4[%c56, %c0_18] : memref<696x32xf32, #tpu.memory_space<vmem>>, vector<32x32xf32>
    %c88 = arith.constant 88 : index
    %c0_19 = arith.constant 0 : index
    %42 = vector.load %arg4[%c88, %c0_19] : memref<696x32xf32, #tpu.memory_space<vmem>>, vector<32x1xf32>
    %c0_20 = arith.constant 0 : index
    %c0_21 = arith.constant 0 : index
    %c0_22 = arith.constant 0 : index
    %43 = vector.load %arg2[%c0_20, %c0_21, %c0_22] : memref<2x32x64xf32, #tpu.memory_space<vmem>>, vector<1x32x64xf32>
    %44 = vector.shape_cast %43 : vector<1x32x64xf32> to vector<32x64xf32>
    %c0_23 = arith.constant 0 : index
    %c0_24 = arith.constant 0 : index
    %c0_25 = arith.constant 0 : index
    %45 = vector.load %arg3[%c0_23, %c0_24, %c0_25] : memref<2x64x32xf32, #tpu.memory_space<vmem>>, vector<1x64x32xf32>
    %46 = vector.shape_cast %45 : vector<1x64x32xf32> to vector<64x32xf32>
    %cst_26 = arith.constant dense<0.000000e+00> : vector<32x64xf32>
    %47 = tpu.matmul %41, %44, %cst_26 {dimension_numbers = #tpu.dot_dimension_numbers<[1], [0], [0], [1], [0, 0, 1, 1], [], []>} : vector<32x32xf32>, vector<32x64xf32>, vector<32x64xf32> -> vector<32x64xf32>
    %48 = vector.broadcast %42 : vector<32x1xf32> to vector<32x64xf32>
    %49 = arith.addf %47, %48 : vector<32x64xf32>
    %50 = vector.extract_strided_slice %40 {offsets = [0, 0], sizes = [8, 32], strides = [1, 1]} : vector<16x32xf32> to vector<8x32xf32>
    %51 = vector.extract_strided_slice %50 {offsets = [0, 0], sizes = [8, 8], strides = [1, 1]} : vector<8x32xf32> to vector<8x8xf32>
    %52 = vector.extract_strided_slice %49 {offsets = [0, 0], sizes = [8, 64], strides = [1, 1]} : vector<32x64xf32> to vector<8x64xf32>
    %cst_27 = arith.constant dense<0.000000e+00> : vector<8x64xf32>
    %53 = tpu.matmul %51, %52, %cst_27 {dimension_numbers = #tpu.dot_dimension_numbers<[1], [0], [0], [1], [0, 0, 1, 1], [], []>} : vector<8x8xf32>, vector<8x64xf32>, vector<8x64xf32> -> vector<8x64xf32>
    %cst_28 = arith.constant dense<0xFF800000> : vector<8xf32>
    %54 = vector.multi_reduction <maximumf>, %53, %cst_28 [1] : vector<8x64xf32> to vector<8xf32>
    %55 = vector.shape_cast %54 : vector<8xf32> to vector<8x1xf32>
    %56 = vector.broadcast %55 : vector<8x1xf32> to vector<8x64xf32>
    %57 = arith.subf %53, %56 : vector<8x64xf32>
    %58 = math.exp %57 : vector<8x64xf32>
    %cst_29 = arith.constant dense<0.000000e+00> : vector<8xf32>
    %59 = vector.multi_reduction <add>, %58, %cst_29 [1] : vector<8x64xf32> to vector<8xf32>
    %60 = vector.shape_cast %59 : vector<8xf32> to vector<8x1xf32>
    %61 = vector.broadcast %60 : vector<8x1xf32> to vector<8x64xf32>
    %62 = arith.divf %58, %61 : vector<8x64xf32>
    %cst_30 = arith.constant dense<0.000000e+00> : vector<8x32xf32>
    %63 = tpu.matmul %62, %46, %cst_30 {dimension_numbers = #tpu.dot_dimension_numbers<[1], [0], [0], [1], [0, 0, 1, 1], [], []>} : vector<8x64xf32>, vector<64x32xf32>, vector<8x32xf32> -> vector<8x32xf32>
    %64 = vector.extract_strided_slice %50 {offsets = [0, 8], sizes = [8, 8], strides = [1, 1]} : vector<8x32xf32> to vector<8x8xf32>
    %65 = vector.extract_strided_slice %49 {offsets = [8, 0], sizes = [8, 64], strides = [1, 1]} : vector<32x64xf32> to vector<8x64xf32>
    %cst_31 = arith.constant dense<0.000000e+00> : vector<8x64xf32>
    %66 = tpu.matmul %64, %65, %cst_31 {dimension_numbers = #tpu.dot_dimension_numbers<[1], [0], [0], [1], [0, 0, 1, 1], [], []>} : vector<8x8xf32>, vector<8x64xf32>, vector<8x64xf32> -> vector<8x64xf32>
    %cst_32 = arith.constant dense<0xFF800000> : vector<8xf32>
    %67 = vector.multi_reduction <maximumf>, %66, %cst_32 [1] : vector<8x64xf32> to vector<8xf32>
    %68 = vector.shape_cast %67 : vector<8xf32> to vector<8x1xf32>
    %69 = vector.broadcast %68 : vector<8x1xf32> to vector<8x64xf32>
    %70 = arith.subf %66, %69 : vector<8x64xf32>
    %71 = math.exp %70 : vector<8x64xf32>
    %cst_33 = arith.constant dense<0.000000e+00> : vector<8xf32>
    %72 = vector.multi_reduction <add>, %71, %cst_33 [1] : vector<8x64xf32> to vector<8xf32>
    %73 = vector.shape_cast %72 : vector<8xf32> to vector<8x1xf32>
    %74 = vector.broadcast %73 : vector<8x1xf32> to vector<8x64xf32>
    %75 = arith.divf %71, %74 : vector<8x64xf32>
    %cst_34 = arith.constant dense<0.000000e+00> : vector<8x32xf32>
    %76 = tpu.matmul %75, %46, %cst_34 {dimension_numbers = #tpu.dot_dimension_numbers<[1], [0], [0], [1], [0, 0, 1, 1], [], []>} : vector<8x64xf32>, vector<64x32xf32>, vector<8x32xf32> -> vector<8x32xf32>
    %77 = vector.extract_strided_slice %50 {offsets = [0, 16], sizes = [8, 8], strides = [1, 1]} : vector<8x32xf32> to vector<8x8xf32>
    %78 = vector.extract_strided_slice %49 {offsets = [16, 0], sizes = [8, 64], strides = [1, 1]} : vector<32x64xf32> to vector<8x64xf32>
    %cst_35 = arith.constant dense<0.000000e+00> : vector<8x64xf32>
    %79 = tpu.matmul %77, %78, %cst_35 {dimension_numbers = #tpu.dot_dimension_numbers<[1], [0], [0], [1], [0, 0, 1, 1], [], []>} : vector<8x8xf32>, vector<8x64xf32>, vector<8x64xf32> -> vector<8x64xf32>
    %cst_36 = arith.constant dense<0xFF800000> : vector<8xf32>
    %80 = vector.multi_reduction <maximumf>, %79, %cst_36 [1] : vector<8x64xf32> to vector<8xf32>
    %81 = vector.shape_cast %80 : vector<8xf32> to vector<8x1xf32>
    %82 = vector.broadcast %81 : vector<8x1xf32> to vector<8x64xf32>
    %83 = arith.subf %79, %82 : vector<8x64xf32>
    %84 = math.exp %83 : vector<8x64xf32>
    %cst_37 = arith.constant dense<0.000000e+00> : vector<8xf32>
    %85 = vector.multi_reduction <add>, %84, %cst_37 [1] : vector<8x64xf32> to vector<8xf32>
    %86 = vector.shape_cast %85 : vector<8xf32> to vector<8x1xf32>
    %87 = vector.broadcast %86 : vector<8x1xf32> to vector<8x64xf32>
    %88 = arith.divf %84, %87 : vector<8x64xf32>
    %cst_38 = arith.constant dense<0.000000e+00> : vector<8x32xf32>
    %89 = tpu.matmul %88, %46, %cst_38 {dimension_numbers = #tpu.dot_dimension_numbers<[1], [0], [0], [1], [0, 0, 1, 1], [], []>} : vector<8x64xf32>, vector<64x32xf32>, vector<8x32xf32> -> vector<8x32xf32>
    %90 = vector.extract_strided_slice %50 {offsets = [0, 24], sizes = [8, 8], strides = [1, 1]} : vector<8x32xf32> to vector<8x8xf32>
    %91 = vector.extract_strided_slice %49 {offsets = [24, 0], sizes = [8, 64], strides = [1, 1]} : vector<32x64xf32> to vector<8x64xf32>
    %cst_39 = arith.constant dense<0.000000e+00> : vector<8x64xf32>
    %92 = tpu.matmul %90, %91, %cst_39 {dimension_numbers = #tpu.dot_dimension_numbers<[1], [0], [0], [1], [0, 0, 1, 1], [], []>} : vector<8x8xf32>, vector<8x64xf32>, vector<8x64xf32> -> vector<8x64xf32>
    %cst_40 = arith.constant dense<0xFF800000> : vector<8xf32>
    %93 = vector.multi_reduction <maximumf>, %92, %cst_40 [1] : vector<8x64xf32> to vector<8xf32>
    %94 = vector.shape_cast %93 : vector<8xf32> to vector<8x1xf32>
    %95 = vector.broadcast %94 : vector<8x1xf32> to vector<8x64xf32>
    %96 = arith.subf %92, %95 : vector<8x64xf32>
    %97 = math.exp %96 : vector<8x64xf32>
    %cst_41 = arith.constant dense<0.000000e+00> : vector<8xf32>
    %98 = vector.multi_reduction <add>, %97, %cst_41 [1] : vector<8x64xf32> to vector<8xf32>
    %99 = vector.shape_cast %98 : vector<8xf32> to vector<8x1xf32>
    %100 = vector.broadcast %99 : vector<8x1xf32> to vector<8x64xf32>
    %101 = arith.divf %97, %100 : vector<8x64xf32>
    %cst_42 = arith.constant dense<0.000000e+00> : vector<8x32xf32>
    %102 = tpu.matmul %101, %46, %cst_42 {dimension_numbers = #tpu.dot_dimension_numbers<[1], [0], [0], [1], [0, 0, 1, 1], [], []>} : vector<8x64xf32>, vector<64x32xf32>, vector<8x32xf32> -> vector<8x32xf32>
    %103 = tpu.concatenate %63, %76, %89, %102 in 1 : vector<8x32xf32>, vector<8x32xf32>, vector<8x32xf32>, vector<8x32xf32> -> vector<8x128xf32>
    %c1_43 = arith.constant 1 : index
    %c0_44 = arith.constant 0 : index
    %c0_45 = arith.constant 0 : index
    %104 = vector.load %arg2[%c1_43, %c0_44, %c0_45] : memref<2x32x64xf32, #tpu.memory_space<vmem>>, vector<1x32x64xf32>
    %105 = vector.shape_cast %104 : vector<1x32x64xf32> to vector<32x64xf32>
    %c1_46 = arith.constant 1 : index
    %c0_47 = arith.constant 0 : index
    %c0_48 = arith.constant 0 : index
    %106 = vector.load %arg3[%c1_46, %c0_47, %c0_48] : memref<2x64x32xf32, #tpu.memory_space<vmem>>, vector<1x64x32xf32>
    %107 = vector.shape_cast %106 : vector<1x64x32xf32> to vector<64x32xf32>
    %cst_49 = arith.constant dense<0.000000e+00> : vector<32x64xf32>
    %108 = tpu.matmul %41, %105, %cst_49 {dimension_numbers = #tpu.dot_dimension_numbers<[1], [0], [0], [1], [0, 0, 1, 1], [], []>} : vector<32x32xf32>, vector<32x64xf32>, vector<32x64xf32> -> vector<32x64xf32>
    %109 = vector.broadcast %42 : vector<32x1xf32> to vector<32x64xf32>
    %110 = arith.addf %108, %109 : vector<32x64xf32>
    %111 = vector.extract_strided_slice %40 {offsets = [8, 0], sizes = [8, 32], strides = [1, 1]} : vector<16x32xf32> to vector<8x32xf32>
    %112 = vector.extract_strided_slice %111 {offsets = [0, 0], sizes = [8, 8], strides = [1, 1]} : vector<8x32xf32> to vector<8x8xf32>
    %113 = vector.extract_strided_slice %110 {offsets = [0, 0], sizes = [8, 64], strides = [1, 1]} : vector<32x64xf32> to vector<8x64xf32>
    %cst_50 = arith.constant dense<0.000000e+00> : vector<8x64xf32>
    %114 = tpu.matmul %112, %113, %cst_50 {dimension_numbers = #tpu.dot_dimension_numbers<[1], [0], [0], [1], [0, 0, 1, 1], [], []>} : vector<8x8xf32>, vector<8x64xf32>, vector<8x64xf32> -> vector<8x64xf32>
    %cst_51 = arith.constant dense<0xFF800000> : vector<8xf32>
    %115 = vector.multi_reduction <maximumf>, %114, %cst_51 [1] : vector<8x64xf32> to vector<8xf32>
    %116 = vector.shape_cast %115 : vector<8xf32> to vector<8x1xf32>
    %117 = vector.broadcast %116 : vector<8x1xf32> to vector<8x64xf32>
    %118 = arith.subf %114, %117 : vector<8x64xf32>
    %119 = math.exp %118 : vector<8x64xf32>
    %cst_52 = arith.constant dense<0.000000e+00> : vector<8xf32>
    %120 = vector.multi_reduction <add>, %119, %cst_52 [1] : vector<8x64xf32> to vector<8xf32>
    %121 = vector.shape_cast %120 : vector<8xf32> to vector<8x1xf32>
    %122 = vector.broadcast %121 : vector<8x1xf32> to vector<8x64xf32>
    %123 = arith.divf %119, %122 : vector<8x64xf32>
    %cst_53 = arith.constant dense<0.000000e+00> : vector<8x32xf32>
    %124 = tpu.matmul %123, %107, %cst_53 {dimension_numbers = #tpu.dot_dimension_numbers<[1], [0], [0], [1], [0, 0, 1, 1], [], []>} : vector<8x64xf32>, vector<64x32xf32>, vector<8x32xf32> -> vector<8x32xf32>
    %125 = vector.extract_strided_slice %111 {offsets = [0, 8], sizes = [8, 8], strides = [1, 1]} : vector<8x32xf32> to vector<8x8xf32>
    %126 = vector.extract_strided_slice %110 {offsets = [8, 0], sizes = [8, 64], strides = [1, 1]} : vector<32x64xf32> to vector<8x64xf32>
    %cst_54 = arith.constant dense<0.000000e+00> : vector<8x64xf32>
    %127 = tpu.matmul %125, %126, %cst_54 {dimension_numbers = #tpu.dot_dimension_numbers<[1], [0], [0], [1], [0, 0, 1, 1], [], []>} : vector<8x8xf32>, vector<8x64xf32>, vector<8x64xf32> -> vector<8x64xf32>
    %cst_55 = arith.constant dense<0xFF800000> : vector<8xf32>
    %128 = vector.multi_reduction <maximumf>, %127, %cst_55 [1] : vector<8x64xf32> to vector<8xf32>
    %129 = vector.shape_cast %128 : vector<8xf32> to vector<8x1xf32>
    %130 = vector.broadcast %129 : vector<8x1xf32> to vector<8x64xf32>
    %131 = arith.subf %127, %130 : vector<8x64xf32>
    %132 = math.exp %131 : vector<8x64xf32>
    %cst_56 = arith.constant dense<0.000000e+00> : vector<8xf32>
    %133 = vector.multi_reduction <add>, %132, %cst_56 [1] : vector<8x64xf32> to vector<8xf32>
    %134 = vector.shape_cast %133 : vector<8xf32> to vector<8x1xf32>
    %135 = vector.broadcast %134 : vector<8x1xf32> to vector<8x64xf32>
    %136 = arith.divf %132, %135 : vector<8x64xf32>
    %cst_57 = arith.constant dense<0.000000e+00> : vector<8x32xf32>
    %137 = tpu.matmul %136, %107, %cst_57 {dimension_numbers = #tpu.dot_dimension_numbers<[1], [0], [0], [1], [0, 0, 1, 1], [], []>} : vector<8x64xf32>, vector<64x32xf32>, vector<8x32xf32> -> vector<8x32xf32>
    %138 = vector.extract_strided_slice %111 {offsets = [0, 16], sizes = [8, 8], strides = [1, 1]} : vector<8x32xf32> to vector<8x8xf32>
    %139 = vector.extract_strided_slice %110 {offsets = [16, 0], sizes = [8, 64], strides = [1, 1]} : vector<32x64xf32> to vector<8x64xf32>
    %cst_58 = arith.constant dense<0.000000e+00> : vector<8x64xf32>
    %140 = tpu.matmul %138, %139, %cst_58 {dimension_numbers = #tpu.dot_dimension_numbers<[1], [0], [0], [1], [0, 0, 1, 1], [], []>} : vector<8x8xf32>, vector<8x64xf32>, vector<8x64xf32> -> vector<8x64xf32>
    %cst_59 = arith.constant dense<0xFF800000> : vector<8xf32>
    %141 = vector.multi_reduction <maximumf>, %140, %cst_59 [1] : vector<8x64xf32> to vector<8xf32>
    %142 = vector.shape_cast %141 : vector<8xf32> to vector<8x1xf32>
    %143 = vector.broadcast %142 : vector<8x1xf32> to vector<8x64xf32>
    %144 = arith.subf %140, %143 : vector<8x64xf32>
    %145 = math.exp %144 : vector<8x64xf32>
    %cst_60 = arith.constant dense<0.000000e+00> : vector<8xf32>
    %146 = vector.multi_reduction <add>, %145, %cst_60 [1] : vector<8x64xf32> to vector<8xf32>
    %147 = vector.shape_cast %146 : vector<8xf32> to vector<8x1xf32>
    %148 = vector.broadcast %147 : vector<8x1xf32> to vector<8x64xf32>
    %149 = arith.divf %145, %148 : vector<8x64xf32>
    %cst_61 = arith.constant dense<0.000000e+00> : vector<8x32xf32>
    %150 = tpu.matmul %149, %107, %cst_61 {dimension_numbers = #tpu.dot_dimension_numbers<[1], [0], [0], [1], [0, 0, 1, 1], [], []>} : vector<8x64xf32>, vector<64x32xf32>, vector<8x32xf32> -> vector<8x32xf32>
    %151 = vector.extract_strided_slice %111 {offsets = [0, 24], sizes = [8, 8], strides = [1, 1]} : vector<8x32xf32> to vector<8x8xf32>
    %152 = vector.extract_strided_slice %110 {offsets = [24, 0], sizes = [8, 64], strides = [1, 1]} : vector<32x64xf32> to vector<8x64xf32>
    %cst_62 = arith.constant dense<0.000000e+00> : vector<8x64xf32>
    %153 = tpu.matmul %151, %152, %cst_62 {dimension_numbers = #tpu.dot_dimension_numbers<[1], [0], [0], [1], [0, 0, 1, 1], [], []>} : vector<8x8xf32>, vector<8x64xf32>, vector<8x64xf32> -> vector<8x64xf32>
    %cst_63 = arith.constant dense<0xFF800000> : vector<8xf32>
    %154 = vector.multi_reduction <maximumf>, %153, %cst_63 [1] : vector<8x64xf32> to vector<8xf32>
    %155 = vector.shape_cast %154 : vector<8xf32> to vector<8x1xf32>
    %156 = vector.broadcast %155 : vector<8x1xf32> to vector<8x64xf32>
    %157 = arith.subf %153, %156 : vector<8x64xf32>
    %158 = math.exp %157 : vector<8x64xf32>
    %cst_64 = arith.constant dense<0.000000e+00> : vector<8xf32>
    %159 = vector.multi_reduction <add>, %158, %cst_64 [1] : vector<8x64xf32> to vector<8xf32>
    %160 = vector.shape_cast %159 : vector<8xf32> to vector<8x1xf32>
    %161 = vector.broadcast %160 : vector<8x1xf32> to vector<8x64xf32>
    %162 = arith.divf %158, %161 : vector<8x64xf32>
    %cst_65 = arith.constant dense<0.000000e+00> : vector<8x32xf32>
    %163 = tpu.matmul %162, %107, %cst_65 {dimension_numbers = #tpu.dot_dimension_numbers<[1], [0], [0], [1], [0, 0, 1, 1], [], []>} : vector<8x64xf32>, vector<64x32xf32>, vector<8x32xf32> -> vector<8x32xf32>
    %164 = tpu.concatenate %124, %137, %150, %163 in 1 : vector<8x32xf32>, vector<8x32xf32>, vector<8x32xf32>, vector<8x32xf32> -> vector<8x128xf32>
    %165 = tpu.concatenate %103, %164 in 0 : vector<8x128xf32>, vector<8x128xf32> -> vector<16x128xf32>
    %c120 = arith.constant 120 : index
    %c0_66 = arith.constant 0 : index
    %166 = vector.load %arg4[%c120, %c0_66] : memref<696x32xf32, #tpu.memory_space<vmem>>, vector<128x32xf32>
    %cst_67 = arith.constant dense<0.000000e+00> : vector<16x32xf32>
    %167 = tpu.matmul %165, %166, %cst_67 {dimension_numbers = #tpu.dot_dimension_numbers<[1], [0], [0], [1], [0, 0, 1, 1], [], []>} : vector<16x128xf32>, vector<128x32xf32>, vector<16x32xf32> -> vector<16x32xf32>
    %c4 = arith.constant 4 : index
    %c0_68 = arith.constant 0 : index
    %168 = vector.load %arg6[%c4, %c0_68] : memref<32x128xf32, #tpu.memory_space<vmem>>, vector<1x32xf32>
    %169 = vector.broadcast %168 : vector<1x32xf32> to vector<16x32xf32>
    %170 = arith.addf %167, %169 : vector<16x32xf32>
    %171 = arith.addf %35, %170 : vector<16x32xf32>
    %cst_69 = arith.constant dense<0.000000e+00> : vector<16xf32>
    %172 = vector.multi_reduction <add>, %171, %cst_69 [1] : vector<16x32xf32> to vector<16xf32>
    %173 = vector.shape_cast %172 : vector<16xf32> to vector<16x1xf32>
    %cst_70 = arith.constant 3.200000e+01 : f32
    %174 = vector.broadcast %cst_70 : f32 to vector<16x1xf32>
    %175 = arith.divf %173, %174 : vector<16x1xf32>
    %176 = vector.broadcast %175 : vector<16x1xf32> to vector<16x32xf32>
    %177 = arith.subf %171, %176 : vector<16x32xf32>
    %178 = arith.mulf %177, %177 : vector<16x32xf32>
    %cst_71 = arith.constant dense<0.000000e+00> : vector<16xf32>
    %179 = vector.multi_reduction <add>, %178, %cst_71 [1] : vector<16x32xf32> to vector<16xf32>
    %180 = vector.shape_cast %179 : vector<16xf32> to vector<16x1xf32>
    %cst_72 = arith.constant 3.200000e+01 : f32
    %181 = vector.broadcast %cst_72 : f32 to vector<16x1xf32>
    %182 = arith.divf %180, %181 : vector<16x1xf32>
    %cst_73 = arith.constant 9.99999974E-6 : f32
    %183 = vector.broadcast %cst_73 : f32 to vector<16x1xf32>
    %184 = arith.addf %182, %183 : vector<16x1xf32>
    %185 = math.rsqrt %184 : vector<16x1xf32>
    %186 = vector.broadcast %185 : vector<16x1xf32> to vector<16x32xf32>
    %187 = arith.mulf %177, %186 : vector<16x32xf32>
    %c5 = arith.constant 5 : index
    %c0_74 = arith.constant 0 : index
    %188 = vector.load %arg6[%c5, %c0_74] : memref<32x128xf32, #tpu.memory_space<vmem>>, vector<1x32xf32>
    %189 = vector.broadcast %188 : vector<1x32xf32> to vector<16x32xf32>
    %190 = arith.mulf %187, %189 : vector<16x32xf32>
    %c6 = arith.constant 6 : index
    %c0_75 = arith.constant 0 : index
    %191 = vector.load %arg6[%c6, %c0_75] : memref<32x128xf32, #tpu.memory_space<vmem>>, vector<1x32xf32>
    %192 = vector.broadcast %191 : vector<1x32xf32> to vector<16x32xf32>
    %193 = arith.addf %190, %192 : vector<16x32xf32>
    %c0_76 = arith.constant 0 : index
    %c0_77 = arith.constant 0 : index
    %194 = vector.load %arg5[%c0_76, %c0_77] : memref<128x128xf32, #tpu.memory_space<vmem>>, vector<32x128xf32>
    %cst_78 = arith.constant dense<0.000000e+00> : vector<16x128xf32>
    %195 = tpu.matmul %193, %194, %cst_78 {dimension_numbers = #tpu.dot_dimension_numbers<[1], [0], [0], [1], [0, 0, 1, 1], [], []>} : vector<16x32xf32>, vector<32x128xf32>, vector<16x128xf32> -> vector<16x128xf32>
    %c7 = arith.constant 7 : index
    %c0_79 = arith.constant 0 : index
    %196 = vector.load %arg6[%c7, %c0_79] : memref<32x128xf32, #tpu.memory_space<vmem>>, vector<1x128xf32>
    %197 = vector.broadcast %196 : vector<1x128xf32> to vector<16x128xf32>
    %198 = arith.addf %195, %197 : vector<16x128xf32>
    %cst_80 = arith.constant 5.000000e-01 : f32
    %199 = vector.broadcast %cst_80 : f32 to vector<16x128xf32>
    %200 = arith.mulf %199, %198 : vector<16x128xf32>
    %cst_81 = arith.constant 0.707106769 : f32
    %201 = vector.broadcast %cst_81 : f32 to vector<16x128xf32>
    %202 = arith.mulf %198, %201 : vector<16x128xf32>
    %203 = math.erf %202 : vector<16x128xf32>
    %cst_82 = arith.constant 1.000000e+00 : f32
    %204 = vector.broadcast %cst_82 : f32 to vector<16x128xf32>
    %205 = arith.addf %204, %203 : vector<16x128xf32>
    %206 = arith.mulf %200, %205 : vector<16x128xf32>
    %c248 = arith.constant 248 : index
    %c0_83 = arith.constant 0 : index
    %207 = vector.load %arg4[%c248, %c0_83] : memref<696x32xf32, #tpu.memory_space<vmem>>, vector<128x32xf32>
    %cst_84 = arith.constant dense<0.000000e+00> : vector<16x32xf32>
    %208 = tpu.matmul %206, %207, %cst_84 {dimension_numbers = #tpu.dot_dimension_numbers<[1], [0], [0], [1], [0, 0, 1, 1], [], []>} : vector<16x128xf32>, vector<128x32xf32>, vector<16x32xf32> -> vector<16x32xf32>
    %c8 = arith.constant 8 : index
    %c0_85 = arith.constant 0 : index
    %209 = vector.load %arg6[%c8, %c0_85] : memref<32x128xf32, #tpu.memory_space<vmem>>, vector<1x32xf32>
    %210 = vector.broadcast %209 : vector<1x32xf32> to vector<16x32xf32>
    %211 = arith.addf %208, %210 : vector<16x32xf32>
    %212 = arith.addf %171, %211 : vector<16x32xf32>
    %cst_86 = arith.constant dense<0.000000e+00> : vector<16xf32>
    %213 = vector.multi_reduction <add>, %212, %cst_86 [1] : vector<16x32xf32> to vector<16xf32>
    %214 = vector.shape_cast %213 : vector<16xf32> to vector<16x1xf32>
    %cst_87 = arith.constant 3.200000e+01 : f32
    %215 = vector.broadcast %cst_87 : f32 to vector<16x1xf32>
    %216 = arith.divf %214, %215 : vector<16x1xf32>
    %217 = vector.broadcast %216 : vector<16x1xf32> to vector<16x32xf32>
    %218 = arith.subf %212, %217 : vector<16x32xf32>
    %219 = arith.mulf %218, %218 : vector<16x32xf32>
    %cst_88 = arith.constant dense<0.000000e+00> : vector<16xf32>
    %220 = vector.multi_reduction <add>, %219, %cst_88 [1] : vector<16x32xf32> to vector<16xf32>
    %221 = vector.shape_cast %220 : vector<16xf32> to vector<16x1xf32>
    %cst_89 = arith.constant 3.200000e+01 : f32
    %222 = vector.broadcast %cst_89 : f32 to vector<16x1xf32>
    %223 = arith.divf %221, %222 : vector<16x1xf32>
    %cst_90 = arith.constant 9.99999974E-6 : f32
    %224 = vector.broadcast %cst_90 : f32 to vector<16x1xf32>
    %225 = arith.addf %223, %224 : vector<16x1xf32>
    %226 = math.rsqrt %225 : vector<16x1xf32>
    %227 = vector.broadcast %226 : vector<16x1xf32> to vector<16x32xf32>
    %228 = arith.mulf %218, %227 : vector<16x32xf32>
    %c9 = arith.constant 9 : index
    %c0_91 = arith.constant 0 : index
    %229 = vector.load %arg6[%c9, %c0_91] : memref<32x128xf32, #tpu.memory_space<vmem>>, vector<1x32xf32>
    %230 = vector.broadcast %229 : vector<1x32xf32> to vector<16x32xf32>
    %231 = arith.mulf %228, %230 : vector<16x32xf32>
    %c10 = arith.constant 10 : index
    %c0_92 = arith.constant 0 : index
    %232 = vector.load %arg6[%c10, %c0_92] : memref<32x128xf32, #tpu.memory_space<vmem>>, vector<1x32xf32>
    %233 = vector.broadcast %232 : vector<1x32xf32> to vector<16x32xf32>
    %234 = arith.addf %231, %233 : vector<16x32xf32>
    %235 = arith.addf %234, %35 : vector<16x32xf32>
    %c32 = arith.constant 32 : index
    %c0_93 = arith.constant 0 : index
    %236 = vector.load %arg5[%c32, %c0_93] : memref<128x128xf32, #tpu.memory_space<vmem>>, vector<32x96xf32>
    %cst_94 = arith.constant dense<0.000000e+00> : vector<16x96xf32>
    %237 = tpu.matmul %235, %236, %cst_94 {dimension_numbers = #tpu.dot_dimension_numbers<[1], [0], [0], [1], [0, 0, 1, 1], [], []>} : vector<16x32xf32>, vector<32x96xf32>, vector<16x96xf32> -> vector<16x96xf32>
    %c11 = arith.constant 11 : index
    %c0_95 = arith.constant 0 : index
    %238 = vector.load %arg6[%c11, %c0_95] : memref<32x128xf32, #tpu.memory_space<vmem>>, vector<1x96xf32>
    %239 = vector.broadcast %238 : vector<1x96xf32> to vector<16x96xf32>
    %240 = arith.addf %237, %239 : vector<16x96xf32>
    %241 = vector.extract_strided_slice %240 {offsets = [0, 0], sizes = [16, 32], strides = [1, 1]} : vector<16x96xf32> to vector<16x32xf32>
    %242 = vector.extract_strided_slice %240 {offsets = [0, 32], sizes = [16, 32], strides = [1, 1]} : vector<16x96xf32> to vector<16x32xf32>
    %243 = vector.extract_strided_slice %240 {offsets = [0, 64], sizes = [16, 32], strides = [1, 1]} : vector<16x96xf32> to vector<16x32xf32>
    %244 = vector.extract_strided_slice %241 {offsets = [0, 0], sizes = [8, 8], strides = [1, 1]} : vector<16x32xf32> to vector<8x8xf32>
    %245 = vector.extract_strided_slice %242 {offsets = [0, 0], sizes = [8, 8], strides = [1, 1]} : vector<16x32xf32> to vector<8x8xf32>
    %246 = vector.extract_strided_slice %243 {offsets = [0, 0], sizes = [8, 8], strides = [1, 1]} : vector<16x32xf32> to vector<8x8xf32>
    %cst_96 = arith.constant dense<0.000000e+00> : vector<8x8xf32>
    %247 = tpu.matmul %244, %245, %cst_96 {dimension_numbers = #tpu.dot_dimension_numbers<[1], [1], [0], [0], [0, 0, 1, 0], [], []>} : vector<8x8xf32>, vector<8x8xf32>, vector<8x8xf32> -> vector<8x8xf32>
    %cst_97 = arith.constant dense<0xFF800000> : vector<8xf32>
    %248 = vector.multi_reduction <maximumf>, %247, %cst_97 [1] : vector<8x8xf32> to vector<8xf32>
    %249 = vector.shape_cast %248 : vector<8xf32> to vector<8x1xf32>
    %250 = vector.broadcast %249 : vector<8x1xf32> to vector<8x8xf32>
    %251 = arith.subf %247, %250 : vector<8x8xf32>
    %252 = math.exp %251 : vector<8x8xf32>
    %cst_98 = arith.constant dense<0.000000e+00> : vector<8xf32>
    %253 = vector.multi_reduction <add>, %252, %cst_98 [1] : vector<8x8xf32> to vector<8xf32>
    %254 = vector.shape_cast %253 : vector<8xf32> to vector<8x1xf32>
    %255 = tpu.reciprocal %254 {approx = true} : vector<8x1xf32> -> vector<8x1xf32>
    %256 = vector.broadcast %255 : vector<8x1xf32> to vector<8x8xf32>
    %257 = arith.mulf %252, %256 : vector<8x8xf32>
    %cst_99 = arith.constant dense<0.000000e+00> : vector<8x8xf32>
    %258 = tpu.matmul %257, %246, %cst_99 {dimension_numbers = #tpu.dot_dimension_numbers<[1], [0], [0], [1], [0, 0, 1, 1], [], []>} : vector<8x8xf32>, vector<8x8xf32>, vector<8x8xf32> -> vector<8x8xf32>
    %259 = vector.extract_strided_slice %241 {offsets = [0, 8], sizes = [8, 8], strides = [1, 1]} : vector<16x32xf32> to vector<8x8xf32>
    %260 = vector.extract_strided_slice %242 {offsets = [0, 8], sizes = [8, 8], strides = [1, 1]} : vector<16x32xf32> to vector<8x8xf32>
    %261 = vector.extract_strided_slice %243 {offsets = [0, 8], sizes = [8, 8], strides = [1, 1]} : vector<16x32xf32> to vector<8x8xf32>
    %cst_100 = arith.constant dense<0.000000e+00> : vector<8x8xf32>
    %262 = tpu.matmul %259, %260, %cst_100 {dimension_numbers = #tpu.dot_dimension_numbers<[1], [1], [0], [0], [0, 0, 1, 0], [], []>} : vector<8x8xf32>, vector<8x8xf32>, vector<8x8xf32> -> vector<8x8xf32>
    %cst_101 = arith.constant dense<0xFF800000> : vector<8xf32>
    %263 = vector.multi_reduction <maximumf>, %262, %cst_101 [1] : vector<8x8xf32> to vector<8xf32>
    %264 = vector.shape_cast %263 : vector<8xf32> to vector<8x1xf32>
    %265 = vector.broadcast %264 : vector<8x1xf32> to vector<8x8xf32>
    %266 = arith.subf %262, %265 : vector<8x8xf32>
    %267 = math.exp %266 : vector<8x8xf32>
    %cst_102 = arith.constant dense<0.000000e+00> : vector<8xf32>
    %268 = vector.multi_reduction <add>, %267, %cst_102 [1] : vector<8x8xf32> to vector<8xf32>
    %269 = vector.shape_cast %268 : vector<8xf32> to vector<8x1xf32>
    %270 = tpu.reciprocal %269 {approx = true} : vector<8x1xf32> -> vector<8x1xf32>
    %271 = vector.broadcast %270 : vector<8x1xf32> to vector<8x8xf32>
    %272 = arith.mulf %267, %271 : vector<8x8xf32>
    %cst_103 = arith.constant dense<0.000000e+00> : vector<8x8xf32>
    %273 = tpu.matmul %272, %261, %cst_103 {dimension_numbers = #tpu.dot_dimension_numbers<[1], [0], [0], [1], [0, 0, 1, 1], [], []>} : vector<8x8xf32>, vector<8x8xf32>, vector<8x8xf32> -> vector<8x8xf32>
    %274 = vector.extract_strided_slice %241 {offsets = [0, 16], sizes = [8, 8], strides = [1, 1]} : vector<16x32xf32> to vector<8x8xf32>
    %275 = vector.extract_strided_slice %242 {offsets = [0, 16], sizes = [8, 8], strides = [1, 1]} : vector<16x32xf32> to vector<8x8xf32>
    %276 = vector.extract_strided_slice %243 {offsets = [0, 16], sizes = [8, 8], strides = [1, 1]} : vector<16x32xf32> to vector<8x8xf32>
    %cst_104 = arith.constant dense<0.000000e+00> : vector<8x8xf32>
    %277 = tpu.matmul %274, %275, %cst_104 {dimension_numbers = #tpu.dot_dimension_numbers<[1], [1], [0], [0], [0, 0, 1, 0], [], []>} : vector<8x8xf32>, vector<8x8xf32>, vector<8x8xf32> -> vector<8x8xf32>
    %cst_105 = arith.constant dense<0xFF800000> : vector<8xf32>
    %278 = vector.multi_reduction <maximumf>, %277, %cst_105 [1] : vector<8x8xf32> to vector<8xf32>
    %279 = vector.shape_cast %278 : vector<8xf32> to vector<8x1xf32>
    %280 = vector.broadcast %279 : vector<8x1xf32> to vector<8x8xf32>
    %281 = arith.subf %277, %280 : vector<8x8xf32>
    %282 = math.exp %281 : vector<8x8xf32>
    %cst_106 = arith.constant dense<0.000000e+00> : vector<8xf32>
    %283 = vector.multi_reduction <add>, %282, %cst_106 [1] : vector<8x8xf32> to vector<8xf32>
    %284 = vector.shape_cast %283 : vector<8xf32> to vector<8x1xf32>
    %285 = tpu.reciprocal %284 {approx = true} : vector<8x1xf32> -> vector<8x1xf32>
    %286 = vector.broadcast %285 : vector<8x1xf32> to vector<8x8xf32>
    %287 = arith.mulf %282, %286 : vector<8x8xf32>
    %cst_107 = arith.constant dense<0.000000e+00> : vector<8x8xf32>
    %288 = tpu.matmul %287, %276, %cst_107 {dimension_numbers = #tpu.dot_dimension_numbers<[1], [0], [0], [1], [0, 0, 1, 1], [], []>} : vector<8x8xf32>, vector<8x8xf32>, vector<8x8xf32> -> vector<8x8xf32>
    %289 = vector.extract_strided_slice %241 {offsets = [0, 24], sizes = [8, 8], strides = [1, 1]} : vector<16x32xf32> to vector<8x8xf32>
    %290 = vector.extract_strided_slice %242 {offsets = [0, 24], sizes = [8, 8], strides = [1, 1]} : vector<16x32xf32> to vector<8x8xf32>
    %291 = vector.extract_strided_slice %243 {offsets = [0, 24], sizes = [8, 8], strides = [1, 1]} : vector<16x32xf32> to vector<8x8xf32>
    %cst_108 = arith.constant dense<0.000000e+00> : vector<8x8xf32>
    %292 = tpu.matmul %289, %290, %cst_108 {dimension_numbers = #tpu.dot_dimension_numbers<[1], [1], [0], [0], [0, 0, 1, 0], [], []>} : vector<8x8xf32>, vector<8x8xf32>, vector<8x8xf32> -> vector<8x8xf32>
    %cst_109 = arith.constant dense<0xFF800000> : vector<8xf32>
    %293 = vector.multi_reduction <maximumf>, %292, %cst_109 [1] : vector<8x8xf32> to vector<8xf32>
    %294 = vector.shape_cast %293 : vector<8xf32> to vector<8x1xf32>
    %295 = vector.broadcast %294 : vector<8x1xf32> to vector<8x8xf32>
    %296 = arith.subf %292, %295 : vector<8x8xf32>
    %297 = math.exp %296 : vector<8x8xf32>
    %cst_110 = arith.constant dense<0.000000e+00> : vector<8xf32>
    %298 = vector.multi_reduction <add>, %297, %cst_110 [1] : vector<8x8xf32> to vector<8xf32>
    %299 = vector.shape_cast %298 : vector<8xf32> to vector<8x1xf32>
    %300 = tpu.reciprocal %299 {approx = true} : vector<8x1xf32> -> vector<8x1xf32>
    %301 = vector.broadcast %300 : vector<8x1xf32> to vector<8x8xf32>
    %302 = arith.mulf %297, %301 : vector<8x8xf32>
    %cst_111 = arith.constant dense<0.000000e+00> : vector<8x8xf32>
    %303 = tpu.matmul %302, %291, %cst_111 {dimension_numbers = #tpu.dot_dimension_numbers<[1], [0], [0], [1], [0, 0, 1, 1], [], []>} : vector<8x8xf32>, vector<8x8xf32>, vector<8x8xf32> -> vector<8x8xf32>
    %304 = tpu.concatenate %258, %273, %288, %303 in 1 : vector<8x8xf32>, vector<8x8xf32>, vector<8x8xf32>, vector<8x8xf32> -> vector<8x32xf32>
    %305 = vector.extract_strided_slice %241 {offsets = [8, 0], sizes = [8, 8], strides = [1, 1]} : vector<16x32xf32> to vector<8x8xf32>
    %306 = vector.extract_strided_slice %242 {offsets = [8, 0], sizes = [8, 8], strides = [1, 1]} : vector<16x32xf32> to vector<8x8xf32>
    %307 = vector.extract_strided_slice %243 {offsets = [8, 0], sizes = [8, 8], strides = [1, 1]} : vector<16x32xf32> to vector<8x8xf32>
    %cst_112 = arith.constant dense<0.000000e+00> : vector<8x8xf32>
    %308 = tpu.matmul %305, %306, %cst_112 {dimension_numbers = #tpu.dot_dimension_numbers<[1], [1], [0], [0], [0, 0, 1, 0], [], []>} : vector<8x8xf32>, vector<8x8xf32>, vector<8x8xf32> -> vector<8x8xf32>
    %cst_113 = arith.constant dense<0xFF800000> : vector<8xf32>
    %309 = vector.multi_reduction <maximumf>, %308, %cst_113 [1] : vector<8x8xf32> to vector<8xf32>
    %310 = vector.shape_cast %309 : vector<8xf32> to vector<8x1xf32>
    %311 = vector.broadcast %310 : vector<8x1xf32> to vector<8x8xf32>
    %312 = arith.subf %308, %311 : vector<8x8xf32>
    %313 = math.exp %312 : vector<8x8xf32>
    %cst_114 = arith.constant dense<0.000000e+00> : vector<8xf32>
    %314 = vector.multi_reduction <add>, %313, %cst_114 [1] : vector<8x8xf32> to vector<8xf32>
    %315 = vector.shape_cast %314 : vector<8xf32> to vector<8x1xf32>
    %316 = tpu.reciprocal %315 {approx = true} : vector<8x1xf32> -> vector<8x1xf32>
    %317 = vector.broadcast %316 : vector<8x1xf32> to vector<8x8xf32>
    %318 = arith.mulf %313, %317 : vector<8x8xf32>
    %cst_115 = arith.constant dense<0.000000e+00> : vector<8x8xf32>
    %319 = tpu.matmul %318, %307, %cst_115 {dimension_numbers = #tpu.dot_dimension_numbers<[1], [0], [0], [1], [0, 0, 1, 1], [], []>} : vector<8x8xf32>, vector<8x8xf32>, vector<8x8xf32> -> vector<8x8xf32>
    %320 = vector.extract_strided_slice %241 {offsets = [8, 8], sizes = [8, 8], strides = [1, 1]} : vector<16x32xf32> to vector<8x8xf32>
    %321 = vector.extract_strided_slice %242 {offsets = [8, 8], sizes = [8, 8], strides = [1, 1]} : vector<16x32xf32> to vector<8x8xf32>
    %322 = vector.extract_strided_slice %243 {offsets = [8, 8], sizes = [8, 8], strides = [1, 1]} : vector<16x32xf32> to vector<8x8xf32>
    %cst_116 = arith.constant dense<0.000000e+00> : vector<8x8xf32>
    %323 = tpu.matmul %320, %321, %cst_116 {dimension_numbers = #tpu.dot_dimension_numbers<[1], [1], [0], [0], [0, 0, 1, 0], [], []>} : vector<8x8xf32>, vector<8x8xf32>, vector<8x8xf32> -> vector<8x8xf32>
    %cst_117 = arith.constant dense<0xFF800000> : vector<8xf32>
    %324 = vector.multi_reduction <maximumf>, %323, %cst_117 [1] : vector<8x8xf32> to vector<8xf32>
    %325 = vector.shape_cast %324 : vector<8xf32> to vector<8x1xf32>
    %326 = vector.broadcast %325 : vector<8x1xf32> to vector<8x8xf32>
    %327 = arith.subf %323, %326 : vector<8x8xf32>
    %328 = math.exp %327 : vector<8x8xf32>
    %cst_118 = arith.constant dense<0.000000e+00> : vector<8xf32>
    %329 = vector.multi_reduction <add>, %328, %cst_118 [1] : vector<8x8xf32> to vector<8xf32>
    %330 = vector.shape_cast %329 : vector<8xf32> to vector<8x1xf32>
    %331 = tpu.reciprocal %330 {approx = true} : vector<8x1xf32> -> vector<8x1xf32>
    %332 = vector.broadcast %331 : vector<8x1xf32> to vector<8x8xf32>
    %333 = arith.mulf %328, %332 : vector<8x8xf32>
    %cst_119 = arith.constant dense<0.000000e+00> : vector<8x8xf32>
    %334 = tpu.matmul %333, %322, %cst_119 {dimension_numbers = #tpu.dot_dimension_numbers<[1], [0], [0], [1], [0, 0, 1, 1], [], []>} : vector<8x8xf32>, vector<8x8xf32>, vector<8x8xf32> -> vector<8x8xf32>
    %335 = vector.extract_strided_slice %241 {offsets = [8, 16], sizes = [8, 8], strides = [1, 1]} : vector<16x32xf32> to vector<8x8xf32>
    %336 = vector.extract_strided_slice %242 {offsets = [8, 16], sizes = [8, 8], strides = [1, 1]} : vector<16x32xf32> to vector<8x8xf32>
    %337 = vector.extract_strided_slice %243 {offsets = [8, 16], sizes = [8, 8], strides = [1, 1]} : vector<16x32xf32> to vector<8x8xf32>
    %cst_120 = arith.constant dense<0.000000e+00> : vector<8x8xf32>
    %338 = tpu.matmul %335, %336, %cst_120 {dimension_numbers = #tpu.dot_dimension_numbers<[1], [1], [0], [0], [0, 0, 1, 0], [], []>} : vector<8x8xf32>, vector<8x8xf32>, vector<8x8xf32> -> vector<8x8xf32>
    %cst_121 = arith.constant dense<0xFF800000> : vector<8xf32>
    %339 = vector.multi_reduction <maximumf>, %338, %cst_121 [1] : vector<8x8xf32> to vector<8xf32>
    %340 = vector.shape_cast %339 : vector<8xf32> to vector<8x1xf32>
    %341 = vector.broadcast %340 : vector<8x1xf32> to vector<8x8xf32>
    %342 = arith.subf %338, %341 : vector<8x8xf32>
    %343 = math.exp %342 : vector<8x8xf32>
    %cst_122 = arith.constant dense<0.000000e+00> : vector<8xf32>
    %344 = vector.multi_reduction <add>, %343, %cst_122 [1] : vector<8x8xf32> to vector<8xf32>
    %345 = vector.shape_cast %344 : vector<8xf32> to vector<8x1xf32>
    %346 = tpu.reciprocal %345 {approx = true} : vector<8x1xf32> -> vector<8x1xf32>
    %347 = vector.broadcast %346 : vector<8x1xf32> to vector<8x8xf32>
    %348 = arith.mulf %343, %347 : vector<8x8xf32>
    %cst_123 = arith.constant dense<0.000000e+00> : vector<8x8xf32>
    %349 = tpu.matmul %348, %337, %cst_123 {dimension_numbers = #tpu.dot_dimension_numbers<[1], [0], [0], [1], [0, 0, 1, 1], [], []>} : vector<8x8xf32>, vector<8x8xf32>, vector<8x8xf32> -> vector<8x8xf32>
    %350 = vector.extract_strided_slice %241 {offsets = [8, 24], sizes = [8, 8], strides = [1, 1]} : vector<16x32xf32> to vector<8x8xf32>
    %351 = vector.extract_strided_slice %242 {offsets = [8, 24], sizes = [8, 8], strides = [1, 1]} : vector<16x32xf32> to vector<8x8xf32>
    %352 = vector.extract_strided_slice %243 {offsets = [8, 24], sizes = [8, 8], strides = [1, 1]} : vector<16x32xf32> to vector<8x8xf32>
    %cst_124 = arith.constant dense<0.000000e+00> : vector<8x8xf32>
    %353 = tpu.matmul %350, %351, %cst_124 {dimension_numbers = #tpu.dot_dimension_numbers<[1], [1], [0], [0], [0, 0, 1, 0], [], []>} : vector<8x8xf32>, vector<8x8xf32>, vector<8x8xf32> -> vector<8x8xf32>
    %cst_125 = arith.constant dense<0xFF800000> : vector<8xf32>
    %354 = vector.multi_reduction <maximumf>, %353, %cst_125 [1] : vector<8x8xf32> to vector<8xf32>
    %355 = vector.shape_cast %354 : vector<8xf32> to vector<8x1xf32>
    %356 = vector.broadcast %355 : vector<8x1xf32> to vector<8x8xf32>
    %357 = arith.subf %353, %356 : vector<8x8xf32>
    %358 = math.exp %357 : vector<8x8xf32>
    %cst_126 = arith.constant dense<0.000000e+00> : vector<8xf32>
    %359 = vector.multi_reduction <add>, %358, %cst_126 [1] : vector<8x8xf32> to vector<8xf32>
    %360 = vector.shape_cast %359 : vector<8xf32> to vector<8x1xf32>
    %361 = tpu.reciprocal %360 {approx = true} : vector<8x1xf32> -> vector<8x1xf32>
    %362 = vector.broadcast %361 : vector<8x1xf32> to vector<8x8xf32>
    %363 = arith.mulf %358, %362 : vector<8x8xf32>
    %cst_127 = arith.constant dense<0.000000e+00> : vector<8x8xf32>
    %364 = tpu.matmul %363, %352, %cst_127 {dimension_numbers = #tpu.dot_dimension_numbers<[1], [0], [0], [1], [0, 0, 1, 1], [], []>} : vector<8x8xf32>, vector<8x8xf32>, vector<8x8xf32> -> vector<8x8xf32>
    %365 = tpu.concatenate %319, %334, %349, %364 in 1 : vector<8x8xf32>, vector<8x8xf32>, vector<8x8xf32>, vector<8x8xf32> -> vector<8x32xf32>
    %366 = tpu.concatenate %304, %365 in 0 : vector<8x32xf32>, vector<8x32xf32> -> vector<16x32xf32>
    %c376 = arith.constant 376 : index
    %c0_128 = arith.constant 0 : index
    %367 = vector.load %arg4[%c376, %c0_128] : memref<696x32xf32, #tpu.memory_space<vmem>>, vector<32x32xf32>
    %cst_129 = arith.constant dense<0.000000e+00> : vector<16x32xf32>
    %368 = tpu.matmul %366, %367, %cst_129 {dimension_numbers = #tpu.dot_dimension_numbers<[1], [0], [0], [1], [0, 0, 1, 1], [], []>} : vector<16x32xf32>, vector<32x32xf32>, vector<16x32xf32> -> vector<16x32xf32>
    %369 = arith.addf %235, %368 : vector<16x32xf32>
    %c12 = arith.constant 12 : index
    %c0_130 = arith.constant 0 : index
    %370 = vector.load %arg6[%c12, %c0_130] : memref<32x128xf32, #tpu.memory_space<vmem>>, vector<1x32xf32>
    %371 = vector.broadcast %370 : vector<1x32xf32> to vector<16x32xf32>
    %372 = arith.addf %369, %371 : vector<16x32xf32>
    %cst_131 = arith.constant dense<0.000000e+00> : vector<16xf32>
    %373 = vector.multi_reduction <add>, %372, %cst_131 [1] : vector<16x32xf32> to vector<16xf32>
    %374 = vector.shape_cast %373 : vector<16xf32> to vector<16x1xf32>
    %cst_132 = arith.constant 3.200000e+01 : f32
    %375 = vector.broadcast %cst_132 : f32 to vector<16x1xf32>
    %376 = arith.divf %374, %375 : vector<16x1xf32>
    %377 = vector.broadcast %376 : vector<16x1xf32> to vector<16x32xf32>
    %378 = arith.subf %372, %377 : vector<16x32xf32>
    %379 = arith.mulf %378, %378 : vector<16x32xf32>
    %cst_133 = arith.constant dense<0.000000e+00> : vector<16xf32>
    %380 = vector.multi_reduction <add>, %379, %cst_133 [1] : vector<16x32xf32> to vector<16xf32>
    %381 = vector.shape_cast %380 : vector<16xf32> to vector<16x1xf32>
    %cst_134 = arith.constant 3.200000e+01 : f32
    %382 = vector.broadcast %cst_134 : f32 to vector<16x1xf32>
    %383 = arith.divf %381, %382 : vector<16x1xf32>
    %cst_135 = arith.constant 9.99999974E-6 : f32
    %384 = vector.broadcast %cst_135 : f32 to vector<16x1xf32>
    %385 = arith.addf %383, %384 : vector<16x1xf32>
    %386 = math.rsqrt %385 : vector<16x1xf32>
    %387 = vector.broadcast %386 : vector<16x1xf32> to vector<16x32xf32>
    %388 = arith.mulf %378, %387 : vector<16x32xf32>
    %c13 = arith.constant 13 : index
    %c0_136 = arith.constant 0 : index
    %389 = vector.load %arg6[%c13, %c0_136] : memref<32x128xf32, #tpu.memory_space<vmem>>, vector<1x32xf32>
    %390 = vector.broadcast %389 : vector<1x32xf32> to vector<16x32xf32>
    %391 = arith.mulf %388, %390 : vector<16x32xf32>
    %c14 = arith.constant 14 : index
    %c0_137 = arith.constant 0 : index
    %392 = vector.load %arg6[%c14, %c0_137] : memref<32x128xf32, #tpu.memory_space<vmem>>, vector<1x32xf32>
    %393 = vector.broadcast %392 : vector<1x32xf32> to vector<16x32xf32>
    %394 = arith.addf %391, %393 : vector<16x32xf32>
    %c64 = arith.constant 64 : index
    %c0_138 = arith.constant 0 : index
    %395 = vector.load %arg5[%c64, %c0_138] : memref<128x128xf32, #tpu.memory_space<vmem>>, vector<32x128xf32>
    %cst_139 = arith.constant dense<0.000000e+00> : vector<16x128xf32>
    %396 = tpu.matmul %394, %395, %cst_139 {dimension_numbers = #tpu.dot_dimension_numbers<[1], [0], [0], [1], [0, 0, 1, 1], [], []>} : vector<16x32xf32>, vector<32x128xf32>, vector<16x128xf32> -> vector<16x128xf32>
    %c15 = arith.constant 15 : index
    %c0_140 = arith.constant 0 : index
    %397 = vector.load %arg6[%c15, %c0_140] : memref<32x128xf32, #tpu.memory_space<vmem>>, vector<1x128xf32>
    %398 = vector.broadcast %397 : vector<1x128xf32> to vector<16x128xf32>
    %399 = arith.addf %396, %398 : vector<16x128xf32>
    %cst_141 = arith.constant 5.000000e-01 : f32
    %400 = vector.broadcast %cst_141 : f32 to vector<16x128xf32>
    %401 = arith.mulf %400, %399 : vector<16x128xf32>
    %cst_142 = arith.constant 0.707106769 : f32
    %402 = vector.broadcast %cst_142 : f32 to vector<16x128xf32>
    %403 = arith.mulf %399, %402 : vector<16x128xf32>
    %404 = math.erf %403 : vector<16x128xf32>
    %cst_143 = arith.constant 1.000000e+00 : f32
    %405 = vector.broadcast %cst_143 : f32 to vector<16x128xf32>
    %406 = arith.addf %405, %404 : vector<16x128xf32>
    %407 = arith.mulf %401, %406 : vector<16x128xf32>
    %c408 = arith.constant 408 : index
    %c0_144 = arith.constant 0 : index
    %408 = vector.load %arg4[%c408, %c0_144] : memref<696x32xf32, #tpu.memory_space<vmem>>, vector<128x32xf32>
    %cst_145 = arith.constant dense<0.000000e+00> : vector<16x32xf32>
    %409 = tpu.matmul %407, %408, %cst_145 {dimension_numbers = #tpu.dot_dimension_numbers<[1], [0], [0], [1], [0, 0, 1, 1], [], []>} : vector<16x128xf32>, vector<128x32xf32>, vector<16x32xf32> -> vector<16x32xf32>
    %c16 = arith.constant 16 : index
    %c0_146 = arith.constant 0 : index
    %410 = vector.load %arg6[%c16, %c0_146] : memref<32x128xf32, #tpu.memory_space<vmem>>, vector<1x32xf32>
    %411 = vector.broadcast %410 : vector<1x32xf32> to vector<16x32xf32>
    %412 = arith.addf %409, %411 : vector<16x32xf32>
    %413 = arith.addf %372, %412 : vector<16x32xf32>
    %cst_147 = arith.constant dense<0.000000e+00> : vector<16xf32>
    %414 = vector.multi_reduction <add>, %413, %cst_147 [1] : vector<16x32xf32> to vector<16xf32>
    %415 = vector.shape_cast %414 : vector<16xf32> to vector<16x1xf32>
    %cst_148 = arith.constant 3.200000e+01 : f32
    %416 = vector.broadcast %cst_148 : f32 to vector<16x1xf32>
    %417 = arith.divf %415, %416 : vector<16x1xf32>
    %418 = vector.broadcast %417 : vector<16x1xf32> to vector<16x32xf32>
    %419 = arith.subf %413, %418 : vector<16x32xf32>
    %420 = arith.mulf %419, %419 : vector<16x32xf32>
    %cst_149 = arith.constant dense<0.000000e+00> : vector<16xf32>
    %421 = vector.multi_reduction <add>, %420, %cst_149 [1] : vector<16x32xf32> to vector<16xf32>
    %422 = vector.shape_cast %421 : vector<16xf32> to vector<16x1xf32>
    %cst_150 = arith.constant 3.200000e+01 : f32
    %423 = vector.broadcast %cst_150 : f32 to vector<16x1xf32>
    %424 = arith.divf %422, %423 : vector<16x1xf32>
    %cst_151 = arith.constant 9.99999974E-6 : f32
    %425 = vector.broadcast %cst_151 : f32 to vector<16x1xf32>
    %426 = arith.addf %424, %425 : vector<16x1xf32>
    %427 = math.rsqrt %426 : vector<16x1xf32>
    %428 = vector.broadcast %427 : vector<16x1xf32> to vector<16x32xf32>
    %429 = arith.mulf %419, %428 : vector<16x32xf32>
    %c17 = arith.constant 17 : index
    %c0_152 = arith.constant 0 : index
    %430 = vector.load %arg6[%c17, %c0_152] : memref<32x128xf32, #tpu.memory_space<vmem>>, vector<1x32xf32>
    %431 = vector.broadcast %430 : vector<1x32xf32> to vector<16x32xf32>
    %432 = arith.mulf %429, %431 : vector<16x32xf32>
    %c18 = arith.constant 18 : index
    %c0_153 = arith.constant 0 : index
    %433 = vector.load %arg6[%c18, %c0_153] : memref<32x128xf32, #tpu.memory_space<vmem>>, vector<1x32xf32>
    %434 = vector.broadcast %433 : vector<1x32xf32> to vector<16x32xf32>
    %435 = arith.addf %432, %434 : vector<16x32xf32>
    %cst_154 = arith.constant dense<0.000000e+00> : vector<16xf32>
    %436 = vector.multi_reduction <add>, %435, %cst_154 [1] : vector<16x32xf32> to vector<16xf32>
    %437 = vector.shape_cast %436 : vector<16xf32> to vector<16x1xf32>
    %cst_155 = arith.constant 3.200000e+01 : f32
    %438 = vector.broadcast %cst_155 : f32 to vector<16x1xf32>
    %439 = arith.divf %437, %438 : vector<16x1xf32>
    %440 = vector.broadcast %439 : vector<16x1xf32> to vector<16x32xf32>
    %441 = arith.subf %435, %440 : vector<16x32xf32>
    %442 = arith.mulf %441, %441 : vector<16x32xf32>
    %cst_156 = arith.constant dense<0.000000e+00> : vector<16xf32>
    %443 = vector.multi_reduction <add>, %442, %cst_156 [1] : vector<16x32xf32> to vector<16xf32>
    %444 = vector.shape_cast %443 : vector<16xf32> to vector<16x1xf32>
    %cst_157 = arith.constant 3.200000e+01 : f32
    %445 = vector.broadcast %cst_157 : f32 to vector<16x1xf32>
    %446 = arith.divf %444, %445 : vector<16x1xf32>
    %cst_158 = arith.constant 9.99999974E-6 : f32
    %447 = vector.broadcast %cst_158 : f32 to vector<16x1xf32>
    %448 = arith.addf %446, %447 : vector<16x1xf32>
    %449 = math.rsqrt %448 : vector<16x1xf32>
    %450 = vector.broadcast %449 : vector<16x1xf32> to vector<16x32xf32>
    %451 = arith.mulf %441, %450 : vector<16x32xf32>
    %c19 = arith.constant 19 : index
    %c0_159 = arith.constant 0 : index
    %452 = vector.load %arg6[%c19, %c0_159] : memref<32x128xf32, #tpu.memory_space<vmem>>, vector<1x32xf32>
    %453 = vector.broadcast %452 : vector<1x32xf32> to vector<16x32xf32>
    %454 = arith.mulf %451, %453 : vector<16x32xf32>
    %c20 = arith.constant 20 : index
    %c0_160 = arith.constant 0 : index
    %455 = vector.load %arg6[%c20, %c0_160] : memref<32x128xf32, #tpu.memory_space<vmem>>, vector<1x32xf32>
    %456 = vector.broadcast %455 : vector<1x32xf32> to vector<16x32xf32>
    %457 = arith.addf %454, %456 : vector<16x32xf32>
    %c536 = arith.constant 536 : index
    %c0_161 = arith.constant 0 : index
    %458 = vector.load %arg4[%c536, %c0_161] : memref<696x32xf32, #tpu.memory_space<vmem>>, vector<32x16xf32>
    %cst_162 = arith.constant dense<0.000000e+00> : vector<16x16xf32>
    %459 = tpu.matmul %457, %458, %cst_162 {dimension_numbers = #tpu.dot_dimension_numbers<[1], [0], [0], [1], [0, 0, 1, 1], [], []>} : vector<16x32xf32>, vector<32x16xf32>, vector<16x16xf32> -> vector<16x16xf32>
    %cst_163 = arith.constant dense<0.000000e+00> : vector<16xf32>
    %460 = vector.multi_reduction <add>, %435, %cst_163 [1] : vector<16x32xf32> to vector<16xf32>
    %461 = vector.shape_cast %460 : vector<16xf32> to vector<16x1xf32>
    %cst_164 = arith.constant 3.200000e+01 : f32
    %462 = vector.broadcast %cst_164 : f32 to vector<16x1xf32>
    %463 = arith.divf %461, %462 : vector<16x1xf32>
    %464 = vector.broadcast %463 : vector<16x1xf32> to vector<16x32xf32>
    %465 = arith.subf %435, %464 : vector<16x32xf32>
    %466 = arith.mulf %465, %465 : vector<16x32xf32>
    %cst_165 = arith.constant dense<0.000000e+00> : vector<16xf32>
    %467 = vector.multi_reduction <add>, %466, %cst_165 [1] : vector<16x32xf32> to vector<16xf32>
    %468 = vector.shape_cast %467 : vector<16xf32> to vector<16x1xf32>
    %cst_166 = arith.constant 3.200000e+01 : f32
    %469 = vector.broadcast %cst_166 : f32 to vector<16x1xf32>
    %470 = arith.divf %468, %469 : vector<16x1xf32>
    %cst_167 = arith.constant 9.99999974E-6 : f32
    %471 = vector.broadcast %cst_167 : f32 to vector<16x1xf32>
    %472 = arith.addf %470, %471 : vector<16x1xf32>
    %473 = math.rsqrt %472 : vector<16x1xf32>
    %474 = vector.broadcast %473 : vector<16x1xf32> to vector<16x32xf32>
    %475 = arith.mulf %465, %474 : vector<16x32xf32>
    %c21 = arith.constant 21 : index
    %c0_168 = arith.constant 0 : index
    %476 = vector.load %arg6[%c21, %c0_168] : memref<32x128xf32, #tpu.memory_space<vmem>>, vector<1x32xf32>
    %477 = vector.broadcast %476 : vector<1x32xf32> to vector<16x32xf32>
    %478 = arith.mulf %475, %477 : vector<16x32xf32>
    %c22 = arith.constant 22 : index
    %c0_169 = arith.constant 0 : index
    %479 = vector.load %arg6[%c22, %c0_169] : memref<32x128xf32, #tpu.memory_space<vmem>>, vector<1x32xf32>
    %480 = vector.broadcast %479 : vector<1x32xf32> to vector<16x32xf32>
    %481 = arith.addf %478, %480 : vector<16x32xf32>
    %c96 = arith.constant 96 : index
    %c0_170 = arith.constant 0 : index
    %482 = vector.load %arg5[%c96, %c0_170] : memref<128x128xf32, #tpu.memory_space<vmem>>, vector<32x128xf32>
    %cst_171 = arith.constant dense<0.000000e+00> : vector<16x128xf32>
    %483 = tpu.matmul %481, %482, %cst_171 {dimension_numbers = #tpu.dot_dimension_numbers<[1], [0], [0], [1], [0, 0, 1, 1], [], []>} : vector<16x32xf32>, vector<32x128xf32>, vector<16x128xf32> -> vector<16x128xf32>
    %c23 = arith.constant 23 : index
    %c0_172 = arith.constant 0 : index
    %484 = vector.load %arg6[%c23, %c0_172] : memref<32x128xf32, #tpu.memory_space<vmem>>, vector<1x128xf32>
    %485 = vector.broadcast %484 : vector<1x128xf32> to vector<16x128xf32>
    %486 = arith.addf %483, %485 : vector<16x128xf32>
    %cst_173 = arith.constant 5.000000e-01 : f32
    %487 = vector.broadcast %cst_173 : f32 to vector<16x128xf32>
    %488 = arith.mulf %487, %486 : vector<16x128xf32>
    %cst_174 = arith.constant 0.707106769 : f32
    %489 = vector.broadcast %cst_174 : f32 to vector<16x128xf32>
    %490 = arith.mulf %486, %489 : vector<16x128xf32>
    %491 = math.erf %490 : vector<16x128xf32>
    %cst_175 = arith.constant 1.000000e+00 : f32
    %492 = vector.broadcast %cst_175 : f32 to vector<16x128xf32>
    %493 = arith.addf %492, %491 : vector<16x128xf32>
    %494 = arith.mulf %488, %493 : vector<16x128xf32>
    %c568 = arith.constant 568 : index
    %c0_176 = arith.constant 0 : index
    %495 = vector.load %arg4[%c568, %c0_176] : memref<696x32xf32, #tpu.memory_space<vmem>>, vector<128x16xf32>
    %cst_177 = arith.constant dense<0.000000e+00> : vector<16x16xf32>
    %496 = tpu.matmul %494, %495, %cst_177 {dimension_numbers = #tpu.dot_dimension_numbers<[1], [0], [0], [1], [0, 0, 1, 1], [], []>} : vector<16x128xf32>, vector<128x16xf32>, vector<16x16xf32> -> vector<16x16xf32>
    %c24_178 = arith.constant 24 : index
    %c0_179 = arith.constant 0 : index
    %497 = vector.load %arg6[%c24_178, %c0_179] : memref<32x128xf32, #tpu.memory_space<vmem>>, vector<1x16xf32>
    %498 = vector.broadcast %497 : vector<1x16xf32> to vector<16x16xf32>
    %499 = arith.addf %496, %498 : vector<16x16xf32>
    %500 = arith.addf %459, %499 : vector<16x16xf32>
    %c0_180 = arith.constant 0 : index
    %c0_181 = arith.constant 0 : index
    %501 = vector.load %arg7[%c0_180, %c0_181] : memref<16x16xf32, #tpu.memory_space<vmem>>, vector<16x16xf32>
    tpu.vector_store %arg7[%c0_180, %c0_181], %500 {strides = array<i32>} : memref<16x16xf32, #tpu.memory_space<vmem>>, vector<16x16xf32>,
    return
  }
  func.func @transform_0(%arg0: i32) -> (i32, i32) {
    %c0_i32 = arith.constant 0 : i32
    %c0_i32_0 = arith.constant 0 : i32
    return %arg0, %c0_i32 : i32, i32
  }
  func.func @transform_1(%arg0: i32) -> (i32, i32, i32) {
    %c0_i32 = arith.constant 0 : i32
    %c0_i32_0 = arith.constant 0 : i32
    %c0_i32_1 = arith.constant 0 : i32
    return %arg0, %c0_i32, %c0_i32_0 : i32, i32, i32
  }
  func.func @transform_2(%arg0: i32) -> (i32, i32, i32) {
    %c0_i32 = arith.constant 0 : i32
    %c0_i32_0 = arith.constant 0 : i32
    %c0_i32_1 = arith.constant 0 : i32
    return %arg0, %c0_i32, %c0_i32_0 : i32, i32, i32
  }
  func.func @transform_3(%arg0: i32) -> (i32, i32) {
    %c0_i32 = arith.constant 0 : i32
    %c0_i32_0 = arith.constant 0 : i32
    %c0_i32_1 = arith.constant 0 : i32
    return %c0_i32, %c0_i32_0 : i32, i32
  }
  func.func @transform_4(%arg0: i32) -> (i32, i32) {
    %c0_i32 = arith.constant 0 : i32
    %c0_i32_0 = arith.constant 0 : i32
    %c0_i32_1 = arith.constant 0 : i32
    return %c0_i32, %c0_i32_0 : i32, i32
  }
  func.func @transform_5(%arg0: i32) -> (i32, i32) {
    %c0_i32 = arith.constant 0 : i32
    %c0_i32_0 = arith.constant 0 : i32
    %c0_i32_1 = arith.constant 0 : i32
    return %c0_i32, %c0_i32_0 : i32, i32
  }
  func.func @transform_6(%arg0: i32) -> (i32, i32) {
    %c0_i32 = arith.constant 0 : i32
    %c0_i32_0 = arith.constant 0 : i32
    return %arg0, %c0_i32 : i32, i32
  }
}

</mosaic_0001>

<llo_original>
// kernel: share_refiner_forward.1
$region0: #{share_refiner_forward.1}
  #allocation0 [shape = 'u32[]', space=smem, size = 0x4, offset = 0x4, fixed_abs, tag = 'smem constant byte address 0x4 - core index']
  #allocation1 [shape = 'u32[144,128]{1,0:T(1,128)}', space=vmem, size = 0x12000, scoped, tag = 'internal scratch']
  %s0 = inlined_call_operand.vmem [shape: f32[16,24], index: 0, kind: input, shape index: {}]
  %s1 = inlined_call_operand.vmem [shape: f32[2,32,64], index: 1, kind: input, shape index: {}]
  %s2 = inlined_call_operand.vmem [shape: f32[2,64,32], index: 2, kind: input, shape index: {}]
  %s3 = inlined_call_operand.vmem [shape: f32[696,32], index: 3, kind: input, shape index: {}]
  %s4 = inlined_call_operand.vmem [shape: f32[128,128], index: 4, kind: input, shape index: {}]
  %s5 = inlined_call_operand.vmem [shape: f32[32,128], index: 5, kind: input, shape index: {}]
  %s6 = inlined_call_operand.hbm [shape: f32[16,16], index: 6, kind: output, shape index: {}]
  %s7 = sld [smem:[#allocation0]]
  $region34: #{share_refiner_forward.1} parent=0
    _
  %s9 = ssub.s32 1, %s7
  %s10 = scalar_select 0, %s9, %s7
  $region1: #{share_refiner_forward.1} parent=0
    #allocation2 [shape = 'u8[8192]{0}', space=vmem, size = 0x2000, scoped, tag = 'output window, operand 0, single buffered']
    #allocation3 [shape = 's32[1]{0}', space=sflag, size = 0x4, scoped, tag = 'scoped memory for share_refiner_forward.1']
    %11 = vsyncpa [#allocation3], 0
    // Predicated region
    $region2: #{share_refiner_forward.1} parent=1 // pred_check
      _
    $region3: #{share_refiner_forward.1} parent=1 // pred_check_branch
      %13 = sbr.rel (0) target = $region5
    $region4: #{share_refiner_forward.1} parent=1 // pred_region
      _
    $region5: #{share_refiner_forward.1} parent=1 // pred_fallthru
      _
    // Predicated region
    $region6: #{share_refiner_forward.1} parent=1 // pred_check
      _
    $region7: #{share_refiner_forward.1} parent=1 // pred_check_branch
      %15 = sbr.rel (0) target = $region9
    $region8: #{share_refiner_forward.1} parent=1 // pred_region
      _
    $region9: #{share_refiner_forward.1} parent=1 // pred_fallthru
      _
    // Predicated region
    $region10: #{share_refiner_forward.1} parent=1 // pred_check
      _
    $region11: #{share_refiner_forward.1} parent=1 // pred_check_branch
      %17 = sbr.rel (0) target = $region13
    $region12: #{share_refiner_forward.1} parent=1 // pred_region
      _
    $region13: #{share_refiner_forward.1} parent=1 // pred_fallthru
      _
    // Predicated region
    $region14: #{share_refiner_forward.1} parent=1 // pred_check
      _
    $region15: #{share_refiner_forward.1} parent=1 // pred_check_branch
      %19 = sbr.rel (0) target = $region17
    $region16: #{share_refiner_forward.1} parent=1 // pred_region
      _
    $region17: #{share_refiner_forward.1} parent=1 // pred_fallthru
      _
    // Predicated region
    $region18: #{share_refiner_forward.1} parent=1 // pred_check
      _
    $region19: #{share_refiner_forward.1} parent=1 // pred_check_branch
      %21 = sbr.rel (0) target = $region21
    $region20: #{share_refiner_forward.1} parent=1 // pred_region
      _
    $region21: #{share_refiner_forward.1} parent=1 // pred_fallthru
      _
    // Predicated region
    $region22: #{share_refiner_forward.1} parent=1 // pred_check
      _
    $region23: #{share_refiner_forward.1} parent=1 // pred_check_branch
      %23 = sbr.rel (0) target = $region25
    $region24: #{share_refiner_forward.1} parent=1 // pred_region
      _
    $region25: #{share_refiner_forward.1} parent=1 // pred_fallthru
      _
    %v24 = vld [vmem:[%s0] sm:$0xff]
    %v25 = vld [vmem:[%s0 + $0x8] sm:$0xff]
    %v26 = vld [vmem:[%s3] sm:$0xff]
    %v27 = vld [vmem:[%s3 + $0x8] sm:$0xff]
    %v28 = vld [vmem:[%s3 + $0x10] sm:$0xff]
    %v29 = vld [vmem:[%s5] sm:$0x1]
    %v30 = vlaneseq
    %v31 = vshrl.u32 %v30, 7
    %v32 = vsub.s32 0, %v31
    %v33 = vrot.slane %v29, %v32
    %vm34 = vcmask 195584
    %v36 = vsel %vm34, %v24, 0
    %v39 = vsel %vm34, %v25, 0
    %41 = vmatprep.subr.mxu0 0.0
    %42 = vmatpush1.msra.mxu0 %v26
    %43 = vmatprep.subr.mxu0 0.0
    %44 = vmatpush1.msra.mxu0 %v27
    %45 = vmatprep.subr.mxu0 0.0
    %46 = vmatpush1.msra.mxu0 %v28
    %47 = vmatprep.subr.mxu0 0.0
    %48 = vmatpush1.msra.mxu0 0.0
    %49 = vmatprep.subr.mxu0 0.0
    %50 = vmatpush1.msra.mxu0 0.0
    %51 = vmatprep.subr.mxu0 0.0
    %52 = vmatpush1.msra.mxu0 0.0
    %53 = vmatprep.subr.mxu0 0.0
    %54 = vmatpush1.msra.mxu0 0.0
    %55 = vmatprep.subr.mxu0 0.0
    %56 = vmatpush1.msra.mxu0 0.0
    %57 = vmatprep.subr.mxu0 0.0
    %58 = vmatpush1.msra.mxu0 0.0
    %59 = vmatprep.subr.mxu0 0.0
    %60 = vmatpush1.msra.mxu0 0.0
    %61 = vmatprep.subr.mxu0 0.0
    %62 = vmatpush1.msra.mxu0 0.0
    %63 = vmatprep.subr.mxu0 0.0
    %64 = vmatpush1.msra.mxu0 0.0
    %65 = vmatprep.subr.mxu0 0.0
    %66 = vmatpush1.msra.mxu0 0.0
    %67 = vmatprep.subr.mxu0 0.0
    %68 = vmatpush1.msra.mxu0 0.0
    %69 = vmatprep.subr.mxu0 0.0
    %70 = vmatpush1.msra.mxu0 0.0
    %71 = vmatprep.subr.mxu0 0.0
    %72 = vmatpush1.msra.mxu0 0.0
    %73 = vmatprep.subr.mxu0 0.0
    %74 = vmatpush1.msra.mxu0 0.0
    %75 = vmatprep.subr.mxu0 0.0
    %76 = vmatpush1.msra.mxu0 0.0
    %77 = vmatprep.subr.mxu0 0.0
    %78 = vmatpush1.msra.mxu0 0.0
    %79 = vmatprep.subr.mxu0 0.0
    %80 = vmatpush1.msra.mxu0 0.0
    %81 = vmatprep.subr.mxu0 0.0
    %82 = vmatpush1.msra.mxu0 0.0
    %83 = vmatprep.subr.mxu0 0.0
    %84 = vmatpush1.msra.mxu0 0.0
    %85 = vmatprep.subr.mxu0 0.0
    %86 = vmatpush1.msra.mxu0 0.0
    %87 = vmatprep.subr.mxu0 0.0
    %88 = vmatpush1.msra.mxu0 0.0
    %89 = vmatprep.subr.mxu0 0.0
    %90 = vmatpush1.msra.mxu0 0.0
    %91 = vmatprep.subr.mxu0 0.0
    %92 = vmatpush1.msra.mxu0 0.0
    %93 = vmatprep.subr.mxu0 0.0
    %94 = vmatpush1.msra.mxu0 0.0
    %95 = vmatprep.subr.mxu0 0.0
    %96 = vmatpush1.msra.mxu0 0.0
    %97 = vmatprep.subr.mxu0 0.0
    %98 = vmatpush1.msra.mxu0 0.0
    %99 = vmatprep.subr.mxu0 0.0
    %100 = vmatpush1.msra.mxu0 0.0
    %101 = vmatprep.subr.mxu0 0.0
    %102 = vmatpush1.msra.mxu0 0.0
    %103 = vmatprep.subr.mxu0 0.0
    %104 = vmatpush1.msra.mxu0 0.0
    %105 = vmatprep.mubr.f32.mxu0 0.0
    %106 = vmatmul.mubr.f32.gmra.mrb[0].mxu0 %v36
    %v107 = vpop.f32.mrb[0].mxu0
    %v108 = vadd.f32 %v33, %v107
    %v109 = vpop.f32.mrb[0].mxu0
    %110 = vmatprep.mubr.f32.mxu0 0.0
    %111 = vmatmul.mubr.f32.gmra.mrb[0].mxu0 %v39
    %v112 = vpop.f32.mrb[0].mxu0
    %v113 = vadd.f32 %v33, %v112
    %v114 = vpop.f32.mrb[0].mxu0
    %115 = vdwg.mxu0
    %v116 = vmul.f32 %v108, 0.5
    %v117 = vmul.f32 %v113, 0.5
    %v118 = vmul.f32 %v108, 0.70710677
    %v119 = vmul.f32 %v113, 0.70710677
    %v120 = verf.f32.pop %v118
    %v121 = verf.f32.pop %v119
    %v122 = vadd.f32 %v120, 1.0
    %v123 = vadd.f32 %v121, 1.0
    %v124 = vmul.f32 %v116, %v122
    %v125 = vmul.f32 %v117, %v123
    %vm126 = vcmask 261120
    %v127 = vsel %vm126, %v124, 0.0
    %128 = vadd.xlane.f32.xlu0 %v127
    %v129 = vpop.xlane.xlu0 %128
    %v130 = vsel %vm126, %v125, 0.0
    %131 = vadd.xlane.f32.xlu0 %v130
    %v132 = vpop.xlane.xlu0 %131
    %v133 = vrcp.pop 32.0
    %v134 = vmul.f32 %v129, %v133
    %v135 = vmul.f32 %v132, %v133
    %v136 = vsub.f32 %v124, %v134
    %v137 = vsub.f32 %v125, %v135
    %v138 = vmul.f32 %v136, %v136
    %v139 = vmul.f32 %v137, %v137
    %v140 = vsel %vm126, %v138, 0.0
    %141 = vadd.xlane.f32.xlu0 %v140
    %v142 = vpop.xlane.xlu0 %141
    %v143 = vsel %vm126, %v139, 0.0
    %144 = vadd.xlane.f32.xlu0 %v143
    %v145 = vpop.xlane.xlu0 %144
    %v146 = vmul.f32 %v142, %v133
    %v147 = vmul.f32 %v145, %v133
    %v148 = vadd.f32 %v146, 1e-05
    %v149 = vadd.f32 %v147, 1e-05
    %v150 = vrsqrt.pop %v148
    %v151 = vrsqrt.pop %v149
    %v152 = vmul.f32 %v136, %v150
    %v153 = vmul.f32 %v137, %v151
    %v154 = vld [vmem:[%s5 + $0x1] sm:$0x1]
    %v155 = vlaneseq
    %v156 = vshrl.u32 %v155, 7
    %v157 = vsub.s32 0, %v156
    %v158 = vrot.slane %v154, %v157
    %v159 = vmul.f32 %v152, %v158
    %v160 = vmul.f32 %v153, %v158
    %v161 = vld [vmem:[%s5 + $0x2] sm:$0x1]
    %v162 = vlaneseq
    %v163 = vshrl.u32 %v162, 7
    %v164 = vsub.s32 0, %v163
    %v165 = vrot.slane %v161, %v164
    %v166 = vadd.f32 %v159, %v165
    %v167 = vadd.f32 %v160, %v165
    %v168 = vld [vmem:[%s3 + $0x18] sm:$0xff]
    %v169 = vld [vmem:[%s3 + $0x20] sm:$0xff]
    %v170 = vld [vmem:[%s3 + $0x28] sm:$0xff]
    %v171 = vld [vmem:[%s3 + $0x30] sm:$0xff]
    %v172 = vld [vmem:[%s5 + $0x3] sm:$0x1]
    %v173 = vlaneseq
    %v174 = vshrl.u32 %v173, 7
    %v175 = vsub.s32 0, %v174
    %v176 = vrot.slane %v172, %v175
    %v178 = vsel %vm126, %v166, 0
    %v181 = vsel %vm126, %v167, 0
    %183 = vmatprep.subr.mxu0 0.0
    %184 = vmatpush1.msra.mxu0 %v168
    %185 = vmatprep.subr.mxu0 0.0
    %186 = vmatpush1.msra.mxu0 %v169
    %187 = vmatprep.subr.mxu0 0.0
    %188 = vmatpush1.msra.mxu0 %v170
    %189 = vmatprep.subr.mxu0 0.0
    %190 = vmatpush1.msra.mxu0 %v171
    %191 = vmatprep.subr.mxu0 0.0
    %192 = vmatpush1.msra.mxu0 0.0
    %193 = vmatprep.subr.mxu0 0.0
    %194 = vmatpush1.msra.mxu0 0.0
    %195 = vmatprep.subr.mxu0 0.0
    %196 = vmatpush1.msra.mxu0 0.0
    %197 = vmatprep.subr.mxu0 0.0
    %198 = vmatpush1.msra.mxu0 0.0
    %199 = vmatprep.subr.mxu0 0.0
    %200 = vmatpush1.msra.mxu0 0.0
    %201 = vmatprep.subr.mxu0 0.0
    %202 = vmatpush1.msra.mxu0 0.0
    %203 = vmatprep.subr.mxu0 0.0
    %204 = vmatpush1.msra.mxu0 0.0
    %205 = vmatprep.subr.mxu0 0.0
    %206 = vmatpush1.msra.mxu0 0.0
    %207 = vmatprep.subr.mxu0 0.0
    %208 = vmatpush1.msra.mxu0 0.0
    %209 = vmatprep.subr.mxu0 0.0
    %210 = vmatpush1.msra.mxu0 0.0
    %211 = vmatprep.subr.mxu0 0.0
    %212 = vmatpush1.msra.mxu0 0.0
    %213 = vmatprep.subr.mxu0 0.0
    %214 = vmatpush1.msra.mxu0 0.0
    %215 = vmatprep.subr.mxu0 0.0
    %216 = vmatpush1.msra.mxu0 0.0
    %217 = vmatprep.subr.mxu0 0.0
    %218 = vmatpush1.msra.mxu0 0.0
    %219 = vmatprep.subr.mxu0 0.0
    %220 = vmatpush1.msra.mxu0 0.0
    %221 = vmatprep.subr.mxu0 0.0
    %222 = vmatpush1.msra.mxu0 0.0
    %223 = vmatprep.subr.mxu0 0.0
    %224 = vmatpush1.msra.mxu0 0.0
    %225 = vmatprep.subr.mxu0 0.0
    %226 = vmatpush1.msra.mxu0 0.0
    %227 = vmatprep.subr.mxu0 0.0
    %228 = vmatpush1.msra.mxu0 0.0
    %229 = vmatprep.subr.mxu0 0.0
    %230 = vmatpush1.msra.mxu0 0.0
    %231 = vmatprep.subr.mxu0 0.0
    %232 = vmatpush1.msra.mxu0 0.0
    %233 = vmatprep.subr.mxu0 0.0
    %234 = vmatpush1.msra.mxu0 0.0
    %235 = vmatprep.subr.mxu0 0.0
    %236 = vmatpush1.msra.mxu0 0.0
    %237 = vmatprep.subr.mxu0 0.0
    %238 = vmatpush1.msra.mxu0 0.0
    %239 = vmatprep.subr.mxu0 0.0
    %240 = vmatpush1.msra.mxu0 0.0
    %241 = vmatprep.subr.mxu0 0.0
    %242 = vmatpush1.msra.mxu0 0.0
    %243 = vmatprep.subr.mxu0 0.0
    %244 = vmatpush1.msra.mxu0 0.0
    %245 = vmatprep.subr.mxu0 0.0
    %246 = vmatpush1.msra.mxu0 0.0
    %247 = vmatprep.mubr.f32.mxu0 0.0
    %248 = vmatmul.mubr.f32.gmra.mrb[0].mxu0 %v178
    %v249 = vpop.f32.mrb[0].mxu0
    %v250 = vadd.f32 %v176, %v249
    %v251 = vpop.f32.mrb[0].mxu0
    %252 = vmatprep.mubr.f32.mxu0 0.0
    %253 = vmatmul.mubr.f32.gmra.mrb[0].mxu0 %v181
    %v254 = vpop.f32.mrb[0].mxu0
    %v255 = vadd.f32 %v176, %v254
    %v256 = vpop.f32.mrb[0].mxu0
    %257 = vdwg.mxu0
    %v258 = vld [vmem:[%s3 + $0x38] sm:$0xff]
    %v259 = vld [vmem:[%s3 + $0x40] sm:$0xff]
    %v260 = vld [vmem:[%s3 + $0x48] sm:$0xff]
    %v261 = vld [vmem:[%s3 + $0x50] sm:$0xff]
    %v262 = vld [vmem:[%s3 + $0x58] sm:$0xff]
    %v263 = vld [vmem:[%s3 + $0x60] sm:$0xff]
    %v264 = vld [vmem:[%s3 + $0x68] sm:$0xff]
    %v265 = vld [vmem:[%s3 + $0x70] sm:$0xff]
    %v266 = vld [vmem:[%s1] sm:$0xff]
    %v267 = vld [vmem:[%s1 + $0x8] sm:$0xff]
    %v268 = vld [vmem:[%s1 + $0x10] sm:$0xff]
    %v269 = vld [vmem:[%s1 + $0x18] sm:$0xff]
    %v270 = vld [vmem:[%s2] sm:$0xff]
    %v271 = vld [vmem:[%s2 + $0x8] sm:$0xff]
    %v272 = vld [vmem:[%s2 + $0x10] sm:$0xff]
    %v273 = vld [vmem:[%s2 + $0x18] sm:$0xff]
    %v274 = vld [vmem:[%s2 + $0x20] sm:$0xff]
    %v275 = vld [vmem:[%s2 + $0x28] sm:$0xff]
    %v276 = vld [vmem:[%s2 + $0x30] sm:$0xff]
    %v277 = vld [vmem:[%s2 + $0x38] sm:$0xff]
    %279 = vset.pattern.permute.xlu0 0
    %280 = vperm.xlu0 %279, %v262
    %v281 = vpop.permute.xlu0 %280
    %284 = vset.pattern.permute.xlu0 0
    %285 = vperm.xlu0 %284, %v263
    %v286 = vpop.permute.xlu0 %285
    %289 = vset.pattern.permute.xlu0 0
    %290 = vperm.xlu0 %289, %v264
    %v291 = vpop.permute.xlu0 %290
    %294 = vset.pattern.permute.xlu0 0
    %295 = vperm.xlu0 %294, %v265
    %v296 = vpop.permute.xlu0 %295
    %v299 = vsel %vm126, %v258, 0
    %v302 = vsel %vm126, %v259, 0
    %v305 = vsel %vm126, %v260, 0
    %v308 = vsel %vm126, %v261, 0
    %310 = vmatprep.subr.mxu0 0.0
    %311 = vmatpush1.msra.mxu0 %v266
    %312 = vmatprep.subr.mxu0 0.0
    %313 = vmatpush1.msra.mxu0 %v267
    %314 = vmatprep.subr.mxu0 0.0
    %315 = vmatpush1.msra.mxu0 %v268
    %316 = vmatprep.subr.mxu0 0.0
    %317 = vmatpush1.msra.mxu0 %v269
    %318 = vmatprep.subr.mxu0 0.0
    %319 = vmatpush1.msra.mxu0 0.0
    %320 = vmatprep.subr.mxu0 0.0
    %321 = vmatpush1.msra.mxu0 0.0
    %322 = vmatprep.subr.mxu0 0.0
    %323 = vmatpush1.msra.mxu0 0.0
    %324 = vmatprep.subr.mxu0 0.0
    %325 = vmatpush1.msra.mxu0 0.0
    %326 = vmatprep.subr.mxu0 0.0
    %327 = vmatpush1.msra.mxu0 0.0
    %328 = vmatprep.subr.mxu0 0.0
    %329 = vmatpush1.msra.mxu0 0.0
    %330 = vmatprep.subr.mxu0 0.0
    %331 = vmatpush1.msra.mxu0 0.0
    %332 = vmatprep.subr.mxu0 0.0
    %333 = vmatpush1.msra.mxu0 0.0
    %334 = vmatprep.subr.mxu0 0.0
    %335 = vmatpush1.msra.mxu0 0.0
    %336 = vmatprep.subr.mxu0 0.0
    %337 = vmatpush1.msra.mxu0 0.0
    %338 = vmatprep.subr.mxu0 0.0
    %339 = vmatpush1.msra.mxu0 0.0
    %340 = vmatprep.subr.mxu0 0.0
    %341 = vmatpush1.msra.mxu0 0.0
    %342 = vmatprep.subr.mxu0 0.0
    %343 = vmatpush1.msra.mxu0 0.0
    %344 = vmatprep.subr.mxu0 0.0
    %345 = vmatpush1.msra.mxu0 0.0
    %346 = vmatprep.subr.mxu0 0.0
    %347 = vmatpush1.msra.mxu0 0.0
    %348 = vmatprep.subr.mxu0 0.0
    %349 = vmatpush1.msra.mxu0 0.0
    %350 = vmatprep.subr.mxu0 0.0
    %351 = vmatpush1.msra.mxu0 0.0
    %352 = vmatprep.subr.mxu0 0.0
    %353 = vmatpush1.msra.mxu0 0.0
    %354 = vmatprep.subr.mxu0 0.0
    %355 = vmatpush1.msra.mxu0 0.0
    %356 = vmatprep.subr.mxu0 0.0
    %357 = vmatpush1.msra.mxu0 0.0
    %358 = vmatprep.subr.mxu0 0.0
    %359 = vmatpush1.msra.mxu0 0.0
    %360 = vmatprep.subr.mxu0 0.0
    %361 = vmatpush1.msra.mxu0 0.0
    %362 = vmatprep.subr.mxu0 0.0
    %363 = vmatpush1.msra.mxu0 0.0
    %364 = vmatprep.subr.mxu0 0.0
    %365 = vmatpush1.msra.mxu0 0.0
    %366 = vmatprep.subr.mxu0 0.0
    %367 = vmatpush1.msra.mxu0 0.0
    %368 = vmatprep.subr.mxu0 0.0
    %369 = vmatpush1.msra.mxu0 0.0
    %370 = vmatprep.subr.mxu0 0.0
    %371 = vmatpush1.msra.mxu0 0.0
    %372 = vmatprep.subr.mxu0 0.0
    %373 = vmatpush1.msra.mxu0 0.0
    %374 = vmatprep.mubr.f32.mxu0 0.0
    %375 = vmatmul.mubr.f32.gmra.mrb[0].mxu0 %v299
    %v376 = vpop.f32.mrb[0].mxu0
    %v377 = vadd.f32 %v281, %v376
    %v378 = vpop.f32.mrb[0].mxu0
    %379 = vmatprep.mubr.f32.mxu0 0.0
    %380 = vmatmul.mubr.f32.gmra.mrb[0].mxu0 %v302
    %v381 = vpop.f32.mrb[0].mxu0
    %v382 = vadd.f32 %v286, %v381
    %v383 = vpop.f32.mrb[0].mxu0
    %384 = vmatprep.mubr.f32.mxu0 0.0
    %385 = vmatmul.mubr.f32.gmra.mrb[0].mxu0 %v305
    %v386 = vpop.f32.mrb[0].mxu0
    %v387 = vadd.f32 %v291, %v386
    %v388 = vpop.f32.mrb[0].mxu0
    %389 = vmatprep.mubr.f32.mxu0 0.0
    %390 = vmatmul.mubr.f32.gmra.mrb[0].mxu0 %v308
    %v391 = vpop.f32.mrb[0].mxu0
    %v392 = vadd.f32 %v296, %v391
    %v393 = vpop.f32.mrb[0].mxu0
    %394 = vdwg.mxu0
    %vm395 = vcmask 64512
    %v397 = vsel %vm395, %v250, 0
    %399 = vmatprep.subr.mxu0 0.0
    %400 = vmatpush1.msra.mxu0 %v377
    %401 = vmatprep.subr.mxu0 0.0
    %402 = vmatpush1.msra.mxu0 0.0
    %403 = vmatprep.subr.mxu0 0.0
    %404 = vmatpush1.msra.mxu0 0.0
    %405 = vmatprep.subr.mxu0 0.0
    %406 = vmatpush1.msra.mxu0 0.0
    %407 = vmatprep.subr.mxu0 0.0
    %408 = vmatpush1.msra.mxu0 0.0
    %409 = vmatprep.subr.mxu0 0.0
    %410 = vmatpush1.msra.mxu0 0.0
    %411 = vmatprep.subr.mxu0 0.0
    %412 = vmatpush1.msra.mxu0 0.0
    %413 = vmatprep.subr.mxu0 0.0
    %414 = vmatpush1.msra.mxu0 0.0
    %415 = vmatprep.subr.mxu0 0.0
    %416 = vmatpush1.msra.mxu0 0.0
    %417 = vmatprep.subr.mxu0 0.0
    %418 = vmatpush1.msra.mxu0 0.0
    %419 = vmatprep.subr.mxu0 0.0
    %420 = vmatpush1.msra.mxu0 0.0
    %421 = vmatprep.subr.mxu0 0.0
    %422 = vmatpush1.msra.mxu0 0.0
    %423 = vmatprep.subr.mxu0 0.0
    %424 = vmatpush1.msra.mxu0 0.0
    %425 = vmatprep.subr.mxu0 0.0
    %426 = vmatpush1.msra.mxu0 0.0
    %427 = vmatprep.subr.mxu0 0.0
    %428 = vmatpush1.msra.mxu0 0.0
    %429 = vmatprep.subr.mxu0 0.0
    %430 = vmatpush1.msra.mxu0 0.0
    %431 = vmatprep.subr.mxu0 0.0
    %432 = vmatpush1.msra.mxu0 0.0
    %433 = vmatprep.subr.mxu0 0.0
    %434 = vmatpush1.msra.mxu0 0.0
    %435 = vmatprep.subr.mxu0 0.0
    %436 = vmatpush1.msra.mxu0 0.0
    %437 = vmatprep.subr.mxu0 0.0
    %438 = vmatpush1.msra.mxu0 0.0
    %439 = vmatprep.subr.mxu0 0.0
    %440 = vmatpush1.msra.mxu0 0.0
    %441 = vmatprep.subr.mxu0 0.0
    %442 = vmatpush1.msra.mxu0 0.0
    %443 = vmatprep.subr.mxu0 0.0
    %444 = vmatpush1.msra.mxu0 0.0
    %445 = vmatprep.subr.mxu0 0.0
    %446 = vmatpush1.msra.mxu0 0.0
    %447 = vmatprep.subr.mxu0 0.0
    %448 = vmatpush1.msra.mxu0 0.0
    %449 = vmatprep.subr.mxu0 0.0
    %450 = vmatpush1.msra.mxu0 0.0
    %451 = vmatprep.subr.mxu0 0.0
    %452 = vmatpush1.msra.mxu0 0.0
    %453 = vmatprep.subr.mxu0 0.0
    %454 = vmatpush1.msra.mxu0 0.0
    %455 = vmatprep.subr.mxu0 0.0
    %456 = vmatpush1.msra.mxu0 0.0
    %457 = vmatprep.subr.mxu0 0.0
    %458 = vmatpush1.msra.mxu0 0.0
    %459 = vmatprep.subr.mxu0 0.0
    %460 = vmatpush1.msra.mxu0 0.0
    %461 = vmatprep.subr.mxu0 0.0
    %462 = vmatpush1.msra.mxu0 0.0
    %463 = vmatprep.mubr.f32.mxu0 0.0
    %464 = vmatmul.mubr.f32.gmra.mrb[0].mxu0 %v397
    %v465 = vpop.f32.mrb[0].mxu0
    %v466 = vadd.f32 0.0, %v465
    %v467 = vpop.f32.mrb[0].mxu0
    %468 = vdwg.mxu0
    %vm469 = vcmask 523264
    %v470 = vsel %vm469, %v466, -inf
    %471 = vmax.xlane.f32.xlu0 %v470
    %v472 = vpop.xlane.xlu0 %471
    %v473 = vsub.f32 %v466, %v472
    %v474 = vmul.f32 %v473, 1.442695
    %v475 = vpow.pop %v474
    %v476 = vsel %vm469, %v475, 0.0
    %477 = vadd.xlane.f32.xlu0 %v476
    %v478 = vpop.xlane.xlu0 %477
    %v479 = vrcp.pop %v478
    %v480 = vmul.f32 %v475, %v479
    %v482 = vsel %vm469, %v480, 0
    %484 = vmatprep.subr.mxu0 0.0
    %485 = vmatpush1.msra.mxu0 %v270
    %486 = vmatprep.subr.mxu0 0.0
    %487 = vmatpush1.msra.mxu0 %v271
    %488 = vmatprep.subr.mxu0 0.0
    %489 = vmatpush1.msra.mxu0 %v272
    %490 = vmatprep.subr.mxu0 0.0
    %491 = vmatpush1.msra.mxu0 %v273
    %492 = vmatprep.subr.mxu0 0.0
    %493 = vmatpush1.msra.mxu0 %v274
    %494 = vmatprep.subr.mxu0 0.0
    %495 = vmatpush1.msra.mxu0 %v275
    %496 = vmatprep.subr.mxu0 0.0
    %497 = vmatpush1.msra.mxu0 %v276
    %498 = vmatprep.subr.mxu0 0.0
    %499 = vmatpush1.msra.mxu0 %v277
    %500 = vmatprep.subr.mxu0 0.0
    %501 = vmatpush1.msra.mxu0 0.0
    %502 = vmatprep.subr.mxu0 0.0
    %503 = vmatpush1.msra.mxu0 0.0
    %504 = vmatprep.subr.mxu0 0.0
    %505 = vmatpush1.msra.mxu0 0.0
    %506 = vmatprep.subr.mxu0 0.0
    %507 = vmatpush1.msra.mxu0 0.0
    %508 = vmatprep.subr.mxu0 0.0
    %509 = vmatpush1.msra.mxu0 0.0
    %510 = vmatprep.subr.mxu0 0.0
    %511 = vmatpush1.msra.mxu0 0.0
    %512 = vmatprep.subr.mxu0 0.0
    %513 = vmatpush1.msra.mxu0 0.0
    %514 = vmatprep.subr.mxu0 0.0
    %515 = vmatpush1.msra.mxu0 0.0
    %516 = vmatprep.subr.mxu0 0.0
    %517 = vmatpush1.msra.mxu0 0.0
    %518 = vmatprep.subr.mxu0 0.0
    %519 = vmatpush1.msra.mxu0 0.0
    %520 = vmatprep.subr.mxu0 0.0
    %521 = vmatpush1.msra.mxu0 0.0
    %522 = vmatprep.subr.mxu0 0.0
    %523 = vmatpush1.msra.mxu0 0.0
    %524 = vmatprep.subr.mxu0 0.0
    %525 = vmatpush1.msra.mxu0 0.0
    %526 = vmatprep.subr.mxu0 0.0
    %527 = vmatpush1.msra.mxu0 0.0
    %528 = vmatprep.subr.mxu0 0.0
    %529 = vmatpush1.msra.mxu0 0.0
    %530 = vmatprep.subr.mxu0 0.0
    %531 = vmatpush1.msra.mxu0 0.0
    %532 = vmatprep.subr.mxu0 0.0
    %533 = vmatpush1.msra.mxu0 0.0
    %534 = vmatprep.subr.mxu0 0.0
    %535 = vmatpush1.msra.mxu0 0.0
    %536 = vmatprep.subr.mxu0 0.0
    %537 = vmatpush1.msra.mxu0 0.0
    %538 = vmatprep.subr.mxu0 0.0
    %539 = vmatpush1.msra.mxu0 0.0
    %540 = vmatprep.subr.mxu0 0.0
    %541 = vmatpush1.msra.mxu0 0.0
    %542 = vmatprep.subr.mxu0 0.0
    %543 = vmatpush1.msra.mxu0 0.0
    %544 = vmatprep.subr.mxu0 0.0
    %545 = vmatpush1.msra.mxu0 0.0
    %546 = vmatprep.subr.mxu0 0.0
    %547 = vmatpush1.msra.mxu0 0.0
    %548 = vmatprep.mubr.f32.mxu0 0.0
    %549 = vmatmul.mubr.f32.gmra.mrb[0].mxu0 %v482
    %v550 = vpop.f32.mrb[0].mxu0
    %v551 = vadd.f32 0.0, %v550
    %v552 = vpop.f32.mrb[0].mxu0
    %553 = vdwg.mxu0
    %554 = vrot.lane.b32.xlu0 %v250, 120
    %v555 = vpop.permute.xlu0 %554
    %v556 = vsel %vm395, %v555, 0
    %558 = vmatprep.subr.mxu0 0.0
    %559 = vmatpush1.msra.mxu0 %v382
    %560 = vmatprep.subr.mxu0 0.0
    %561 = vmatpush1.msra.mxu0 0.0
    %562 = vmatprep.subr.mxu0 0.0
    %563 = vmatpush1.msra.mxu0 0.0
    %564 = vmatprep.subr.mxu0 0.0
    %565 = vmatpush1.msra.mxu0 0.0
    %566 = vmatprep.subr.mxu0 0.0
    %567 = vmatpush1.msra.mxu0 0.0
    %568 = vmatprep.subr.mxu0 0.0
    %569 = vmatpush1.msra.mxu0 0.0
    %570 = vmatprep.subr.mxu0 0.0
    %571 = vmatpush1.msra.mxu0 0.0
    %572 = vmatprep.subr.mxu0 0.0
    %573 = vmatpush1.msra.mxu0 0.0
    %574 = vmatprep.subr.mxu0 0.0
    %575 = vmatpush1.msra.mxu0 0.0
    %576 = vmatprep.subr.mxu0 0.0
    %577 = vmatpush1.msra.mxu0 0.0
    %578 = vmatprep.subr.mxu0 0.0
    %579 = vmatpush1.msra.mxu0 0.0
    %580 = vmatprep.subr.mxu0 0.0
    %581 = vmatpush1.msra.mxu0 0.0
    %582 = vmatprep.subr.mxu0 0.0
    %583 = vmatpush1.msra.mxu0 0.0
    %584 = vmatprep.subr.mxu0 0.0
    %585 = vmatpush1.msra.mxu0 0.0
    %586 = vmatprep.subr.mxu0 0.0
    %587 = vmatpush1.msra.mxu0 0.0
    %588 = vmatprep.subr.mxu0 0.0
    %589 = vmatpush1.msra.mxu0 0.0
    %590 = vmatprep.subr.mxu0 0.0
    %591 = vmatpush1.msra.mxu0 0.0
    %592 = vmatprep.subr.mxu0 0.0
    %593 = vmatpush1.msra.mxu0 0.0
    %594 = vmatprep.subr.mxu0 0.0
    %595 = vmatpush1.msra.mxu0 0.0
    %596 = vmatprep.subr.mxu0 0.0
    %597 = vmatpush1.msra.mxu0 0.0
    %598 = vmatprep.subr.mxu0 0.0
    %599 = vmatpush1.msra.mxu0 0.0
    %600 = vmatprep.subr.mxu0 0.0
    %601 = vmatpush1.msra.mxu0 0.0
    %602 = vmatprep.subr.mxu0 0.0
    %603 = vmatpush1.msra.mxu0 0.0
    %604 = vmatprep.subr.mxu0 0.0
    %605 = vmatpush1.msra.mxu0 0.0
    %606 = vmatprep.subr.mxu0 0.0
    %607 = vmatpush1.msra.mxu0 0.0
    %608 = vmatprep.subr.mxu0 0.0
    %609 = vmatpush1.msra.mxu0 0.0
    %610 = vmatprep.subr.mxu0 0.0
    %611 = vmatpush1.msra.mxu0 0.0
    %612 = vmatprep.subr.mxu0 0.0
    %613 = vmatpush1.msra.mxu0 0.0
    %614 = vmatprep.subr.mxu0 0.0
    %615 = vmatpush1.msra.mxu0 0.0
    %616 = vmatprep.subr.mxu0 0.0
    %617 = vmatpush1.msra.mxu0 0.0
    %618 = vmatprep.subr.mxu0 0.0
    %619 = vmatpush1.msra.mxu0 0.0
    %620 = vmatprep.subr.mxu0 0.0
    %621 = vmatpush1.msra.mxu0 0.0
    %622 = vmatprep.mubr.f32.mxu0 0.0
    %623 = vmatmul.mubr.f32.gmra.mrb[0].mxu0 %v556
    %v624 = vpop.f32.mrb[0].mxu0
    %v625 = vadd.f32 0.0, %v624
    %v626 = vpop.f32.mrb[0].mxu0
    %627 = vdwg.mxu0
    %v628 = vsel %vm469, %v625, -inf
    %629 = vmax.xlane.f32.xlu0 %v628
    %v630 = vpop.xlane.xlu0 %629
    %v631 = vsub.f32 %v625, %v630
    %v632 = vmul.f32 %v631, 1.442695
    %v633 = vpow.pop %v632
    %v634 = vsel %vm469, %v633, 0.0
    %635 = vadd.xlane.f32.xlu0 %v634
    %v636 = vpop.xlane.xlu0 %635
    %v637 = vrcp.pop %v636
    %v638 = vmul.f32 %v633, %v637
    %v640 = vsel %vm469, %v638, 0
    %642 = vmatprep.subr.mxu0 0.0
    %643 = vmatpush1.msra.mxu0 %v270
    %644 = vmatprep.subr.mxu0 0.0
    %645 = vmatpush1.msra.mxu0 %v271
    %646 = vmatprep.subr.mxu0 0.0
    %647 = vmatpush1.msra.mxu0 %v272
    %648 = vmatprep.subr.mxu0 0.0
    %649 = vmatpush1.msra.mxu0 %v273
    %650 = vmatprep.subr.mxu0 0.0
    %651 = vmatpush1.msra.mxu0 %v274
    %652 = vmatprep.subr.mxu0 0.0
    %653 = vmatpush1.msra.mxu0 %v275
    %654 = vmatprep.subr.mxu0 0.0
    %655 = vmatpush1.msra.mxu0 %v276
    %656 = vmatprep.subr.mxu0 0.0
    %657 = vmatpush1.msra.mxu0 %v277
    %658 = vmatprep.subr.mxu0 0.0
    %659 = vmatpush1.msra.mxu0 0.0
    %660 = vmatprep.subr.mxu0 0.0
    %661 = vmatpush1.msra.mxu0 0.0
    %662 = vmatprep.subr.mxu0 0.0
    %663 = vmatpush1.msra.mxu0 0.0
    %664 = vmatprep.subr.mxu0 0.0
    %665 = vmatpush1.msra.mxu0 0.0
    %666 = vmatprep.subr.mxu0 0.0
    %667 = vmatpush1.msra.mxu0 0.0
    %668 = vmatprep.subr.mxu0 0.0
    %669 = vmatpush1.msra.mxu0 0.0
    %670 = vmatprep.subr.mxu0 0.0
    %671 = vmatpush1.msra.mxu0 0.0
    %672 = vmatprep.subr.mxu0 0.0
    %673 = vmatpush1.msra.mxu0 0.0
    %674 = vmatprep.subr.mxu0 0.0
    %675 = vmatpush1.msra.mxu0 0.0
    %676 = vmatprep.subr.mxu0 0.0
    %677 = vmatpush1.msra.mxu0 0.0
    %678 = vmatprep.subr.mxu0 0.0
    %679 = vmatpush1.msra.mxu0 0.0
    %680 = vmatprep.subr.mxu0 0.0
    %681 = vmatpush1.msra.mxu0 0.0
    %682 = vmatprep.subr.mxu0 0.0
    %683 = vmatpush1.msra.mxu0 0.0
    %684 = vmatprep.subr.mxu0 0.0
    %685 = vmatpush1.msra.mxu0 0.0
    %686 = vmatprep.subr.mxu0 0.0
    %687 = vmatpush1.msra.mxu0 0.0
    %688 = vmatprep.subr.mxu0 0.0
    %689 = vmatpush1.msra.mxu0 0.0
    %690 = vmatprep.subr.mxu0 0.0
    %691 = vmatpush1.msra.mxu0 0.0
    %692 = vmatprep.subr.mxu0 0.0
    %693 = vmatpush1.msra.mxu0 0.0
    %694 = vmatprep.subr.mxu0 0.0
    %695 = vmatpush1.msra.mxu0 0.0
    %696 = vmatprep.subr.mxu0 0.0
    %697 = vmatpush1.msra.mxu0 0.0
    %698 = vmatprep.subr.mxu0 0.0
    %699 = vmatpush1.msra.mxu0 0.0
    %700 = vmatprep.subr.mxu0 0.0
    %701 = vmatpush1.msra.mxu0 0.0
    %702 = vmatprep.subr.mxu0 0.0
    %703 = vmatpush1.msra.mxu0 0.0
    %704 = vmatprep.subr.mxu0 0.0
    %705 = vmatpush1.msra.mxu0 0.0
    %706 = vmatprep.mubr.f32.mxu0 0.0
    %707 = vmatmul.mubr.f32.gmra.mrb[0].mxu0 %v640
    %v708 = vpop.f32.mrb[0].mxu0
    %v709 = vadd.f32 0.0, %v708
    %v710 = vpop.f32.mrb[0].mxu0
    %711 = vdwg.mxu0
    %712 = vrot.lane.b32.xlu0 %v250, 112
    %v713 = vpop.permute.xlu0 %712
    %v714 = vsel %vm395, %v713, 0
    %716 = vmatprep.subr.mxu0 0.0
    %717 = vmatpush1.msra.mxu0 %v387
    %718 = vmatprep.subr.mxu0 0.0
    %719 = vmatpush1.msra.mxu0 0.0
    %720 = vmatprep.subr.mxu0 0.0
    %721 = vmatpush1.msra.mxu0 0.0
    %722 = vmatprep.subr.mxu0 0.0
    %723 = vmatpush1.msra.mxu0 0.0
    %724 = vmatprep.subr.mxu0 0.0
    %725 = vmatpush1.msra.mxu0 0.0
    %726 = vmatprep.subr.mxu0 0.0
    %727 = vmatpush1.msra.mxu0 0.0
    %728 = vmatprep.subr.mxu0 0.0
    %729 = vmatpush1.msra.mxu0 0.0
    %730 = vmatprep.subr.mxu0 0.0
    %731 = vmatpush1.msra.mxu0 0.0
    %732 = vmatprep.subr.mxu0 0.0
    %733 = vmatpush1.msra.mxu0 0.0
    %734 = vmatprep.subr.mxu0 0.0
    %735 = vmatpush1.msra.mxu0 0.0
    %736 = vmatprep.subr.mxu0 0.0
    %737 = vmatpush1.msra.mxu0 0.0
    %738 = vmatprep.subr.mxu0 0.0
    %739 = vmatpush1.msra.mxu0 0.0
    %740 = vmatprep.subr.mxu0 0.0
    %741 = vmatpush1.msra.mxu0 0.0
    %742 = vmatprep.subr.mxu0 0.0
    %743 = vmatpush1.msra.mxu0 0.0
    %744 = vmatprep.subr.mxu0 0.0
    %745 = vmatpush1.msra.mxu0 0.0
    %746 = vmatprep.subr.mxu0 0.0
    %747 = vmatpush1.msra.mxu0 0.0
    %748 = vmatprep.subr.mxu0 0.0
    %749 = vmatpush1.msra.mxu0 0.0
    %750 = vmatprep.subr.mxu0 0.0
    %751 = vmatpush1.msra.mxu0 0.0
    %752 = vmatprep.subr.mxu0 0.0
    %753 = vmatpush1.msra.mxu0 0.0
    %754 = vmatprep.subr.mxu0 0.0
    %755 = vmatpush1.msra.mxu0 0.0
    %756 = vmatprep.subr.mxu0 0.0
    %757 = vmatpush1.msra.mxu0 0.0
    %758 = vmatprep.subr.mxu0 0.0
    %759 = vmatpush1.msra.mxu0 0.0
    %760 = vmatprep.subr.mxu0 0.0
    %761 = vmatpush1.msra.mxu0 0.0
    %762 = vmatprep.subr.mxu0 0.0
    %763 = vmatpush1.msra.mxu0 0.0
    %764 = vmatprep.subr.mxu0 0.0
    %765 = vmatpush1.msra.mxu0 0.0
    %766 = vmatprep.subr.mxu0 0.0
    %767 = vmatpush1.msra.mxu0 0.0
    %768 = vmatprep.subr.mxu0 0.0
    %769 = vmatpush1.msra.mxu0 0.0
    %770 = vmatprep.subr.mxu0 0.0
    %771 = vmatpush1.msra.mxu0 0.0
    %772 = vmatprep.subr.mxu0 0.0
    %773 = vmatpush1.msra.mxu0 0.0
    %774 = vmatprep.subr.mxu0 0.0
    %775 = vmatpush1.msra.mxu0 0.0
    %776 = vmatprep.subr.mxu0 0.0
    %777 = vmatpush1.msra.mxu0 0.0
    %778 = vmatprep.subr.mxu0 0.0
    %779 = vmatpush1.msra.mxu0 0.0
    %780 = vmatprep.mubr.f32.mxu0 0.0
    %781 = vmatmul.mubr.f32.gmra.mrb[0].mxu0 %v714
    %v782 = vpop.f32.mrb[0].mxu0
    %v783 = vadd.f32 0.0, %v782
    %v784 = vpop.f32.mrb[0].mxu0
    %785 = vdwg.mxu0
    %v786 = vsel %vm469, %v783, -inf
    %787 = vmax.xlane.f32.xlu0 %v786
    %v788 = vpop.xlane.xlu0 %787
    %v789 = vsub.f32 %v783, %v788
    %v790 = vmul.f32 %v789, 1.442695
    %v791 = vpow.pop %v790
    %v792 = vsel %vm469, %v791, 0.0
    %793 = vadd.xlane.f32.xlu0 %v792
    %v794 = vpop.xlane.xlu0 %793
    %v795 = vrcp.pop %v794
    %v796 = vmul.f32 %v791, %v795
    %v798 = vsel %vm469, %v796, 0
    %800 = vmatprep.subr.mxu0 0.0
    %801 = vmatpush1.msra.mxu0 %v270
    %802 = vmatprep.subr.mxu0 0.0
    %803 = vmatpush1.msra.mxu0 %v271
    %804 = vmatprep.subr.mxu0 0.0
    %805 = vmatpush1.msra.mxu0 %v272
    %806 = vmatprep.subr.mxu0 0.0
    %807 = vmatpush1.msra.mxu0 %v273
    %808 = vmatprep.subr.mxu0 0.0
    %809 = vmatpush1.msra.mxu0 %v274
    %810 = vmatprep.subr.mxu0 0.0
    %811 = vmatpush1.msra.mxu0 %v275
    %812 = vmatprep.subr.mxu0 0.0
    %813 = vmatpush1.msra.mxu0 %v276
    %814 = vmatprep.subr.mxu0 0.0
    %815 = vmatpush1.msra.mxu0 %v277
    %816 = vmatprep.subr.mxu0 0.0
    %817 = vmatpush1.msra.mxu0 0.0
    %818 = vmatprep.subr.mxu0 0.0
    %819 = vmatpush1.msra.mxu0 0.0
    %820 = vmatprep.subr.mxu0 0.0
    %821 = vmatpush1.msra.mxu0 0.0
    %822 = vmatprep.subr.mxu0 0.0
    %823 = vmatpush1.msra.mxu0 0.0
    %824 = vmatprep.subr.mxu0 0.0
    %825 = vmatpush1.msra.mxu0 0.0
    %826 = vmatprep.subr.mxu0 0.0
    %827 = vmatpush1.msra.mxu0 0.0
    %828 = vmatprep.subr.mxu0 0.0
    %829 = vmatpush1.msra.mxu0 0.0
    %830 = vmatprep.subr.mxu0 0.0
    %831 = vmatpush1.msra.mxu0 0.0
    %832 = vmatprep.subr.mxu0 0.0
    %833 = vmatpush1.msra.mxu0 0.0
    %834 = vmatprep.subr.mxu0 0.0
    %835 = vmatpush1.msra.mxu0 0.0
    %836 = vmatprep.subr.mxu0 0.0
    %837 = vmatpush1.msra.mxu0 0.0
    %838 = vmatprep.subr.mxu0 0.0
    %839 = vmatpush1.msra.mxu0 0.0
    %840 = vmatprep.subr.mxu0 0.0
    %841 = vmatpush1.msra.mxu0 0.0
    %842 = vmatprep.subr.mxu0 0.0
    %843 = vmatpush1.msra.mxu0 0.0
    %844 = vmatprep.subr.mxu0 0.0
    %845 = vmatpush1.msra.mxu0 0.0
    %846 = vmatprep.subr.mxu0 0.0
    %847 = vmatpush1.msra.mxu0 0.0
    %848 = vmatprep.subr.mxu0 0.0
    %849 = vmatpush1.msra.mxu0 0.0
    %850 = vmatprep.subr.mxu0 0.0
    %851 = vmatpush1.msra.mxu0 0.0
    %852 = vmatprep.subr.mxu0 0.0
    %853 = vmatpush1.msra.mxu0 0.0
    %854 = vmatprep.subr.mxu0 0.0
    %855 = vmatpush1.msra.mxu0 0.0
    %856 = vmatprep.subr.mxu0 0.0
    %857 = vmatpush1.msra.mxu0 0.0
    %858 = vmatprep.subr.mxu0 0.0
    %859 = vmatpush1.msra.mxu0 0.0
    %860 = vmatprep.subr.mxu0 0.0
    %861 = vmatpush1.msra.mxu0 0.0
    %862 = vmatprep.subr.mxu0 0.0
    %863 = vmatpush1.msra.mxu0 0.0
    %864 = vmatprep.mubr.f32.mxu0 0.0
    %865 = vmatmul.mubr.f32.gmra.mrb[0].mxu0 %v798
    %v866 = vpop.f32.mrb[0].mxu0
    %v867 = vadd.f32 0.0, %v866
    %v868 = vpop.f32.mrb[0].mxu0
    %869 = vdwg.mxu0
    %870 = vrot.lane.b32.xlu0 %v250, 104
    %v871 = vpop.permute.xlu0 %870
    %v872 = vsel %vm395, %v871, 0
    %874 = vmatprep.subr.mxu0 0.0
    %875 = vmatpush1.msra.mxu0 %v392
    %876 = vmatprep.subr.mxu0 0.0
    %877 = vmatpush1.msra.mxu0 0.0
    %878 = vmatprep.subr.mxu0 0.0
    %879 = vmatpush1.msra.mxu0 0.0
    %880 = vmatprep.subr.mxu0 0.0
    %881 = vmatpush1.msra.mxu0 0.0
    %882 = vmatprep.subr.mxu0 0.0
    %883 = vmatpush1.msra.mxu0 0.0
    %884 = vmatprep.subr.mxu0 0.0
    %885 = vmatpush1.msra.mxu0 0.0
    %886 = vmatprep.subr.mxu0 0.0
    %887 = vmatpush1.msra.mxu0 0.0
    %888 = vmatprep.subr.mxu0 0.0
    %889 = vmatpush1.msra.mxu0 0.0
    %890 = vmatprep.subr.mxu0 0.0
    %891 = vmatpush1.msra.mxu0 0.0
    %892 = vmatprep.subr.mxu0 0.0
    %893 = vmatpush1.msra.mxu0 0.0
    %894 = vmatprep.subr.mxu0 0.0
    %895 = vmatpush1.msra.mxu0 0.0
    %896 = vmatprep.subr.mxu0 0.0
    %897 = vmatpush1.msra.mxu0 0.0
    %898 = vmatprep.subr.mxu0 0.0
    %899 = vmatpush1.msra.mxu0 0.0
    %900 = vmatprep.subr.mxu0 0.0
    %901 = vmatpush1.msra.mxu0 0.0
    %902 = vmatprep.subr.mxu0 0.0
    %903 = vmatpush1.msra.mxu0 0.0
    %904 = vmatprep.subr.mxu0 0.0
    %905 = vmatpush1.msra.mxu0 0.0
    %906 = vmatprep.subr.mxu0 0.0
    %907 = vmatpush1.msra.mxu0 0.0
    %908 = vmatprep.subr.mxu0 0.0
    %909 = vmatpush1.msra.mxu0 0.0
    %910 = vmatprep.subr.mxu0 0.0
    %911 = vmatpush1.msra.mxu0 0.0
    %912 = vmatprep.subr.mxu0 0.0
    %913 = vmatpush1.msra.mxu0 0.0
    %914 = vmatprep.subr.mxu0 0.0
    %915 = vmatpush1.msra.mxu0 0.0
    %916 = vmatprep.subr.mxu0 0.0
    %917 = vmatpush1.msra.mxu0 0.0
    %918 = vmatprep.subr.mxu0 0.0
    %919 = vmatpush1.msra.mxu0 0.0
    %920 = vmatprep.subr.mxu0 0.0
    %921 = vmatpush1.msra.mxu0 0.0
    %922 = vmatprep.subr.mxu0 0.0
    %923 = vmatpush1.msra.mxu0 0.0
    %924 = vmatprep.subr.mxu0 0.0
    %925 = vmatpush1.msra.mxu0 0.0
    %926 = vmatprep.subr.mxu0 0.0
    %927 = vmatpush1.msra.mxu0 0.0
    %928 = vmatprep.subr.mxu0 0.0
    %929 = vmatpush1.msra.mxu0 0.0
    %930 = vmatprep.subr.mxu0 0.0
    %931 = vmatpush1.msra.mxu0 0.0
    %932 = vmatprep.subr.mxu0 0.0
    %933 = vmatpush1.msra.mxu0 0.0
    %934 = vmatprep.subr.mxu0 0.0
    %935 = vmatpush1.msra.mxu0 0.0
    %936 = vmatprep.subr.mxu0 0.0
    %937 = vmatpush1.msra.mxu0 0.0
    %938 = vmatprep.mubr.f32.mxu0 0.0
    %939 = vmatmul.mubr.f32.gmra.mrb[0].mxu0 %v872
    %v940 = vpop.f32.mrb[0].mxu0
    %v941 = vadd.f32 0.0, %v940
    %v942 = vpop.f32.mrb[0].mxu0
    %943 = vdwg.mxu0
    %v944 = vsel %vm469, %v941, -inf
    %945 = vmax.xlane.f32.xlu0 %v944
    %v946 = vpop.xlane.xlu0 %945
    %v947 = vsub.f32 %v941, %v946
    %v948 = vmul.f32 %v947, 1.442695
    %v949 = vpow.pop %v948
    %v950 = vsel %vm469, %v949, 0.0
    %951 = vadd.xlane.f32.xlu0 %v950
    %v952 = vpop.xlane.xlu0 %951
    %v953 = vrcp.pop %v952
    %v954 = vmul.f32 %v949, %v953
    %v956 = vsel %vm469, %v954, 0
    %958 = vmatprep.subr.mxu0 0.0
    %959 = vmatpush1.msra.mxu0 %v270
    %960 = vmatprep.subr.mxu0 0.0
    %961 = vmatpush1.msra.mxu0 %v271
    %962 = vmatprep.subr.mxu0 0.0
    %963 = vmatpush1.msra.mxu0 %v272
    %964 = vmatprep.subr.mxu0 0.0
    %965 = vmatpush1.msra.mxu0 %v273
    %966 = vmatprep.subr.mxu0 0.0
    %967 = vmatpush1.msra.mxu0 %v274
    %968 = vmatprep.subr.mxu0 0.0
    %969 = vmatpush1.msra.mxu0 %v275
    %970 = vmatprep.subr.mxu0 0.0
    %971 = vmatpush1.msra.mxu0 %v276
    %972 = vmatprep.subr.mxu0 0.0
    %973 = vmatpush1.msra.mxu0 %v277
    %974 = vmatprep.subr.mxu0 0.0
    %975 = vmatpush1.msra.mxu0 0.0
    %976 = vmatprep.subr.mxu0 0.0
    %977 = vmatpush1.msra.mxu0 0.0
    %978 = vmatprep.subr.mxu0 0.0
    %979 = vmatpush1.msra.mxu0 0.0
    %980 = vmatprep.subr.mxu0 0.0
    %981 = vmatpush1.msra.mxu0 0.0
    %982 = vmatprep.subr.mxu0 0.0
    %983 = vmatpush1.msra.mxu0 0.0
    %984 = vmatprep.subr.mxu0 0.0
    %985 = vmatpush1.msra.mxu0 0.0
    %986 = vmatprep.subr.mxu0 0.0
    %987 = vmatpush1.msra.mxu0 0.0
    %988 = vmatprep.subr.mxu0 0.0
    %989 = vmatpush1.msra.mxu0 0.0
    %990 = vmatprep.subr.mxu0 0.0
    %991 = vmatpush1.msra.mxu0 0.0
    %992 = vmatprep.subr.mxu0 0.0
    %993 = vmatpush1.msra.mxu0 0.0
    %994 = vmatprep.subr.mxu0 0.0
    %995 = vmatpush1.msra.mxu0 0.0
    %996 = vmatprep.subr.mxu0 0.0
    %997 = vmatpush1.msra.mxu0 0.0
    %998 = vmatprep.subr.mxu0 0.0
    %999 = vmatpush1.msra.mxu0 0.0
    %1000 = vmatprep.subr.mxu0 0.0
    %1001 = vmatpush1.msra.mxu0 0.0
    %1002 = vmatprep.subr.mxu0 0.0
    %1003 = vmatpush1.msra.mxu0 0.0
    %1004 = vmatprep.subr.mxu0 0.0
    %1005 = vmatpush1.msra.mxu0 0.0
    %1006 = vmatprep.subr.mxu0 0.0
    %1007 = vmatpush1.msra.mxu0 0.0
    %1008 = vmatprep.subr.mxu0 0.0
    %1009 = vmatpush1.msra.mxu0 0.0
    %1010 = vmatprep.subr.mxu0 0.0
    %1011 = vmatpush1.msra.mxu0 0.0
    %1012 = vmatprep.subr.mxu0 0.0
    %1013 = vmatpush1.msra.mxu0 0.0
    %1014 = vmatprep.subr.mxu0 0.0
    %1015 = vmatpush1.msra.mxu0 0.0
    %1016 = vmatprep.subr.mxu0 0.0
    %1017 = vmatpush1.msra.mxu0 0.0
    %1018 = vmatprep.subr.mxu0 0.0
    %1019 = vmatpush1.msra.mxu0 0.0
    %1020 = vmatprep.subr.mxu0 0.0
    %1021 = vmatpush1.msra.mxu0 0.0
    %1022 = vmatprep.mubr.f32.mxu0 0.0
    %1023 = vmatmul.mubr.f32.gmra.mrb[0].mxu0 %v956
    %v1024 = vpop.f32.mrb[0].mxu0
    %v1025 = vadd.f32 0.0, %v1024
    %v1026 = vpop.f32.mrb[0].mxu0
    %1027 = vdwg.mxu0
    %1029 = vrot.lane.b32.xlu0 %v709, 32
    %v1030 = vpop.permute.xlu0 %1029
    %1033 = vrot.lane.b32.xlu0 %v867, 64
    %v1034 = vpop.permute.xlu0 %1033
    %1037 = vrot.lane.b32.xlu0 %v1025, 96
    %v1038 = vpop.permute.xlu0 %1037
    %v1040 = vsel %vm126, %v551, %v1030
    %v1041 = vsel %vm469, %v1040, %v1034
    %vm1042 = vcmask 785408
    %v1043 = vsel %vm1042, %v1041, %v1038
    %s1044 = scalar_lea.vmem %s1, 32
    %v1045 = vld [vmem:[%s1044] sm:$0xff]
    %v1046 = vld [vmem:[%s1044 + $0x8] sm:$0xff]
    %v1047 = vld [vmem:[%s1044 + $0x10] sm:$0xff]
    %v1048 = vld [vmem:[%s1044 + $0x18] sm:$0xff]
    %s1049 = scalar_lea.vmem %s2, 64
    %v1050 = vld [vmem:[%s1049] sm:$0xff]
    %v1051 = vld [vmem:[%s1049 + $0x8] sm:$0xff]
    %v1052 = vld [vmem:[%s1049 + $0x10] sm:$0xff]
    %v1053 = vld [vmem:[%s1049 + $0x18] sm:$0xff]
    %v1054 = vld [vmem:[%s1049 + $0x20] sm:$0xff]
    %v1055 = vld [vmem:[%s1049 + $0x28] sm:$0xff]
    %v1056 = vld [vmem:[%s1049 + $0x30] sm:$0xff]
    %v1057 = vld [vmem:[%s1049 + $0x38] sm:$0xff]
    %1058 = vmatprep.subr.mxu0 0.0
    %1059 = vmatpush1.msra.mxu0 %v1045
    %1060 = vmatprep.subr.mxu0 0.0
    %1061 = vmatpush1.msra.mxu0 %v1046
    %1062 = vmatprep.subr.mxu0 0.0
    %1063 = vmatpush1.msra.mxu0 %v1047
    %1064 = vmatprep.subr.mxu0 0.0
    %1065 = vmatpush1.msra.mxu0 %v1048
    %1066 = vmatprep.subr.mxu0 0.0
    %1067 = vmatpush1.msra.mxu0 0.0
    %1068 = vmatprep.subr.mxu0 0.0
    %1069 = vmatpush1.msra.mxu0 0.0
    %1070 = vmatprep.subr.mxu0 0.0
    %1071 = vmatpush1.msra.mxu0 0.0
    %1072 = vmatprep.subr.mxu0 0.0
    %1073 = vmatpush1.msra.mxu0 0.0
    %1074 = vmatprep.subr.mxu0 0.0
    %1075 = vmatpush1.msra.mxu0 0.0
    %1076 = vmatprep.subr.mxu0 0.0
    %1077 = vmatpush1.msra.mxu0 0.0
    %1078 = vmatprep.subr.mxu0 0.0
    %1079 = vmatpush1.msra.mxu0 0.0
    %1080 = vmatprep.subr.mxu0 0.0
    %1081 = vmatpush1.msra.mxu0 0.0
    %1082 = vmatprep.subr.mxu0 0.0
    %1083 = vmatpush1.msra.mxu0 0.0
    %1084 = vmatprep.subr.mxu0 0.0
    %1085 = vmatpush1.msra.mxu0 0.0
    %1086 = vmatprep.subr.mxu0 0.0
    %1087 = vmatpush1.msra.mxu0 0.0
    %1088 = vmatprep.subr.mxu0 0.0
    %1089 = vmatpush1.msra.mxu0 0.0
    %1090 = vmatprep.subr.mxu0 0.0
    %1091 = vmatpush1.msra.mxu0 0.0
    %1092 = vmatprep.subr.mxu0 0.0
    %1093 = vmatpush1.msra.mxu0 0.0
    %1094 = vmatprep.subr.mxu0 0.0
    %1095 = vmatpush1.msra.mxu0 0.0
    %1096 = vmatprep.subr.mxu0 0.0
    %1097 = vmatpush1.msra.mxu0 0.0
    %1098 = vmatprep.subr.mxu0 0.0
    %1099 = vmatpush1.msra.mxu0 0.0
    %1100 = vmatprep.subr.mxu0 0.0
    %1101 = vmatpush1.msra.mxu0 0.0
    %1102 = vmatprep.subr.mxu0 0.0
    %1103 = vmatpush1.msra.mxu0 0.0
    %1104 = vmatprep.subr.mxu0 0.0
    %1105 = vmatpush1.msra.mxu0 0.0
    %1106 = vmatprep.subr.mxu0 0.0
    %1107 = vmatpush1.msra.mxu0 0.0
    %1108 = vmatprep.subr.mxu0 0.0
    %1109 = vmatpush1.msra.mxu0 0.0
    %1110 = vmatprep.subr.mxu0 0.0
    %1111 = vmatpush1.msra.mxu0 0.0
    %1112 = vmatprep.subr.mxu0 0.0
    %1113 = vmatpush1.msra.mxu0 0.0
    %1114 = vmatprep.subr.mxu0 0.0
    %1115 = vmatpush1.msra.mxu0 0.0
    %1116 = vmatprep.subr.mxu0 0.0
    %1117 = vmatpush1.msra.mxu0 0.0
    %1118 = vmatprep.subr.mxu0 0.0
    %1119 = vmatpush1.msra.mxu0 0.0
    %1120 = vmatprep.subr.mxu0 0.0
    %1121 = vmatpush1.msra.mxu0 0.0
    %1122 = vmatprep.mubr.f32.mxu0 0.0
    %1123 = vmatmul.mubr.f32.gmra.mrb[0].mxu0 %v299
    %v1124 = vpop.f32.mrb[0].mxu0
    %v1125 = vadd.f32 %v281, %v1124
    %v1126 = vpop.f32.mrb[0].mxu0
    %1127 = vmatprep.mubr.f32.mxu0 0.0
    %1128 = vmatmul.mubr.f32.gmra.mrb[0].mxu0 %v302
    %v1129 = vpop.f32.mrb[0].mxu0
    %v1130 = vadd.f32 %v286, %v1129
    %v1131 = vpop.f32.mrb[0].mxu0
    %1132 = vmatprep.mubr.f32.mxu0 0.0
    %1133 = vmatmul.mubr.f32.gmra.mrb[0].mxu0 %v305
    %v1134 = vpop.f32.mrb[0].mxu0
    %v1135 = vadd.f32 %v291, %v1134
    %v1136 = vpop.f32.mrb[0].mxu0
    %1137 = vmatprep.mubr.f32.mxu0 0.0
    %1138 = vmatmul.mubr.f32.gmra.mrb[0].mxu0 %v308
    %v1139 = vpop.f32.mrb[0].mxu0
    %v1140 = vadd.f32 %v296, %v1139
    %v1141 = vpop.f32.mrb[0].mxu0
    %1142 = vdwg.mxu0
    %v1144 = vsel %vm395, %v255, 0
    %1146 = vmatprep.subr.mxu0 0.0
    %1147 = vmatpush1.msra.mxu0 %v1125
    %1148 = vmatprep.subr.mxu0 0.0
    %1149 = vmatpush1.msra.mxu0 0.0
    %1150 = vmatprep.subr.mxu0 0.0
    %1151 = vmatpush1.msra.mxu0 0.0
    %1152 = vmatprep.subr.mxu0 0.0
    %1153 = vmatpush1.msra.mxu0 0.0
    %1154 = vmatprep.subr.mxu0 0.0
    %1155 = vmatpush1.msra.mxu0 0.0
    %1156 = vmatprep.subr.mxu0 0.0
    %1157 = vmatpush1.msra.mxu0 0.0
    %1158 = vmatprep.subr.mxu0 0.0
    %1159 = vmatpush1.msra.mxu0 0.0
    %1160 = vmatprep.subr.mxu0 0.0
    %1161 = vmatpush1.msra.mxu0 0.0
    %1162 = vmatprep.subr.mxu0 0.0
    %1163 = vmatpush1.msra.mxu0 0.0
    %1164 = vmatprep.subr.mxu0 0.0
    %1165 = vmatpush1.msra.mxu0 0.0
    %1166 = vmatprep.subr.mxu0 0.0
    %1167 = vmatpush1.msra.mxu0 0.0
    %1168 = vmatprep.subr.mxu0 0.0
    %1169 = vmatpush1.msra.mxu0 0.0
    %1170 = vmatprep.subr.mxu0 0.0
    %1171 = vmatpush1.msra.mxu0 0.0
    %1172 = vmatprep.subr.mxu0 0.0
    %1173 = vmatpush1.msra.mxu0 0.0
    %1174 = vmatprep.subr.mxu0 0.0
    %1175 = vmatpush1.msra.mxu0 0.0
    %1176 = vmatprep.subr.mxu0 0.0
    %1177 = vmatpush1.msra.mxu0 0.0
    %1178 = vmatprep.subr.mxu0 0.0
    %1179 = vmatpush1.msra.mxu0 0.0
    %1180 = vmatprep.subr.mxu0 0.0
    %1181 = vmatpush1.msra.mxu0 0.0
    %1182 = vmatprep.subr.mxu0 0.0
    %1183 = vmatpush1.msra.mxu0 0.0
    %1184 = vmatprep.subr.mxu0 0.0
    %1185 = vmatpush1.msra.mxu0 0.0
    %1186 = vmatprep.subr.mxu0 0.0
    %1187 = vmatpush1.msra.mxu0 0.0
    %1188 = vmatprep.subr.mxu0 0.0
    %1189 = vmatpush1.msra.mxu0 0.0
    %1190 = vmatprep.subr.mxu0 0.0
    %1191 = vmatpush1.msra.mxu0 0.0
    %1192 = vmatprep.subr.mxu0 0.0
    %1193 = vmatpush1.msra.mxu0 0.0
    %1194 = vmatprep.subr.mxu0 0.0
    %1195 = vmatpush1.msra.mxu0 0.0
    %1196 = vmatprep.subr.mxu0 0.0
    %1197 = vmatpush1.msra.mxu0 0.0
    %1198 = vmatprep.subr.mxu0 0.0
    %1199 = vmatpush1.msra.mxu0 0.0
    %1200 = vmatprep.subr.mxu0 0.0
    %1201 = vmatpush1.msra.mxu0 0.0
    %1202 = vmatprep.subr.mxu0 0.0
    %1203 = vmatpush1.msra.mxu0 0.0
    %1204 = vmatprep.subr.mxu0 0.0
    %1205 = vmatpush1.msra.mxu0 0.0
    %1206 = vmatprep.subr.mxu0 0.0
    %1207 = vmatpush1.msra.mxu0 0.0
    %1208 = vmatprep.subr.mxu0 0.0
    %1209 = vmatpush1.msra.mxu0 0.0
    %1210 = vmatprep.mubr.f32.mxu0 0.0
    %1211 = vmatmul.mubr.f32.gmra.mrb[0].mxu0 %v1144
    %v1212 = vpop.f32.mrb[0].mxu0
    %v1213 = vadd.f32 0.0, %v1212
    %v1214 = vpop.f32.mrb[0].mxu0
    %1215 = vdwg.mxu0
    %v1216 = vsel %vm469, %v1213, -inf
    %1217 = vmax.xlane.f32.xlu0 %v1216
    %v1218 = vpop.xlane.xlu0 %1217
    %v1219 = vsub.f32 %v1213, %v1218
    %v1220 = vmul.f32 %v1219, 1.442695
    %v1221 = vpow.pop %v1220
    %v1222 = vsel %vm469, %v1221, 0.0
    %1223 = vadd.xlane.f32.xlu0 %v1222
    %v1224 = vpop.xlane.xlu0 %1223
    %v1225 = vrcp.pop %v1224
    %v1226 = vmul.f32 %v1221, %v1225
    %v1228 = vsel %vm469, %v1226, 0
    %1230 = vmatprep.subr.mxu0 0.0
    %1231 = vmatpush1.msra.mxu0 %v1050
    %1232 = vmatprep.subr.mxu0 0.0
    %1233 = vmatpush1.msra.mxu0 %v1051
    %1234 = vmatprep.subr.mxu0 0.0
    %1235 = vmatpush1.msra.mxu0 %v1052
    %1236 = vmatprep.subr.mxu0 0.0
    %1237 = vmatpush1.msra.mxu0 %v1053
    %1238 = vmatprep.subr.mxu0 0.0
    %1239 = vmatpush1.msra.mxu0 %v1054
    %1240 = vmatprep.subr.mxu0 0.0
    %1241 = vmatpush1.msra.mxu0 %v1055
    %1242 = vmatprep.subr.mxu0 0.0
    %1243 = vmatpush1.msra.mxu0 %v1056
    %1244 = vmatprep.subr.mxu0 0.0
    %1245 = vmatpush1.msra.mxu0 %v1057
    %1246 = vmatprep.subr.mxu0 0.0
    %1247 = vmatpush1.msra.mxu0 0.0
    %1248 = vmatprep.subr.mxu0 0.0
    %1249 = vmatpush1.msra.mxu0 0.0
    %1250 = vmatprep.subr.mxu0 0.0
    %1251 = vmatpush1.msra.mxu0 0.0
    %1252 = vmatprep.subr.mxu0 0.0
    %1253 = vmatpush1.msra.mxu0 0.0
    %1254 = vmatprep.subr.mxu0 0.0
    %1255 = vmatpush1.msra.mxu0 0.0
    %1256 = vmatprep.subr.mxu0 0.0
    %1257 = vmatpush1.msra.mxu0 0.0
    %1258 = vmatprep.subr.mxu0 0.0
    %1259 = vmatpush1.msra.mxu0 0.0
    %1260 = vmatprep.subr.mxu0 0.0
    %1261 = vmatpush1.msra.mxu0 0.0
    %1262 = vmatprep.subr.mxu0 0.0
    %1263 = vmatpush1.msra.mxu0 0.0
    %1264 = vmatprep.subr.mxu0 0.0
    %1265 = vmatpush1.msra.mxu0 0.0
    %1266 = vmatprep.subr.mxu0 0.0
    %1267 = vmatpush1.msra.mxu0 0.0
    %1268 = vmatprep.subr.mxu0 0.0
    %1269 = vmatpush1.msra.mxu0 0.0
    %1270 = vmatprep.subr.mxu0 0.0
    %1271 = vmatpush1.msra.mxu0 0.0
    %1272 = vmatprep.subr.mxu0 0.0
    %1273 = vmatpush1.msra.mxu0 0.0
    %1274 = vmatprep.subr.mxu0 0.0
    %1275 = vmatpush1.msra.mxu0 0.0
    %1276 = vmatprep.subr.mxu0 0.0
    %1277 = vmatpush1.msra.mxu0 0.0
    %1278 = vmatprep.subr.mxu0 0.0
    %1279 = vmatpush1.msra.mxu0 0.0
    %1280 = vmatprep.subr.mxu0 0.0
    %1281 = vmatpush1.msra.mxu0 0.0
    %1282 = vmatprep.subr.mxu0 0.0
    %1283 = vmatpush1.msra.mxu0 0.0
    %1284 = vmatprep.subr.mxu0 0.0
    %1285 = vmatpush1.msra.mxu0 0.0
    %1286 = vmatprep.subr.mxu0 0.0
    %1287 = vmatpush1.msra.mxu0 0.0
    %1288 = vmatprep.subr.mxu0 0.0
    %1289 = vmatpush1.msra.mxu0 0.0
    %1290 = vmatprep.subr.mxu0 0.0
    %1291 = vmatpush1.msra.mxu0 0.0
    %1292 = vmatprep.subr.mxu0 0.0
    %1293 = vmatpush1.msra.mxu0 0.0
    %1294 = vmatprep.mubr.f32.mxu0 0.0
    %1295 = vmatmul.mubr.f32.gmra.mrb[0].mxu0 %v1228
    %v1296 = vpop.f32.mrb[0].mxu0
    %v1297 = vadd.f32 0.0, %v1296
    %v1298 = vpop.f32.mrb[0].mxu0
    %1299 = vdwg.mxu0
    %1300 = vrot.lane.b32.xlu0 %v255, 120
    %v1301 = vpop.permute.xlu0 %1300
    %v1302 = vsel %vm395, %v1301, 0
    %1304 = vmatprep.subr.mxu0 0.0
    %1305 = vmatpush1.msra.mxu0 %v1130
    %1306 = vmatprep.subr.mxu0 0.0
    %1307 = vmatpush1.msra.mxu0 0.0
    %1308 = vmatprep.subr.mxu0 0.0
    %1309 = vmatpush1.msra.mxu0 0.0
    %1310 = vmatprep.subr.mxu0 0.0
    %1311 = vmatpush1.msra.mxu0 0.0
    %1312 = vmatprep.subr.mxu0 0.0
    %1313 = vmatpush1.msra.mxu0 0.0
    %1314 = vmatprep.subr.mxu0 0.0
    %1315 = vmatpush1.msra.mxu0 0.0
    %1316 = vmatprep.subr.mxu0 0.0
    %1317 = vmatpush1.msra.mxu0 0.0
    %1318 = vmatprep.subr.mxu0 0.0
    %1319 = vmatpush1.msra.mxu0 0.0
    %1320 = vmatprep.subr.mxu0 0.0
    %1321 = vmatpush1.msra.mxu0 0.0
    %1322 = vmatprep.subr.mxu0 0.0
    %1323 = vmatpush1.msra.mxu0 0.0
    %1324 = vmatprep.subr.mxu0 0.0
    %1325 = vmatpush1.msra.mxu0 0.0
    %1326 = vmatprep.subr.mxu0 0.0
    %1327 = vmatpush1.msra.mxu0 0.0
    %1328 = vmatprep.subr.mxu0 0.0
    %1329 = vmatpush1.msra.mxu0 0.0
    %1330 = vmatprep.subr.mxu0 0.0
    %1331 = vmatpush1.msra.mxu0 0.0
    %1332 = vmatprep.subr.mxu0 0.0
    %1333 = vmatpush1.msra.mxu0 0.0
    %1334 = vmatprep.subr.mxu0 0.0
    %1335 = vmatpush1.msra.mxu0 0.0
    %1336 = vmatprep.subr.mxu0 0.0
    %1337 = vmatpush1.msra.mxu0 0.0
    %1338 = vmatprep.subr.mxu0 0.0
    %1339 = vmatpush1.msra.mxu0 0.0
    %1340 = vmatprep.subr.mxu0 0.0
    %1341 = vmatpush1.msra.mxu0 0.0
    %1342 = vmatprep.subr.mxu0 0.0
    %1343 = vmatpush1.msra.mxu0 0.0
    %1344 = vmatprep.subr.mxu0 0.0
    %1345 = vmatpush1.msra.mxu0 0.0
    %1346 = vmatprep.subr.mxu0 0.0
    %1347 = vmatpush1.msra.mxu0 0.0
    %1348 = vmatprep.subr.mxu0 0.0
    %1349 = vmatpush1.msra.mxu0 0.0
    %1350 = vmatprep.subr.mxu0 0.0
    %1351 = vmatpush1.msra.mxu0 0.0
    %1352 = vmatprep.subr.mxu0 0.0
    %1353 = vmatpush1.msra.mxu0 0.0
    %1354 = vmatprep.subr.mxu0 0.0
    %1355 = vmatpush1.msra.mxu0 0.0
    %1356 = vmatprep.subr.mxu0 0.0
    %1357 = vmatpush1.msra.mxu0 0.0
    %1358 = vmatprep.subr.mxu0 0.0
    %1359 = vmatpush1.msra.mxu0 0.0
    %1360 = vmatprep.subr.mxu0 0.0
    %1361 = vmatpush1.msra.mxu0 0.0
    %1362 = vmatprep.subr.mxu0 0.0
    %1363 = vmatpush1.msra.mxu0 0.0
    %1364 = vmatprep.subr.mxu0 0.0
    %1365 = vmatpush1.msra.mxu0 0.0
    %1366 = vmatprep.subr.mxu0 0.0
    %1367 = vmatpush1.msra.mxu0 0.0
    %1368 = vmatprep.mubr.f32.mxu0 0.0
    %1369 = vmatmul.mubr.f32.gmra.mrb[0].mxu0 %v1302
    %v1370 = vpop.f32.mrb[0].mxu0
    %v1371 = vadd.f32 0.0, %v1370
    %v1372 = vpop.f32.mrb[0].mxu0
    %1373 = vdwg.mxu0
    %v1374 = vsel %vm469, %v1371, -inf
    %1375 = vmax.xlane.f32.xlu0 %v1374
    %v1376 = vpop.xlane.xlu0 %1375
    %v1377 = vsub.f32 %v1371, %v1376
    %v1378 = vmul.f32 %v1377, 1.442695
    %v1379 = vpow.pop %v1378
    %v1380 = vsel %vm469, %v1379, 0.0
    %1381 = vadd.xlane.f32.xlu0 %v1380
    %v1382 = vpop.xlane.xlu0 %1381
    %v1383 = vrcp.pop %v1382
    %v1384 = vmul.f32 %v1379, %v1383
    %v1386 = vsel %vm469, %v1384, 0
    %1388 = vmatprep.subr.mxu0 0.0
    %1389 = vmatpush1.msra.mxu0 %v1050
    %1390 = vmatprep.subr.mxu0 0.0
    %1391 = vmatpush1.msra.mxu0 %v1051
    %1392 = vmatprep.subr.mxu0 0.0
    %1393 = vmatpush1.msra.mxu0 %v1052
    %1394 = vmatprep.subr.mxu0 0.0
    %1395 = vmatpush1.msra.mxu0 %v1053
    %1396 = vmatprep.subr.mxu0 0.0
    %1397 = vmatpush1.msra.mxu0 %v1054
    %1398 = vmatprep.subr.mxu0 0.0
    %1399 = vmatpush1.msra.mxu0 %v1055
    %1400 = vmatprep.subr.mxu0 0.0
    %1401 = vmatpush1.msra.mxu0 %v1056
    %1402 = vmatprep.subr.mxu0 0.0
    %1403 = vmatpush1.msra.mxu0 %v1057
    %1404 = vmatprep.subr.mxu0 0.0
    %1405 = vmatpush1.msra.mxu0 0.0
    %1406 = vmatprep.subr.mxu0 0.0
    %1407 = vmatpush1.msra.mxu0 0.0
    %1408 = vmatprep.subr.mxu0 0.0
    %1409 = vmatpush1.msra.mxu0 0.0
    %1410 = vmatprep.subr.mxu0 0.0
    %1411 = vmatpush1.msra.mxu0 0.0
    %1412 = vmatprep.subr.mxu0 0.0
    %1413 = vmatpush1.msra.mxu0 0.0
    %1414 = vmatprep.subr.mxu0 0.0
    %1415 = vmatpush1.msra.mxu0 0.0
    %1416 = vmatprep.subr.mxu0 0.0
    %1417 = vmatpush1.msra.mxu0 0.0
    %1418 = vmatprep.subr.mxu0 0.0
    %1419 = vmatpush1.msra.mxu0 0.0
    %1420 = vmatprep.subr.mxu0 0.0
    %1421 = vmatpush1.msra.mxu0 0.0
    %1422 = vmatprep.subr.mxu0 0.0
    %1423 = vmatpush1.msra.mxu0 0.0
    %1424 = vmatprep.subr.mxu0 0.0
    %1425 = vmatpush1.msra.mxu0 0.0
    %1426 = vmatprep.subr.mxu0 0.0
    %1427 = vmatpush1.msra.mxu0 0.0
    %1428 = vmatprep.subr.mxu0 0.0
    %1429 = vmatpush1.msra.mxu0 0.0
    %1430 = vmatprep.subr.mxu0 0.0
    %1431 = vmatpush1.msra.mxu0 0.0
    %1432 = vmatprep.subr.mxu0 0.0
    %1433 = vmatpush1.msra.mxu0 0.0
    %1434 = vmatprep.subr.mxu0 0.0
    %1435 = vmatpush1.msra.mxu0 0.0
    %1436 = vmatprep.subr.mxu0 0.0
    %1437 = vmatpush1.msra.mxu0 0.0
    %1438 = vmatprep.subr.mxu0 0.0
    %1439 = vmatpush1.msra.mxu0 0.0
    %1440 = vmatprep.subr.mxu0 0.0
    %1441 = vmatpush1.msra.mxu0 0.0
    %1442 = vmatprep.subr.mxu0 0.0
    %1443 = vmatpush1.msra.mxu0 0.0
    %1444 = vmatprep.subr.mxu0 0.0
    %1445 = vmatpush1.msra.mxu0 0.0
    %1446 = vmatprep.subr.mxu0 0.0
    %1447 = vmatpush1.msra.mxu0 0.0
    %1448 = vmatprep.subr.mxu0 0.0
    %1449 = vmatpush1.msra.mxu0 0.0
    %1450 = vmatprep.subr.mxu0 0.0
    %1451 = vmatpush1.msra.mxu0 0.0
    %1452 = vmatprep.mubr.f32.mxu0 0.0
    %1453 = vmatmul.mubr.f32.gmra.mrb[0].mxu0 %v1386
    %v1454 = vpop.f32.mrb[0].mxu0
    %v1455 = vadd.f32 0.0, %v1454
    %v1456 = vpop.f32.mrb[0].mxu0
    %1457 = vdwg.mxu0
    %1458 = vrot.lane.b32.xlu0 %v255, 112
    %v1459 = vpop.permute.xlu0 %1458
    %v1460 = vsel %vm395, %v1459, 0
    %1462 = vmatprep.subr.mxu0 0.0
    %1463 = vmatpush1.msra.mxu0 %v1135
    %1464 = vmatprep.subr.mxu0 0.0
    %1465 = vmatpush1.msra.mxu0 0.0
    %1466 = vmatprep.subr.mxu0 0.0
    %1467 = vmatpush1.msra.mxu0 0.0
    %1468 = vmatprep.subr.mxu0 0.0
    %1469 = vmatpush1.msra.mxu0 0.0
    %1470 = vmatprep.subr.mxu0 0.0
    %1471 = vmatpush1.msra.mxu0 0.0
    %1472 = vmatprep.subr.mxu0 0.0
    %1473 = vmatpush1.msra.mxu0 0.0
    %1474 = vmatprep.subr.mxu0 0.0
    %1475 = vmatpush1.msra.mxu0 0.0
    %1476 = vmatprep.subr.mxu0 0.0
    %1477 = vmatpush1.msra.mxu0 0.0
    %1478 = vmatprep.subr.mxu0 0.0
    %1479 = vmatpush1.msra.mxu0 0.0
    %1480 = vmatprep.subr.mxu0 0.0
    %1481 = vmatpush1.msra.mxu0 0.0
    %1482 = vmatprep.subr.mxu0 0.0
    %1483 = vmatpush1.msra.mxu0 0.0
    %1484 = vmatprep.subr.mxu0 0.0
    %1485 = vmatpush1.msra.mxu0 0.0
    %1486 = vmatprep.subr.mxu0 0.0
    %1487 = vmatpush1.msra.mxu0 0.0
    %1488 = vmatprep.subr.mxu0 0.0
    %1489 = vmatpush1.msra.mxu0 0.0
    %1490 = vmatprep.subr.mxu0 0.0
    %1491 = vmatpush1.msra.mxu0 0.0
    %1492 = vmatprep.subr.mxu0 0.0
    %1493 = vmatpush1.msra.mxu0 0.0
    %1494 = vmatprep.subr.mxu0 0.0
    %1495 = vmatpush1.msra.mxu0 0.0
    %1496 = vmatprep.subr.mxu0 0.0
    %1497 = vmatpush1.msra.mxu0 0.0
    %1498 = vmatprep.subr.mxu0 0.0
    %1499 = vmatpush1.msra.mxu0 0.0
    %1500 = vmatprep.subr.mxu0 0.0
    %1501 = vmatpush1.msra.mxu0 0.0
    %1502 = vmatprep.subr.mxu0 0.0
    %1503 = vmatpush1.msra.mxu0 0.0
    %1504 = vmatprep.subr.mxu0 0.0
    %1505 = vmatpush1.msra.mxu0 0.0
    %1506 = vmatprep.subr.mxu0 0.0
    %1507 = vmatpush1.msra.mxu0 0.0
    %1508 = vmatprep.subr.mxu0 0.0
    %1509 = vmatpush1.msra.mxu0 0.0
    %1510 = vmatprep.subr.mxu0 0.0
    %1511 = vmatpush1.msra.mxu0 0.0
    %1512 = vmatprep.subr.mxu0 0.0
    %1513 = vmatpush1.msra.mxu0 0.0
    %1514 = vmatprep.subr.mxu0 0.0
    %1515 = vmatpush1.msra.mxu0 0.0
    %1516 = vmatprep.subr.mxu0 0.0
    %1517 = vmatpush1.msra.mxu0 0.0
    %1518 = vmatprep.subr.mxu0 0.0
    %1519 = vmatpush1.msra.mxu0 0.0
    %1520 = vmatprep.subr.mxu0 0.0
    %1521 = vmatpush1.msra.mxu0 0.0
    %1522 = vmatprep.subr.mxu0 0.0
    %1523 = vmatpush1.msra.mxu0 0.0
    %1524 = vmatprep.subr.mxu0 0.0
    %1525 = vmatpush1.msra.mxu0 0.0
    %1526 = vmatprep.mubr.f32.mxu0 0.0
    %1527 = vmatmul.mubr.f32.gmra.mrb[0].mxu0 %v1460
    %v1528 = vpop.f32.mrb[0].mxu0
    %v1529 = vadd.f32 0.0, %v1528
    %v1530 = vpop.f32.mrb[0].mxu0
    %1531 = vdwg.mxu0
    %v1532 = vsel %vm469, %v1529, -inf
    %1533 = vmax.xlane.f32.xlu0 %v1532
    %v1534 = vpop.xlane.xlu0 %1533
    %v1535 = vsub.f32 %v1529, %v1534
    %v1536 = vmul.f32 %v1535, 1.442695
    %v1537 = vpow.pop %v1536
    %v1538 = vsel %vm469, %v1537, 0.0
    %1539 = vadd.xlane.f32.xlu0 %v1538
    %v1540 = vpop.xlane.xlu0 %1539
    %v1541 = vrcp.pop %v1540
    %v1542 = vmul.f32 %v1537, %v1541
    %v1544 = vsel %vm469, %v1542, 0
    %1546 = vmatprep.subr.mxu0 0.0
    %1547 = vmatpush1.msra.mxu0 %v1050
    %1548 = vmatprep.subr.mxu0 0.0
    %1549 = vmatpush1.msra.mxu0 %v1051
    %1550 = vmatprep.subr.mxu0 0.0
    %1551 = vmatpush1.msra.mxu0 %v1052
    %1552 = vmatprep.subr.mxu0 0.0
    %1553 = vmatpush1.msra.mxu0 %v1053
    %1554 = vmatprep.subr.mxu0 0.0
    %1555 = vmatpush1.msra.mxu0 %v1054
    %1556 = vmatprep.subr.mxu0 0.0
    %1557 = vmatpush1.msra.mxu0 %v1055
    %1558 = vmatprep.subr.mxu0 0.0
    %1559 = vmatpush1.msra.mxu0 %v1056
    %1560 = vmatprep.subr.mxu0 0.0
    %1561 = vmatpush1.msra.mxu0 %v1057
    %1562 = vmatprep.subr.mxu0 0.0
    %1563 = vmatpush1.msra.mxu0 0.0
    %1564 = vmatprep.subr.mxu0 0.0
    %1565 = vmatpush1.msra.mxu0 0.0
    %1566 = vmatprep.subr.mxu0 0.0
    %1567 = vmatpush1.msra.mxu0 0.0
    %1568 = vmatprep.subr.mxu0 0.0
    %1569 = vmatpush1.msra.mxu0 0.0
    %1570 = vmatprep.subr.mxu0 0.0
    %1571 = vmatpush1.msra.mxu0 0.0
    %1572 = vmatprep.subr.mxu0 0.0
    %1573 = vmatpush1.msra.mxu0 0.0
    %1574 = vmatprep.subr.mxu0 0.0
    %1575 = vmatpush1.msra.mxu0 0.0
    %1576 = vmatprep.subr.mxu0 0.0
    %1577 = vmatpush1.msra.mxu0 0.0
    %1578 = vmatprep.subr.mxu0 0.0
    %1579 = vmatpush1.msra.mxu0 0.0
    %1580 = vmatprep.subr.mxu0 0.0
    %1581 = vmatpush1.msra.mxu0 0.0
    %1582 = vmatprep.subr.mxu0 0.0
    %1583 = vmatpush1.msra.mxu0 0.0
    %1584 = vmatprep.subr.mxu0 0.0
    %1585 = vmatpush1.msra.mxu0 0.0
    %1586 = vmatprep.subr.mxu0 0.0
    %1587 = vmatpush1.msra.mxu0 0.0
    %1588 = vmatprep.subr.mxu0 0.0
    %1589 = vmatpush1.msra.mxu0 0.0
    %1590 = vmatprep.subr.mxu0 0.0
    %1591 = vmatpush1.msra.mxu0 0.0
    %1592 = vmatprep.subr.mxu0 0.0
    %1593 = vmatpush1.msra.mxu0 0.0
    %1594 = vmatprep.subr.mxu0 0.0
    %1595 = vmatpush1.msra.mxu0 0.0
    %1596 = vmatprep.subr.mxu0 0.0
    %1597 = vmatpush1.msra.mxu0 0.0
    %1598 = vmatprep.subr.mxu0 0.0
    %1599 = vmatpush1.msra.mxu0 0.0
    %1600 = vmatprep.subr.mxu0 0.0
    %1601 = vmatpush1.msra.mxu0 0.0
    %1602 = vmatprep.subr.mxu0 0.0
    %1603 = vmatpush1.msra.mxu0 0.0
    %1604 = vmatprep.subr.mxu0 0.0
    %1605 = vmatpush1.msra.mxu0 0.0
    %1606 = vmatprep.subr.mxu0 0.0
    %1607 = vmatpush1.msra.mxu0 0.0
    %1608 = vmatprep.subr.mxu0 0.0
    %1609 = vmatpush1.msra.mxu0 0.0
    %1610 = vmatprep.mubr.f32.mxu0 0.0
    %1611 = vmatmul.mubr.f32.gmra.mrb[0].mxu0 %v1544
    %v1612 = vpop.f32.mrb[0].mxu0
    %v1613 = vadd.f32 0.0, %v1612
    %v1614 = vpop.f32.mrb[0].mxu0
    %1615 = vdwg.mxu0
    %1616 = vrot.lane.b32.xlu0 %v255, 104
    %v1617 = vpop.permute.xlu0 %1616
    %v1618 = vsel %vm395, %v1617, 0
    %1620 = vmatprep.subr.mxu0 0.0
    %1621 = vmatpush1.msra.mxu0 %v1140
    %1622 = vmatprep.subr.mxu0 0.0
    %1623 = vmatpush1.msra.mxu0 0.0
    %1624 = vmatprep.subr.mxu0 0.0
    %1625 = vmatpush1.msra.mxu0 0.0
    %1626 = vmatprep.subr.mxu0 0.0
    %1627 = vmatpush1.msra.mxu0 0.0
    %1628 = vmatprep.subr.mxu0 0.0
    %1629 = vmatpush1.msra.mxu0 0.0
    %1630 = vmatprep.subr.mxu0 0.0
    %1631 = vmatpush1.msra.mxu0 0.0
    %1632 = vmatprep.subr.mxu0 0.0
    %1633 = vmatpush1.msra.mxu0 0.0
    %1634 = vmatprep.subr.mxu0 0.0
    %1635 = vmatpush1.msra.mxu0 0.0
    %1636 = vmatprep.subr.mxu0 0.0
    %1637 = vmatpush1.msra.mxu0 0.0
    %1638 = vmatprep.subr.mxu0 0.0
    %1639 = vmatpush1.msra.mxu0 0.0
    %1640 = vmatprep.subr.mxu0 0.0
    %1641 = vmatpush1.msra.mxu0 0.0
    %1642 = vmatprep.subr.mxu0 0.0
    %1643 = vmatpush1.msra.mxu0 0.0
    %1644 = vmatprep.subr.mxu0 0.0
    %1645 = vmatpush1.msra.mxu0 0.0
    %1646 = vmatprep.subr.mxu0 0.0
    %1647 = vmatpush1.msra.mxu0 0.0
    %1648 = vmatprep.subr.mxu0 0.0
    %1649 = vmatpush1.msra.mxu0 0.0
    %1650 = vmatprep.subr.mxu0 0.0
    %1651 = vmatpush1.msra.mxu0 0.0
    %1652 = vmatprep.subr.mxu0 0.0
    %1653 = vmatpush1.msra.mxu0 0.0
    %1654 = vmatprep.subr.mxu0 0.0
    %1655 = vmatpush1.msra.mxu0 0.0
    %1656 = vmatprep.subr.mxu0 0.0
    %1657 = vmatpush1.msra.mxu0 0.0
    %1658 = vmatprep.subr.mxu0 0.0
    %1659 = vmatpush1.msra.mxu0 0.0
    %1660 = vmatprep.subr.mxu0 0.0
    %1661 = vmatpush1.msra.mxu0 0.0
    %1662 = vmatprep.subr.mxu0 0.0
    %1663 = vmatpush1.msra.mxu0 0.0
    %1664 = vmatprep.subr.mxu0 0.0
    %1665 = vmatpush1.msra.mxu0 0.0
    %1666 = vmatprep.subr.mxu0 0.0
    %1667 = vmatpush1.msra.mxu0 0.0
    %1668 = vmatprep.subr.mxu0 0.0
    %1669 = vmatpush1.msra.mxu0 0.0
    %1670 = vmatprep.subr.mxu0 0.0
    %1671 = vmatpush1.msra.mxu0 0.0
    %1672 = vmatprep.subr.mxu0 0.0
    %1673 = vmatpush1.msra.mxu0 0.0
    %1674 = vmatprep.subr.mxu0 0.0
    %1675 = vmatpush1.msra.mxu0 0.0
    %1676 = vmatprep.subr.mxu0 0.0
    %1677 = vmatpush1.msra.mxu0 0.0
    %1678 = vmatprep.subr.mxu0 0.0
    %1679 = vmatpush1.msra.mxu0 0.0
    %1680 = vmatprep.subr.mxu0 0.0
    %1681 = vmatpush1.msra.mxu0 0.0
    %1682 = vmatprep.subr.mxu0 0.0
    %1683 = vmatpush1.msra.mxu0 0.0
    %1684 = vmatprep.mubr.f32.mxu0 0.0
    %1685 = vmatmul.mubr.f32.gmra.mrb[0].mxu0 %v1618
    %v1686 = vpop.f32.mrb[0].mxu0
    %v1687 = vadd.f32 0.0, %v1686
    %v1688 = vpop.f32.mrb[0].mxu0
    %1689 = vdwg.mxu0
    %v1690 = vsel %vm469, %v1687, -inf
    %1691 = vmax.xlane.f32.xlu0 %v1690
    %v1692 = vpop.xlane.xlu0 %1691
    %v1693 = vsub.f32 %v1687, %v1692
    %v1694 = vmul.f32 %v1693, 1.442695
    %v1695 = vpow.pop %v1694
    %v1696 = vsel %vm469, %v1695, 0.0
    %1697 = vadd.xlane.f32.xlu0 %v1696
    %v1698 = vpop.xlane.xlu0 %1697
    %v1699 = vrcp.pop %v1698
    %v1700 = vmul.f32 %v1695, %v1699
    %v1702 = vsel %vm469, %v1700, 0
    %1704 = vmatprep.subr.mxu0 0.0
    %1705 = vmatpush1.msra.mxu0 %v1050
    %1706 = vmatprep.subr.mxu0 0.0
    %1707 = vmatpush1.msra.mxu0 %v1051
    %1708 = vmatprep.subr.mxu0 0.0
    %1709 = vmatpush1.msra.mxu0 %v1052
    %1710 = vmatprep.subr.mxu0 0.0
    %1711 = vmatpush1.msra.mxu0 %v1053
    %1712 = vmatprep.subr.mxu0 0.0
    %1713 = vmatpush1.msra.mxu0 %v1054
    %1714 = vmatprep.subr.mxu0 0.0
    %1715 = vmatpush1.msra.mxu0 %v1055
    %1716 = vmatprep.subr.mxu0 0.0
    %1717 = vmatpush1.msra.mxu0 %v1056
    %1718 = vmatprep.subr.mxu0 0.0
    %1719 = vmatpush1.msra.mxu0 %v1057
    %1720 = vmatprep.subr.mxu0 0.0
    %1721 = vmatpush1.msra.mxu0 0.0
    %1722 = vmatprep.subr.mxu0 0.0
    %1723 = vmatpush1.msra.mxu0 0.0
    %1724 = vmatprep.subr.mxu0 0.0
    %1725 = vmatpush1.msra.mxu0 0.0
    %1726 = vmatprep.subr.mxu0 0.0
    %1727 = vmatpush1.msra.mxu0 0.0
    %1728 = vmatprep.subr.mxu0 0.0
    %1729 = vmatpush1.msra.mxu0 0.0
    %1730 = vmatprep.subr.mxu0 0.0
    %1731 = vmatpush1.msra.mxu0 0.0
    %1732 = vmatprep.subr.mxu0 0.0
    %1733 = vmatpush1.msra.mxu0 0.0
    %1734 = vmatprep.subr.mxu0 0.0
    %1735 = vmatpush1.msra.mxu0 0.0
    %1736 = vmatprep.subr.mxu0 0.0
    %1737 = vmatpush1.msra.mxu0 0.0
    %1738 = vmatprep.subr.mxu0 0.0
    %1739 = vmatpush1.msra.mxu0 0.0
    %1740 = vmatprep.subr.mxu0 0.0
    %1741 = vmatpush1.msra.mxu0 0.0
    %1742 = vmatprep.subr.mxu0 0.0
    %1743 = vmatpush1.msra.mxu0 0.0
    %1744 = vmatprep.subr.mxu0 0.0
    %1745 = vmatpush1.msra.mxu0 0.0
    %1746 = vmatprep.subr.mxu0 0.0
    %1747 = vmatpush1.msra.mxu0 0.0
    %1748 = vmatprep.subr.mxu0 0.0
    %1749 = vmatpush1.msra.mxu0 0.0
    %1750 = vmatprep.subr.mxu0 0.0
    %1751 = vmatpush1.msra.mxu0 0.0
    %1752 = vmatprep.subr.mxu0 0.0
    %1753 = vmatpush1.msra.mxu0 0.0
    %1754 = vmatprep.subr.mxu0 0.0
    %1755 = vmatpush1.msra.mxu0 0.0
    %1756 = vmatprep.subr.mxu0 0.0
    %1757 = vmatpush1.msra.mxu0 0.0
    %1758 = vmatprep.subr.mxu0 0.0
    %1759 = vmatpush1.msra.mxu0 0.0
    %1760 = vmatprep.subr.mxu0 0.0
    %1761 = vmatpush1.msra.mxu0 0.0
    %1762 = vmatprep.subr.mxu0 0.0
    %1763 = vmatpush1.msra.mxu0 0.0
    %1764 = vmatprep.subr.mxu0 0.0
    %1765 = vmatpush1.msra.mxu0 0.0
    %1766 = vmatprep.subr.mxu0 0.0
    %1767 = vmatpush1.msra.mxu0 0.0
    %1768 = vmatprep.mubr.f32.mxu0 0.0
    %1769 = vmatmul.mubr.f32.gmra.mrb[0].mxu0 %v1702
    %v1770 = vpop.f32.mrb[0].mxu0
    %v1771 = vadd.f32 0.0, %v1770
    %v1772 = vpop.f32.mrb[0].mxu0
    %1773 = vdwg.mxu0
    %1775 = vrot.lane.b32.xlu0 %v1455, 32
    %v1776 = vpop.permute.xlu0 %1775
    %1779 = vrot.lane.b32.xlu0 %v1613, 64
    %v1780 = vpop.permute.xlu0 %1779
    %1783 = vrot.lane.b32.xlu0 %v1771, 96
    %v1784 = vpop.permute.xlu0 %1783
    %v1786 = vsel %vm126, %v1297, %v1776
    %v1787 = vsel %vm469, %v1786, %v1780
    %v1788 = vsel %vm1042, %v1787, %v1784
    %v1789 = vld [vmem:[%s3 + $0x78] sm:$0xff]
    %v1790 = vld [vmem:[%s3 + $0x80] sm:$0xff]
    %v1791 = vld [vmem:[%s3 + $0x88] sm:$0xff]
    %v1792 = vld [vmem:[%s3 + $0x90] sm:$0xff]
    %v1793 = vld [vmem:[%s3 + $0x98] sm:$0xff]
    %v1794 = vld [vmem:[%s3 + $0xa0] sm:$0xff]
    %v1795 = vld [vmem:[%s3 + $0xa8] sm:$0xff]
    %v1796 = vld [vmem:[%s3 + $0xb0] sm:$0xff]
    %v1797 = vld [vmem:[%s3 + $0xb8] sm:$0xff]
    %v1798 = vld [vmem:[%s3 + $0xc0] sm:$0xff]
    %v1799 = vld [vmem:[%s3 + $0xc8] sm:$0xff]
    %v1800 = vld [vmem:[%s3 + $0xd0] sm:$0xff]
    %v1801 = vld [vmem:[%s3 + $0xd8] sm:$0xff]
    %v1802 = vld [vmem:[%s3 + $0xe0] sm:$0xff]
    %v1803 = vld [vmem:[%s3 + $0xe8] sm:$0xff]
    %v1804 = vld [vmem:[%s3 + $0xf0] sm:$0xff]
    %v1805 = vld [vmem:[%s5 + $0x4] sm:$0x1]
    %v1806 = vlaneseq
    %v1807 = vshrl.u32 %v1806, 7
    %v1808 = vsub.s32 0, %v1807
    %v1809 = vrot.slane %v1805, %v1808
    %1810 = vmatprep.subr.mxu0 0.0
    %1811 = vmatpush1.msra.mxu0 %v1789
    %1812 = vmatprep.subr.mxu0 0.0
    %1813 = vmatpush1.msra.mxu0 %v1790
    %1814 = vmatprep.subr.mxu0 0.0
    %1815 = vmatpush1.msra.mxu0 %v1791
    %1816 = vmatprep.subr.mxu0 0.0
    %1817 = vmatpush1.msra.mxu0 %v1792
    %1818 = vmatprep.subr.mxu0 0.0
    %1819 = vmatpush1.msra.mxu0 %v1793
    %1820 = vmatprep.subr.mxu0 0.0
    %1821 = vmatpush1.msra.mxu0 %v1794
    %1822 = vmatprep.subr.mxu0 0.0
    %1823 = vmatpush1.msra.mxu0 %v1795
    %1824 = vmatprep.subr.mxu0 0.0
    %1825 = vmatpush1.msra.mxu0 %v1796
    %1826 = vmatprep.subr.mxu0 0.0
    %1827 = vmatpush1.msra.mxu0 %v1797
    %1828 = vmatprep.subr.mxu0 0.0
    %1829 = vmatpush1.msra.mxu0 %v1798
    %1830 = vmatprep.subr.mxu0 0.0
    %1831 = vmatpush1.msra.mxu0 %v1799
    %1832 = vmatprep.subr.mxu0 0.0
    %1833 = vmatpush1.msra.mxu0 %v1800
    %1834 = vmatprep.subr.mxu0 0.0
    %1835 = vmatpush1.msra.mxu0 %v1801
    %1836 = vmatprep.subr.mxu0 0.0
    %1837 = vmatpush1.msra.mxu0 %v1802
    %1838 = vmatprep.subr.mxu0 0.0
    %1839 = vmatpush1.msra.mxu0 %v1803
    %1840 = vmatprep.subr.mxu0 0.0
    %1841 = vmatpush1.msra.mxu0 %v1804
    %1842 = vmatprep.subr.mxu0 0.0
    %1843 = vmatpush1.msra.mxu0 0.0
    %1844 = vmatprep.subr.mxu0 0.0
    %1845 = vmatpush1.msra.mxu0 0.0
    %1846 = vmatprep.subr.mxu0 0.0
    %1847 = vmatpush1.msra.mxu0 0.0
    %1848 = vmatprep.subr.mxu0 0.0
    %1849 = vmatpush1.msra.mxu0 0.0
    %1850 = vmatprep.subr.mxu0 0.0
    %1851 = vmatpush1.msra.mxu0 0.0
    %1852 = vmatprep.subr.mxu0 0.0
    %1853 = vmatpush1.msra.mxu0 0.0
    %1854 = vmatprep.subr.mxu0 0.0
    %1855 = vmatpush1.msra.mxu0 0.0
    %1856 = vmatprep.subr.mxu0 0.0
    %1857 = vmatpush1.msra.mxu0 0.0
    %1858 = vmatprep.subr.mxu0 0.0
    %1859 = vmatpush1.msra.mxu0 0.0
    %1860 = vmatprep.subr.mxu0 0.0
    %1861 = vmatpush1.msra.mxu0 0.0
    %1862 = vmatprep.subr.mxu0 0.0
    %1863 = vmatpush1.msra.mxu0 0.0
    %1864 = vmatprep.subr.mxu0 0.0
    %1865 = vmatpush1.msra.mxu0 0.0
    %1866 = vmatprep.subr.mxu0 0.0
    %1867 = vmatpush1.msra.mxu0 0.0
    %1868 = vmatprep.subr.mxu0 0.0
    %1869 = vmatpush1.msra.mxu0 0.0
    %1870 = vmatprep.subr.mxu0 0.0
    %1871 = vmatpush1.msra.mxu0 0.0
    %1872 = vmatprep.subr.mxu0 0.0
    %1873 = vmatpush1.msra.mxu0 0.0
    %1874 = vmatprep.mubr.f32.mxu0 0.0
    %1875 = vmatmul.mubr.f32.gmra.mrb[0].mxu0 %v1043
    %v1876 = vpop.f32.mrb[0].mxu0
    %v1877 = vadd.f32 %v1809, %v1876
    %v1878 = vpop.f32.mrb[0].mxu0
    %1879 = vmatprep.mubr.f32.mxu0 0.0
    %1880 = vmatmul.mubr.f32.gmra.mrb[0].mxu0 %v1788
    %v1881 = vpop.f32.mrb[0].mxu0
    %v1882 = vadd.f32 %v1809, %v1881
    %v1883 = vpop.f32.mrb[0].mxu0
    %1884 = vdwg.mxu0
    %v1885 = vadd.f32 %v166, %v1877
    %v1886 = vadd.f32 %v167, %v1882
    %v1887 = vsel %vm126, %v1885, 0.0
    %1888 = vadd.xlane.f32.xlu0 %v1887
    %v1889 = vpop.xlane.xlu0 %1888
    %v1890 = vsel %vm126, %v1886, 0.0
    %1891 = vadd.xlane.f32.xlu0 %v1890
    %v1892 = vpop.xlane.xlu0 %1891
    %v1893 = vmul.f32 %v1889, %v133
    %v1894 = vmul.f32 %v1892, %v133
    %v1895 = vsub.f32 %v1885, %v1893
    %v1896 = vsub.f32 %v1886, %v1894
    %v1897 = vmul.f32 %v1895, %v1895
    %v1898 = vmul.f32 %v1896, %v1896
    %v1899 = vsel %vm126, %v1897, 0.0
    %1900 = vadd.xlane.f32.xlu0 %v1899
    %v1901 = vpop.xlane.xlu0 %1900
    %v1902 = vsel %vm126, %v1898, 0.0
    %1903 = vadd.xlane.f32.xlu0 %v1902
    %v1904 = vpop.xlane.xlu0 %1903
    %v1905 = vmul.f32 %v1901, %v133
    %v1906 = vmul.f32 %v1904, %v133
    %v1907 = vadd.f32 %v1905, 1e-05
    %v1908 = vadd.f32 %v1906, 1e-05
    %v1909 = vrsqrt.pop %v1907
    %v1910 = vrsqrt.pop %v1908
    %v1911 = vmul.f32 %v1895, %v1909
    %v1912 = vmul.f32 %v1896, %v1910
    %v1913 = vld [vmem:[%s5 + $0x5] sm:$0x1]
    %v1914 = vlaneseq
    %v1915 = vshrl.u32 %v1914, 7
    %v1916 = vsub.s32 0, %v1915
    %v1917 = vrot.slane %v1913, %v1916
    %v1918 = vmul.f32 %v1911, %v1917
    %v1919 = vmul.f32 %v1912, %v1917
    %v1920 = vld [vmem:[%s5 + $0x6] sm:$0x1]
    %v1921 = vlaneseq
    %v1922 = vshrl.u32 %v1921, 7
    %v1923 = vsub.s32 0, %v1922
    %v1924 = vrot.slane %v1920, %v1923
    %v1925 = vadd.f32 %v1918, %v1924
    %v1926 = vadd.f32 %v1919, %v1924
    %v1927 = vld [vmem:[%s4] sm:$0xff]
    %v1928 = vld [vmem:[%s4 + $0x8] sm:$0xff]
    %v1929 = vld [vmem:[%s4 + $0x10] sm:$0xff]
    %v1930 = vld [vmem:[%s4 + $0x18] sm:$0xff]
    %v1931 = vld [vmem:[%s5 + $0x7] sm:$0x1]
    %v1932 = vlaneseq
    %v1933 = vshrl.u32 %v1932, 7
    %v1934 = vsub.s32 0, %v1933
    %v1935 = vrot.slane %v1931, %v1934
    %v1937 = vsel %vm126, %v1925, 0
    %v1940 = vsel %vm126, %v1926, 0
    %1942 = vmatprep.subr.mxu0 0.0
    %1943 = vmatpush1.msra.mxu0 %v1927
    %1944 = vmatprep.subr.mxu0 0.0
    %1945 = vmatpush1.msra.mxu0 %v1928
    %1946 = vmatprep.subr.mxu0 0.0
    %1947 = vmatpush1.msra.mxu0 %v1929
    %1948 = vmatprep.subr.mxu0 0.0
    %1949 = vmatpush1.msra.mxu0 %v1930
    %1950 = vmatprep.subr.mxu0 0.0
    %1951 = vmatpush1.msra.mxu0 0.0
    %1952 = vmatprep.subr.mxu0 0.0
    %1953 = vmatpush1.msra.mxu0 0.0
    %1954 = vmatprep.subr.mxu0 0.0
    %1955 = vmatpush1.msra.mxu0 0.0
    %1956 = vmatprep.subr.mxu0 0.0
    %1957 = vmatpush1.msra.mxu0 0.0
    %1958 = vmatprep.subr.mxu0 0.0
    %1959 = vmatpush1.msra.mxu0 0.0
    %1960 = vmatprep.subr.mxu0 0.0
    %1961 = vmatpush1.msra.mxu0 0.0
    %1962 = vmatprep.subr.mxu0 0.0
    %1963 = vmatpush1.msra.mxu0 0.0
    %1964 = vmatprep.subr.mxu0 0.0
    %1965 = vmatpush1.msra.mxu0 0.0
    %1966 = vmatprep.subr.mxu0 0.0
    %1967 = vmatpush1.msra.mxu0 0.0
    %1968 = vmatprep.subr.mxu0 0.0
    %1969 = vmatpush1.msra.mxu0 0.0
    %1970 = vmatprep.subr.mxu0 0.0
    %1971 = vmatpush1.msra.mxu0 0.0
    %1972 = vmatprep.subr.mxu0 0.0
    %1973 = vmatpush1.msra.mxu0 0.0
    %1974 = vmatprep.subr.mxu0 0.0
    %1975 = vmatpush1.msra.mxu0 0.0
    %1976 = vmatprep.subr.mxu0 0.0
    %1977 = vmatpush1.msra.mxu0 0.0
    %1978 = vmatprep.subr.mxu0 0.0
    %1979 = vmatpush1.msra.mxu0 0.0
    %1980 = vmatprep.subr.mxu0 0.0
    %1981 = vmatpush1.msra.mxu0 0.0
    %1982 = vmatprep.subr.mxu0 0.0
    %1983 = vmatpush1.msra.mxu0 0.0
    %1984 = vmatprep.subr.mxu0 0.0
    %1985 = vmatpush1.msra.mxu0 0.0
    %1986 = vmatprep.subr.mxu0 0.0
    %1987 = vmatpush1.msra.mxu0 0.0
    %1988 = vmatprep.subr.mxu0 0.0
    %1989 = vmatpush1.msra.mxu0 0.0
    %1990 = vmatprep.subr.mxu0 0.0
    %1991 = vmatpush1.msra.mxu0 0.0
    %1992 = vmatprep.subr.mxu0 0.0
    %1993 = vmatpush1.msra.mxu0 0.0
    %1994 = vmatprep.subr.mxu0 0.0
    %1995 = vmatpush1.msra.mxu0 0.0
    %1996 = vmatprep.subr.mxu0 0.0
    %1997 = vmatpush1.msra.mxu0 0.0
    %1998 = vmatprep.subr.mxu0 0.0
    %1999 = vmatpush1.msra.mxu0 0.0
    %2000 = vmatprep.subr.mxu0 0.0
    %2001 = vmatpush1.msra.mxu0 0.0
    %2002 = vmatprep.subr.mxu0 0.0
    %2003 = vmatpush1.msra.mxu0 0.0
    %2004 = vmatprep.subr.mxu0 0.0
    %2005 = vmatpush1.msra.mxu0 0.0
    %2006 = vmatprep.mubr.f32.mxu0 0.0
    %2007 = vmatmul.mubr.f32.gmra.mrb[0].mxu0 %v1937
    %v2008 = vpop.f32.mrb[0].mxu0
    %v2009 = vadd.f32 %v1935, %v2008
    %v2010 = vpop.f32.mrb[0].mxu0
    %2011 = vmatprep.mubr.f32.mxu0 0.0
    %2012 = vmatmul.mubr.f32.gmra.mrb[0].mxu0 %v1940
    %v2013 = vpop.f32.mrb[0].mxu0
    %v2014 = vadd.f32 %v1935, %v2013
    %v2015 = vpop.f32.mrb[0].mxu0
    %2016 = vdwg.mxu0
    %v2017 = vmul.f32 %v2009, 0.5
    %v2018 = vmul.f32 %v2014, 0.5
    %v2019 = vmul.f32 %v2009, 0.70710677
    %v2020 = vmul.f32 %v2014, 0.70710677
    %v2021 = verf.f32.pop %v2019
    %v2022 = verf.f32.pop %v2020
    %v2023 = vadd.f32 %v2021, 1.0
    %v2024 = vadd.f32 %v2022, 1.0
    %v2025 = vmul.f32 %v2017, %v2023
    %v2026 = vmul.f32 %v2018, %v2024
    %v2027 = vld [vmem:[%s3 + $0xf8] sm:$0xff]
    %v2028 = vld [vmem:[%s3 + $0x100] sm:$0xff]
    %v2029 = vld [vmem:[%s3 + $0x108] sm:$0xff]
    %v2030 = vld [vmem:[%s3 + $0x110] sm:$0xff]
    %v2031 = vld [vmem:[%s3 + $0x118] sm:$0xff]
    %v2032 = vld [vmem:[%s3 + $0x120] sm:$0xff]
    %v2033 = vld [vmem:[%s3 + $0x128] sm:$0xff]
    %v2034 = vld [vmem:[%s3 + $0x130] sm:$0xff]
    %v2035 = vld [vmem:[%s3 + $0x138] sm:$0xff]
    %v2036 = vld [vmem:[%s3 + $0x140] sm:$0xff]
    %v2037 = vld [vmem:[%s3 + $0x148] sm:$0xff]
    %v2038 = vld [vmem:[%s3 + $0x150] sm:$0xff]
    %v2039 = vld [vmem:[%s3 + $0x158] sm:$0xff]
    %v2040 = vld [vmem:[%s3 + $0x160] sm:$0xff]
    %v2041 = vld [vmem:[%s3 + $0x168] sm:$0xff]
    %v2042 = vld [vmem:[%s3 + $0x170] sm:$0xff]
    %v2043 = vld [vmem:[%s5 + $0x8] sm:$0x1]
    %v2044 = vlaneseq
    %v2045 = vshrl.u32 %v2044, 7
    %v2046 = vsub.s32 0, %v2045
    %v2047 = vrot.slane %v2043, %v2046
    %2048 = vmatprep.subr.mxu0 0.0
    %2049 = vmatpush1.msra.mxu0 %v2027
    %2050 = vmatprep.subr.mxu0 0.0
    %2051 = vmatpush1.msra.mxu0 %v2028
    %2052 = vmatprep.subr.mxu0 0.0
    %2053 = vmatpush1.msra.mxu0 %v2029
    %2054 = vmatprep.subr.mxu0 0.0
    %2055 = vmatpush1.msra.mxu0 %v2030
    %2056 = vmatprep.subr.mxu0 0.0
    %2057 = vmatpush1.msra.mxu0 %v2031
    %2058 = vmatprep.subr.mxu0 0.0
    %2059 = vmatpush1.msra.mxu0 %v2032
    %2060 = vmatprep.subr.mxu0 0.0
    %2061 = vmatpush1.msra.mxu0 %v2033
    %2062 = vmatprep.subr.mxu0 0.0
    %2063 = vmatpush1.msra.mxu0 %v2034
    %2064 = vmatprep.subr.mxu0 0.0
    %2065 = vmatpush1.msra.mxu0 %v2035
    %2066 = vmatprep.subr.mxu0 0.0
    %2067 = vmatpush1.msra.mxu0 %v2036
    %2068 = vmatprep.subr.mxu0 0.0
    %2069 = vmatpush1.msra.mxu0 %v2037
    %2070 = vmatprep.subr.mxu0 0.0
    %2071 = vmatpush1.msra.mxu0 %v2038
    %2072 = vmatprep.subr.mxu0 0.0
    %2073 = vmatpush1.msra.mxu0 %v2039
    %2074 = vmatprep.subr.mxu0 0.0
    %2075 = vmatpush1.msra.mxu0 %v2040
    %2076 = vmatprep.subr.mxu0 0.0
    %2077 = vmatpush1.msra.mxu0 %v2041
    %2078 = vmatprep.subr.mxu0 0.0
    %2079 = vmatpush1.msra.mxu0 %v2042
    %2080 = vmatprep.subr.mxu0 0.0
    %2081 = vmatpush1.msra.mxu0 0.0
    %2082 = vmatprep.subr.mxu0 0.0
    %2083 = vmatpush1.msra.mxu0 0.0
    %2084 = vmatprep.subr.mxu0 0.0
    %2085 = vmatpush1.msra.mxu0 0.0
    %2086 = vmatprep.subr.mxu0 0.0
    %2087 = vmatpush1.msra.mxu0 0.0
    %2088 = vmatprep.subr.mxu0 0.0
    %2089 = vmatpush1.msra.mxu0 0.0
    %2090 = vmatprep.subr.mxu0 0.0
    %2091 = vmatpush1.msra.mxu0 0.0
    %2092 = vmatprep.subr.mxu0 0.0
    %2093 = vmatpush1.msra.mxu0 0.0
    %2094 = vmatprep.subr.mxu0 0.0
    %2095 = vmatpush1.msra.mxu0 0.0
    %2096 = vmatprep.subr.mxu0 0.0
    %2097 = vmatpush1.msra.mxu0 0.0
    %2098 = vmatprep.subr.mxu0 0.0
    %2099 = vmatpush1.msra.mxu0 0.0
    %2100 = vmatprep.subr.mxu0 0.0
    %2101 = vmatpush1.msra.mxu0 0.0
    %2102 = vmatprep.subr.mxu0 0.0
    %2103 = vmatpush1.msra.mxu0 0.0
    %2104 = vmatprep.subr.mxu0 0.0
    %2105 = vmatpush1.msra.mxu0 0.0
    %2106 = vmatprep.subr.mxu0 0.0
    %2107 = vmatpush1.msra.mxu0 0.0
    %2108 = vmatprep.subr.mxu0 0.0
    %2109 = vmatpush1.msra.mxu0 0.0
    %2110 = vmatprep.subr.mxu0 0.0
    %2111 = vmatpush1.msra.mxu0 0.0
    %2112 = vmatprep.mubr.f32.mxu0 0.0
    %2113 = vmatmul.mubr.f32.gmra.mrb[0].mxu0 %v2025
    %v2114 = vpop.f32.mrb[0].mxu0
    %v2115 = vadd.f32 %v2047, %v2114
    %v2116 = vpop.f32.mrb[0].mxu0
    %2117 = vmatprep.mubr.f32.mxu0 0.0
    %2118 = vmatmul.mubr.f32.gmra.mrb[0].mxu0 %v2026
    %v2119 = vpop.f32.mrb[0].mxu0
    %v2120 = vadd.f32 %v2047, %v2119
    %v2121 = vpop.f32.mrb[0].mxu0
    %2122 = vdwg.mxu0
    %v2123 = vadd.f32 %v1885, %v2115
    %v2124 = vadd.f32 %v1886, %v2120
    %v2125 = vsel %vm126, %v2123, 0.0
    %2126 = vadd.xlane.f32.xlu0 %v2125
    %v2127 = vpop.xlane.xlu0 %2126
    %v2128 = vsel %vm126, %v2124, 0.0
    %2129 = vadd.xlane.f32.xlu0 %v2128
    %v2130 = vpop.xlane.xlu0 %2129
    %v2131 = vmul.f32 %v2127, %v133
    %v2132 = vmul.f32 %v2130, %v133
    %v2133 = vsub.f32 %v2123, %v2131
    %v2134 = vsub.f32 %v2124, %v2132
    %v2135 = vmul.f32 %v2133, %v2133
    %v2136 = vmul.f32 %v2134, %v2134
    %v2137 = vsel %vm126, %v2135, 0.0
    %2138 = vadd.xlane.f32.xlu0 %v2137
    %v2139 = vpop.xlane.xlu0 %2138
    %v2140 = vsel %vm126, %v2136, 0.0
    %2141 = vadd.xlane.f32.xlu0 %v2140
    %v2142 = vpop.xlane.xlu0 %2141
    %v2143 = vmul.f32 %v2139, %v133
    %v2144 = vmul.f32 %v2142, %v133
    %v2145 = vadd.f32 %v2143, 1e-05
    %v2146 = vadd.f32 %v2144, 1e-05
    %v2147 = vrsqrt.pop %v2145
    %v2148 = vrsqrt.pop %v2146
    %v2149 = vmul.f32 %v2133, %v2147
    %v2150 = vmul.f32 %v2134, %v2148
    %v2151 = vld [vmem:[%s5 + $0x9] sm:$0x1]
    %v2152 = vlaneseq
    %v2153 = vshrl.u32 %v2152, 7
    %v2154 = vsub.s32 0, %v2153
    %v2155 = vrot.slane %v2151, %v2154
    %v2156 = vmul.f32 %v2149, %v2155
    %v2157 = vmul.f32 %v2150, %v2155
    %v2158 = vld [vmem:[%s5 + $0xa] sm:$0x1]
    %v2159 = vlaneseq
    %v2160 = vshrl.u32 %v2159, 7
    %v2161 = vsub.s32 0, %v2160
    %v2162 = vrot.slane %v2158, %v2161
    %v2163 = vadd.f32 %v2156, %v2162
    %v2164 = vadd.f32 %v2157, %v2162
    %v2165 = vadd.f32 %v2163, %v166
    %v2166 = vadd.f32 %v2164, %v167
    %v2167 = vld [vmem:[%s4 + $0x20] sm:$0xff]
    %v2168 = vld [vmem:[%s4 + $0x28] sm:$0xff]
    %v2169 = vld [vmem:[%s4 + $0x30] sm:$0xff]
    %v2170 = vld [vmem:[%s4 + $0x38] sm:$0xff]
    %v2171 = vld [vmem:[%s5 + $0xb] sm:$0x1]
    %v2172 = vlaneseq
    %v2173 = vshrl.u32 %v2172, 7
    %v2174 = vsub.s32 0, %v2173
    %v2175 = vrot.slane %v2171, %v2174
    %v2177 = vsel %vm126, %v2165, 0
    %v2180 = vsel %vm126, %v2166, 0
    %2182 = vmatprep.subr.mxu0 0.0
    %2183 = vmatpush1.msra.mxu0 %v2167
    %2184 = vmatprep.subr.mxu0 0.0
    %2185 = vmatpush1.msra.mxu0 %v2168
    %2186 = vmatprep.subr.mxu0 0.0
    %2187 = vmatpush1.msra.mxu0 %v2169
    %2188 = vmatprep.subr.mxu0 0.0
    %2189 = vmatpush1.msra.mxu0 %v2170
    %2190 = vmatprep.subr.mxu0 0.0
    %2191 = vmatpush1.msra.mxu0 0.0
    %2192 = vmatprep.subr.mxu0 0.0
    %2193 = vmatpush1.msra.mxu0 0.0
    %2194 = vmatprep.subr.mxu0 0.0
    %2195 = vmatpush1.msra.mxu0 0.0
    %2196 = vmatprep.subr.mxu0 0.0
    %2197 = vmatpush1.msra.mxu0 0.0
    %2198 = vmatprep.subr.mxu0 0.0
    %2199 = vmatpush1.msra.mxu0 0.0
    %2200 = vmatprep.subr.mxu0 0.0
    %2201 = vmatpush1.msra.mxu0 0.0
    %2202 = vmatprep.subr.mxu0 0.0
    %2203 = vmatpush1.msra.mxu0 0.0
    %2204 = vmatprep.subr.mxu0 0.0
    %2205 = vmatpush1.msra.mxu0 0.0
    %2206 = vmatprep.subr.mxu0 0.0
    %2207 = vmatpush1.msra.mxu0 0.0
    %2208 = vmatprep.subr.mxu0 0.0
    %2209 = vmatpush1.msra.mxu0 0.0
    %2210 = vmatprep.subr.mxu0 0.0
    %2211 = vmatpush1.msra.mxu0 0.0
    %2212 = vmatprep.subr.mxu0 0.0
    %2213 = vmatpush1.msra.mxu0 0.0
    %2214 = vmatprep.subr.mxu0 0.0
    %2215 = vmatpush1.msra.mxu0 0.0
    %2216 = vmatprep.subr.mxu0 0.0
    %2217 = vmatpush1.msra.mxu0 0.0
    %2218 = vmatprep.subr.mxu0 0.0
    %2219 = vmatpush1.msra.mxu0 0.0
    %2220 = vmatprep.subr.mxu0 0.0
    %2221 = vmatpush1.msra.mxu0 0.0
    %2222 = vmatprep.subr.mxu0 0.0
    %2223 = vmatpush1.msra.mxu0 0.0
    %2224 = vmatprep.subr.mxu0 0.0
    %2225 = vmatpush1.msra.mxu0 0.0
    %2226 = vmatprep.subr.mxu0 0.0
    %2227 = vmatpush1.msra.mxu0 0.0
    %2228 = vmatprep.subr.mxu0 0.0
    %2229 = vmatpush1.msra.mxu0 0.0
    %2230 = vmatprep.subr.mxu0 0.0
    %2231 = vmatpush1.msra.mxu0 0.0
    %2232 = vmatprep.subr.mxu0 0.0
    %2233 = vmatpush1.msra.mxu0 0.0
    %2234 = vmatprep.subr.mxu0 0.0
    %2235 = vmatpush1.msra.mxu0 0.0
    %2236 = vmatprep.subr.mxu0 0.0
    %2237 = vmatpush1.msra.mxu0 0.0
    %2238 = vmatprep.subr.mxu0 0.0
    %2239 = vmatpush1.msra.mxu0 0.0
    %2240 = vmatprep.subr.mxu0 0.0
    %2241 = vmatpush1.msra.mxu0 0.0
    %2242 = vmatprep.subr.mxu0 0.0
    %2243 = vmatpush1.msra.mxu0 0.0
    %2244 = vmatprep.subr.mxu0 0.0
    %2245 = vmatpush1.msra.mxu0 0.0
    %2246 = vmatprep.mubr.f32.mxu0 0.0
    %2247 = vmatmul.mubr.f32.gmra.mrb[0].mxu0 %v2177
    %v2248 = vpop.f32.mrb[0].mxu0
    %v2249 = vadd.f32 %v2175, %v2248
    %v2250 = vpop.f32.mrb[0].mxu0
    %2251 = vmatprep.mubr.f32.mxu0 0.0
    %2252 = vmatmul.mubr.f32.gmra.mrb[0].mxu0 %v2180
    %v2253 = vpop.f32.mrb[0].mxu0
    %v2254 = vadd.f32 %v2175, %v2253
    %v2255 = vpop.f32.mrb[0].mxu0
    %2256 = vdwg.mxu0
    %2258 = vrot.lane.b32.xlu0 %v2249, 96
    %v2259 = vpop.permute.xlu0 %2258
    %v2260 = vsel %vm395, %v2249, 0
    %v2262 = vsel %vm395, %v2259, 0
    %2264 = vmatprep.subr.mxu0 0.0
    %2265 = vmatpush1.xpose.msra.mxu0 %v2262
    %2266 = vmatprep.subr.mxu0 0.0
    %2267 = vmatpush1.xpose.msra.mxu0 0.0
    %2268 = vmatprep.subr.mxu0 0.0
    %2269 = vmatpush1.xpose.msra.mxu0 0.0
    %2270 = vmatprep.subr.mxu0 0.0
    %2271 = vmatpush1.xpose.msra.mxu0 0.0
    %2272 = vmatprep.subr.mxu0 0.0
    %2273 = vmatpush1.xpose.msra.mxu0 0.0
    %2274 = vmatprep.subr.mxu0 0.0
    %2275 = vmatpush1.xpose.msra.mxu0 0.0
    %2276 = vmatprep.subr.mxu0 0.0
    %2277 = vmatpush1.xpose.msra.mxu0 0.0
    %2278 = vmatprep.subr.mxu0 0.0
    %2279 = vmatpush1.xpose.msra.mxu0 0.0
    %2280 = vmatprep.subr.mxu0 0.0
    %2281 = vmatpush1.xpose.msra.mxu0 0.0
    %2282 = vmatprep.subr.mxu0 0.0
    %2283 = vmatpush1.xpose.msra.mxu0 0.0
    %2284 = vmatprep.subr.mxu0 0.0
    %2285 = vmatpush1.xpose.msra.mxu0 0.0
    %2286 = vmatprep.subr.mxu0 0.0
    %2287 = vmatpush1.xpose.msra.mxu0 0.0
    %2288 = vmatprep.subr.mxu0 0.0
    %2289 = vmatpush1.xpose.msra.mxu0 0.0
    %2290 = vmatprep.subr.mxu0 0.0
    %2291 = vmatpush1.xpose.msra.mxu0 0.0
    %2292 = vmatprep.subr.mxu0 0.0
    %2293 = vmatpush1.xpose.msra.mxu0 0.0
    %2294 = vmatprep.subr.mxu0 0.0
    %2295 = vmatpush1.xpose.msra.mxu0 0.0
    %2296 = vmatprep.subr.mxu0 0.0
    %2297 = vmatpush1.xpose.msra.mxu0 0.0
    %2298 = vmatprep.subr.mxu0 0.0
    %2299 = vmatpush1.xpose.msra.mxu0 0.0
    %2300 = vmatprep.subr.mxu0 0.0
    %2301 = vmatpush1.xpose.msra.mxu0 0.0
    %2302 = vmatprep.subr.mxu0 0.0
    %2303 = vmatpush1.xpose.msra.mxu0 0.0
    %2304 = vmatprep.subr.mxu0 0.0
    %2305 = vmatpush1.xpose.msra.mxu0 0.0
    %2306 = vmatprep.subr.mxu0 0.0
    %2307 = vmatpush1.xpose.msra.mxu0 0.0
    %2308 = vmatprep.subr.mxu0 0.0
    %2309 = vmatpush1.xpose.msra.mxu0 0.0
    %2310 = vmatprep.subr.mxu0 0.0
    %2311 = vmatpush1.xpose.msra.mxu0 0.0
    %2312 = vmatprep.subr.mxu0 0.0
    %2313 = vmatpush1.xpose.msra.mxu0 0.0
    %2314 = vmatprep.subr.mxu0 0.0
    %2315 = vmatpush1.xpose.msra.mxu0 0.0
    %2316 = vmatprep.subr.mxu0 0.0
    %2317 = vmatpush1.xpose.msra.mxu0 0.0
    %2318 = vmatprep.subr.mxu0 0.0
    %2319 = vmatpush1.xpose.msra.mxu0 0.0
    %2320 = vmatprep.subr.mxu0 0.0
    %2321 = vmatpush1.xpose.msra.mxu0 0.0
    %2322 = vmatprep.subr.mxu0 0.0
    %2323 = vmatpush1.xpose.msra.mxu0 0.0
    %2324 = vmatprep.subr.mxu0 0.0
    %2325 = vmatpush1.xpose.msra.mxu0 0.0
    %2326 = vmatprep.subr.mxu0 0.0
    %2327 = vmatpush1.xpose.msra.mxu0 0.0
    %2328 = vmatprep.mubr.f32.mxu0 0.0
    %2329 = vmatmul.mubr.f32.gmra.mrb[0].mxu0 %v2260
    %v2330 = vpop.f32.mrb[0].mxu0
    %v2331 = vadd.f32 0.0, %v2330
    %v2332 = vpop.f32.mrb[0].mxu0
    %2333 = vdwg.mxu0
    %v2334 = vsel %vm395, %v2331, -inf
    %2335 = vmax.xlane.f32.xlu0 %v2334
    %v2336 = vpop.xlane.xlu0 %2335
    %v2337 = vsub.f32 %v2331, %v2336
    %v2338 = vmul.f32 %v2337, 1.442695
    %v2339 = vpow.pop %v2338
    %v2340 = vsel %vm395, %v2339, 0.0
    %2341 = vadd.xlane.f32.xlu0 %v2340
    %v2342 = vpop.xlane.xlu0 %2341
    %v2343 = vrcp.pop %v2342
    %v2344 = vmul.f32 %v2339, %v2343
    %2345 = vrot.lane.b32.xlu0 %v2249, 64
    %v2346 = vpop.permute.xlu0 %2345
    %v2349 = vsel %vm395, %v2344, 0
    %2351 = vmatprep.subr.mxu0 0.0
    %2352 = vmatpush1.msra.mxu0 %v2346
    %2353 = vmatprep.subr.mxu0 0.0
    %2354 = vmatpush1.msra.mxu0 0.0
    %2355 = vmatprep.subr.mxu0 0.0
    %2356 = vmatpush1.msra.mxu0 0.0
    %2357 = vmatprep.subr.mxu0 0.0
    %2358 = vmatpush1.msra.mxu0 0.0
    %2359 = vmatprep.subr.mxu0 0.0
    %2360 = vmatpush1.msra.mxu0 0.0
    %2361 = vmatprep.subr.mxu0 0.0
    %2362 = vmatpush1.msra.mxu0 0.0
    %2363 = vmatprep.subr.mxu0 0.0
    %2364 = vmatpush1.msra.mxu0 0.0
    %2365 = vmatprep.subr.mxu0 0.0
    %2366 = vmatpush1.msra.mxu0 0.0
    %2367 = vmatprep.subr.mxu0 0.0
    %2368 = vmatpush1.msra.mxu0 0.0
    %2369 = vmatprep.subr.mxu0 0.0
    %2370 = vmatpush1.msra.mxu0 0.0
    %2371 = vmatprep.subr.mxu0 0.0
    %2372 = vmatpush1.msra.mxu0 0.0
    %2373 = vmatprep.subr.mxu0 0.0
    %2374 = vmatpush1.msra.mxu0 0.0
    %2375 = vmatprep.subr.mxu0 0.0
    %2376 = vmatpush1.msra.mxu0 0.0
    %2377 = vmatprep.subr.mxu0 0.0
    %2378 = vmatpush1.msra.mxu0 0.0
    %2379 = vmatprep.subr.mxu0 0.0
    %2380 = vmatpush1.msra.mxu0 0.0
    %2381 = vmatprep.subr.mxu0 0.0
    %2382 = vmatpush1.msra.mxu0 0.0
    %2383 = vmatprep.subr.mxu0 0.0
    %2384 = vmatpush1.msra.mxu0 0.0
    %2385 = vmatprep.subr.mxu0 0.0
    %2386 = vmatpush1.msra.mxu0 0.0
    %2387 = vmatprep.subr.mxu0 0.0
    %2388 = vmatpush1.msra.mxu0 0.0
    %2389 = vmatprep.subr.mxu0 0.0
    %2390 = vmatpush1.msra.mxu0 0.0
    %2391 = vmatprep.subr.mxu0 0.0
    %2392 = vmatpush1.msra.mxu0 0.0
    %2393 = vmatprep.subr.mxu0 0.0
    %2394 = vmatpush1.msra.mxu0 0.0
    %2395 = vmatprep.subr.mxu0 0.0
    %2396 = vmatpush1.msra.mxu0 0.0
    %2397 = vmatprep.subr.mxu0 0.0
    %2398 = vmatpush1.msra.mxu0 0.0
    %2399 = vmatprep.subr.mxu0 0.0
    %2400 = vmatpush1.msra.mxu0 0.0
    %2401 = vmatprep.subr.mxu0 0.0
    %2402 = vmatpush1.msra.mxu0 0.0
    %2403 = vmatprep.subr.mxu0 0.0
    %2404 = vmatpush1.msra.mxu0 0.0
    %2405 = vmatprep.subr.mxu0 0.0
    %2406 = vmatpush1.msra.mxu0 0.0
    %2407 = vmatprep.subr.mxu0 0.0
    %2408 = vmatpush1.msra.mxu0 0.0
    %2409 = vmatprep.subr.mxu0 0.0
    %2410 = vmatpush1.msra.mxu0 0.0
    %2411 = vmatprep.subr.mxu0 0.0
    %2412 = vmatpush1.msra.mxu0 0.0
    %2413 = vmatprep.subr.mxu0 0.0
    %2414 = vmatpush1.msra.mxu0 0.0
    %2415 = vmatprep.mubr.f32.mxu0 0.0
    %2416 = vmatmul.mubr.f32.gmra.mrb[0].mxu0 %v2349
    %v2417 = vpop.f32.mrb[0].mxu0
    %v2418 = vadd.f32 0.0, %v2417
    %v2419 = vpop.f32.mrb[0].mxu0
    %2420 = vdwg.mxu0
    %2421 = vrot.lane.b32.xlu0 %v2249, 120
    %v2422 = vpop.permute.xlu0 %2421
    %2423 = vrot.lane.b32.xlu0 %v2249, 88
    %v2424 = vpop.permute.xlu0 %2423
    %v2425 = vsel %vm395, %v2422, 0
    %v2427 = vsel %vm395, %v2424, 0
    %2429 = vmatprep.subr.mxu0 0.0
    %2430 = vmatpush1.xpose.msra.mxu0 %v2427
    %2431 = vmatprep.subr.mxu0 0.0
    %2432 = vmatpush1.xpose.msra.mxu0 0.0
    %2433 = vmatprep.subr.mxu0 0.0
    %2434 = vmatpush1.xpose.msra.mxu0 0.0
    %2435 = vmatprep.subr.mxu0 0.0
    %2436 = vmatpush1.xpose.msra.mxu0 0.0
    %2437 = vmatprep.subr.mxu0 0.0
    %2438 = vmatpush1.xpose.msra.mxu0 0.0
    %2439 = vmatprep.subr.mxu0 0.0
    %2440 = vmatpush1.xpose.msra.mxu0 0.0
    %2441 = vmatprep.subr.mxu0 0.0
    %2442 = vmatpush1.xpose.msra.mxu0 0.0
    %2443 = vmatprep.subr.mxu0 0.0
    %2444 = vmatpush1.xpose.msra.mxu0 0.0
    %2445 = vmatprep.subr.mxu0 0.0
    %2446 = vmatpush1.xpose.msra.mxu0 0.0
    %2447 = vmatprep.subr.mxu0 0.0
    %2448 = vmatpush1.xpose.msra.mxu0 0.0
    %2449 = vmatprep.subr.mxu0 0.0
    %2450 = vmatpush1.xpose.msra.mxu0 0.0
    %2451 = vmatprep.subr.mxu0 0.0
    %2452 = vmatpush1.xpose.msra.mxu0 0.0
    %2453 = vmatprep.subr.mxu0 0.0
    %2454 = vmatpush1.xpose.msra.mxu0 0.0
    %2455 = vmatprep.subr.mxu0 0.0
    %2456 = vmatpush1.xpose.msra.mxu0 0.0
    %2457 = vmatprep.subr.mxu0 0.0
    %2458 = vmatpush1.xpose.msra.mxu0 0.0
    %2459 = vmatprep.subr.mxu0 0.0
    %2460 = vmatpush1.xpose.msra.mxu0 0.0
    %2461 = vmatprep.subr.mxu0 0.0
    %2462 = vmatpush1.xpose.msra.mxu0 0.0
    %2463 = vmatprep.subr.mxu0 0.0
    %2464 = vmatpush1.xpose.msra.mxu0 0.0
    %2465 = vmatprep.subr.mxu0 0.0
    %2466 = vmatpush1.xpose.msra.mxu0 0.0
    %2467 = vmatprep.subr.mxu0 0.0
    %2468 = vmatpush1.xpose.msra.mxu0 0.0
    %2469 = vmatprep.subr.mxu0 0.0
    %2470 = vmatpush1.xpose.msra.mxu0 0.0
    %2471 = vmatprep.subr.mxu0 0.0
    %2472 = vmatpush1.xpose.msra.mxu0 0.0
    %2473 = vmatprep.subr.mxu0 0.0
    %2474 = vmatpush1.xpose.msra.mxu0 0.0
    %2475 = vmatprep.subr.mxu0 0.0
    %2476 = vmatpush1.xpose.msra.mxu0 0.0
    %2477 = vmatprep.subr.mxu0 0.0
    %2478 = vmatpush1.xpose.msra.mxu0 0.0
    %2479 = vmatprep.subr.mxu0 0.0
    %2480 = vmatpush1.xpose.msra.mxu0 0.0
    %2481 = vmatprep.subr.mxu0 0.0
    %2482 = vmatpush1.xpose.msra.mxu0 0.0
    %2483 = vmatprep.subr.mxu0 0.0
    %2484 = vmatpush1.xpose.msra.mxu0 0.0
    %2485 = vmatprep.subr.mxu0 0.0
    %2486 = vmatpush1.xpose.msra.mxu0 0.0
    %2487 = vmatprep.subr.mxu0 0.0
    %2488 = vmatpush1.xpose.msra.mxu0 0.0
    %2489 = vmatprep.subr.mxu0 0.0
    %2490 = vmatpush1.xpose.msra.mxu0 0.0
    %2491 = vmatprep.subr.mxu0 0.0
    %2492 = vmatpush1.xpose.msra.mxu0 0.0
    %2493 = vmatprep.mubr.f32.mxu0 0.0
    %2494 = vmatmul.mubr.f32.gmra.mrb[0].mxu0 %v2425
    %v2495 = vpop.f32.mrb[0].mxu0
    %v2496 = vadd.f32 0.0, %v2495
    %v2497 = vpop.f32.mrb[0].mxu0
    %2498 = vdwg.mxu0
    %v2499 = vsel %vm395, %v2496, -inf
    %2500 = vmax.xlane.f32.xlu0 %v2499
    %v2501 = vpop.xlane.xlu0 %2500
    %v2502 = vsub.f32 %v2496, %v2501
    %v2503 = vmul.f32 %v2502, 1.442695
    %v2504 = vpow.pop %v2503
    %v2505 = vsel %vm395, %v2504, 0.0
    %2506 = vadd.xlane.f32.xlu0 %v2505
    %v2507 = vpop.xlane.xlu0 %2506
    %v2508 = vrcp.pop %v2507
    %v2509 = vmul.f32 %v2504, %v2508
    %2510 = vrot.lane.b32.xlu0 %v2249, 56
    %v2511 = vpop.permute.xlu0 %2510
    %v2514 = vsel %vm395, %v2509, 0
    %2516 = vmatprep.subr.mxu0 0.0
    %2517 = vmatpush1.msra.mxu0 %v2511
    %2518 = vmatprep.subr.mxu0 0.0
    %2519 = vmatpush1.msra.mxu0 0.0
    %2520 = vmatprep.subr.mxu0 0.0
    %2521 = vmatpush1.msra.mxu0 0.0
    %2522 = vmatprep.subr.mxu0 0.0
    %2523 = vmatpush1.msra.mxu0 0.0
    %2524 = vmatprep.subr.mxu0 0.0
    %2525 = vmatpush1.msra.mxu0 0.0
    %2526 = vmatprep.subr.mxu0 0.0
    %2527 = vmatpush1.msra.mxu0 0.0
    %2528 = vmatprep.subr.mxu0 0.0
    %2529 = vmatpush1.msra.mxu0 0.0
    %2530 = vmatprep.subr.mxu0 0.0
    %2531 = vmatpush1.msra.mxu0 0.0
    %2532 = vmatprep.subr.mxu0 0.0
    %2533 = vmatpush1.msra.mxu0 0.0
    %2534 = vmatprep.subr.mxu0 0.0
    %2535 = vmatpush1.msra.mxu0 0.0
    %2536 = vmatprep.subr.mxu0 0.0
    %2537 = vmatpush1.msra.mxu0 0.0
    %2538 = vmatprep.subr.mxu0 0.0
    %2539 = vmatpush1.msra.mxu0 0.0
    %2540 = vmatprep.subr.mxu0 0.0
    %2541 = vmatpush1.msra.mxu0 0.0
    %2542 = vmatprep.subr.mxu0 0.0
    %2543 = vmatpush1.msra.mxu0 0.0
    %2544 = vmatprep.subr.mxu0 0.0
    %2545 = vmatpush1.msra.mxu0 0.0
    %2546 = vmatprep.subr.mxu0 0.0
    %2547 = vmatpush1.msra.mxu0 0.0
    %2548 = vmatprep.subr.mxu0 0.0
    %2549 = vmatpush1.msra.mxu0 0.0
    %2550 = vmatprep.subr.mxu0 0.0
    %2551 = vmatpush1.msra.mxu0 0.0
    %2552 = vmatprep.subr.mxu0 0.0
    %2553 = vmatpush1.msra.mxu0 0.0
    %2554 = vmatprep.subr.mxu0 0.0
    %2555 = vmatpush1.msra.mxu0 0.0
    %2556 = vmatprep.subr.mxu0 0.0
    %2557 = vmatpush1.msra.mxu0 0.0
    %2558 = vmatprep.subr.mxu0 0.0
    %2559 = vmatpush1.msra.mxu0 0.0
    %2560 = vmatprep.subr.mxu0 0.0
    %2561 = vmatpush1.msra.mxu0 0.0
    %2562 = vmatprep.subr.mxu0 0.0
    %2563 = vmatpush1.msra.mxu0 0.0
    %2564 = vmatprep.subr.mxu0 0.0
    %2565 = vmatpush1.msra.mxu0 0.0
    %2566 = vmatprep.subr.mxu0 0.0
    %2567 = vmatpush1.msra.mxu0 0.0
    %2568 = vmatprep.subr.mxu0 0.0
    %2569 = vmatpush1.msra.mxu0 0.0
    %2570 = vmatprep.subr.mxu0 0.0
    %2571 = vmatpush1.msra.mxu0 0.0
    %2572 = vmatprep.subr.mxu0 0.0
    %2573 = vmatpush1.msra.mxu0 0.0
    %2574 = vmatprep.subr.mxu0 0.0
    %2575 = vmatpush1.msra.mxu0 0.0
    %2576 = vmatprep.subr.mxu0 0.0
    %2577 = vmatpush1.msra.mxu0 0.0
    %2578 = vmatprep.subr.mxu0 0.0
    %2579 = vmatpush1.msra.mxu0 0.0
    %2580 = vmatprep.mubr.f32.mxu0 0.0
    %2581 = vmatmul.mubr.f32.gmra.mrb[0].mxu0 %v2514
    %v2582 = vpop.f32.mrb[0].mxu0
    %v2583 = vadd.f32 0.0, %v2582
    %v2584 = vpop.f32.mrb[0].mxu0
    %2585 = vdwg.mxu0
    %2586 = vrot.lane.b32.xlu0 %v2249, 112
    %v2587 = vpop.permute.xlu0 %2586
    %2588 = vrot.lane.b32.xlu0 %v2249, 80
    %v2589 = vpop.permute.xlu0 %2588
    %v2590 = vsel %vm395, %v2587, 0
    %v2592 = vsel %vm395, %v2589, 0
    %2594 = vmatprep.subr.mxu0 0.0
    %2595 = vmatpush1.xpose.msra.mxu0 %v2592
    %2596 = vmatprep.subr.mxu0 0.0
    %2597 = vmatpush1.xpose.msra.mxu0 0.0
    %2598 = vmatprep.subr.mxu0 0.0
    %2599 = vmatpush1.xpose.msra.mxu0 0.0
    %2600 = vmatprep.subr.mxu0 0.0
    %2601 = vmatpush1.xpose.msra.mxu0 0.0
    %2602 = vmatprep.subr.mxu0 0.0
    %2603 = vmatpush1.xpose.msra.mxu0 0.0
    %2604 = vmatprep.subr.mxu0 0.0
    %2605 = vmatpush1.xpose.msra.mxu0 0.0
    %2606 = vmatprep.subr.mxu0 0.0
    %2607 = vmatpush1.xpose.msra.mxu0 0.0
    %2608 = vmatprep.subr.mxu0 0.0
    %2609 = vmatpush1.xpose.msra.mxu0 0.0
    %2610 = vmatprep.subr.mxu0 0.0
    %2611 = vmatpush1.xpose.msra.mxu0 0.0
    %2612 = vmatprep.subr.mxu0 0.0
    %2613 = vmatpush1.xpose.msra.mxu0 0.0
    %2614 = vmatprep.subr.mxu0 0.0
    %2615 = vmatpush1.xpose.msra.mxu0 0.0
    %2616 = vmatprep.subr.mxu0 0.0
    %2617 = vmatpush1.xpose.msra.mxu0 0.0
    %2618 = vmatprep.subr.mxu0 0.0
    %2619 = vmatpush1.xpose.msra.mxu0 0.0
    %2620 = vmatprep.subr.mxu0 0.0
    %2621 = vmatpush1.xpose.msra.mxu0 0.0
    %2622 = vmatprep.subr.mxu0 0.0
    %2623 = vmatpush1.xpose.msra.mxu0 0.0
    %2624 = vmatprep.subr.mxu0 0.0
    %2625 = vmatpush1.xpose.msra.mxu0 0.0
    %2626 = vmatprep.subr.mxu0 0.0
    %2627 = vmatpush1.xpose.msra.mxu0 0.0
    %2628 = vmatprep.subr.mxu0 0.0
    %2629 = vmatpush1.xpose.msra.mxu0 0.0
    %2630 = vmatprep.subr.mxu0 0.0
    %2631 = vmatpush1.xpose.msra.mxu0 0.0
    %2632 = vmatprep.subr.mxu0 0.0
    %2633 = vmatpush1.xpose.msra.mxu0 0.0
    %2634 = vmatprep.subr.mxu0 0.0
    %2635 = vmatpush1.xpose.msra.mxu0 0.0
    %2636 = vmatprep.subr.mxu0 0.0
    %2637 = vmatpush1.xpose.msra.mxu0 0.0
    %2638 = vmatprep.subr.mxu0 0.0
    %2639 = vmatpush1.xpose.msra.mxu0 0.0
    %2640 = vmatprep.subr.mxu0 0.0
    %2641 = vmatpush1.xpose.msra.mxu0 0.0
    %2642 = vmatprep.subr.mxu0 0.0
    %2643 = vmatpush1.xpose.msra.mxu0 0.0
    %2644 = vmatprep.subr.mxu0 0.0
    %2645 = vmatpush1.xpose.msra.mxu0 0.0
    %2646 = vmatprep.subr.mxu0 0.0
    %2647 = vmatpush1.xpose.msra.mxu0 0.0
    %2648 = vmatprep.subr.mxu0 0.0
    %2649 = vmatpush1.xpose.msra.mxu0 0.0
    %2650 = vmatprep.subr.mxu0 0.0
    %2651 = vmatpush1.xpose.msra.mxu0 0.0
    %2652 = vmatprep.subr.mxu0 0.0
    %2653 = vmatpush1.xpose.msra.mxu0 0.0
    %2654 = vmatprep.subr.mxu0 0.0
    %2655 = vmatpush1.xpose.msra.mxu0 0.0
    %2656 = vmatprep.subr.mxu0 0.0
    %2657 = vmatpush1.xpose.msra.mxu0 0.0
    %2658 = vmatprep.mubr.f32.mxu0 0.0
    %2659 = vmatmul.mubr.f32.gmra.mrb[0].mxu0 %v2590
    %v2660 = vpop.f32.mrb[0].mxu0
    %v2661 = vadd.f32 0.0, %v2660
    %v2662 = vpop.f32.mrb[0].mxu0
    %2663 = vdwg.mxu0
    %v2664 = vsel %vm395, %v2661, -inf
    %2665 = vmax.xlane.f32.xlu0 %v2664
    %v2666 = vpop.xlane.xlu0 %2665
    %v2667 = vsub.f32 %v2661, %v2666
    %v2668 = vmul.f32 %v2667, 1.442695
    %v2669 = vpow.pop %v2668
    %v2670 = vsel %vm395, %v2669, 0.0
    %2671 = vadd.xlane.f32.xlu0 %v2670
    %v2672 = vpop.xlane.xlu0 %2671
    %v2673 = vrcp.pop %v2672
    %v2674 = vmul.f32 %v2669, %v2673
    %2675 = vrot.lane.b32.xlu0 %v2249, 48
    %v2676 = vpop.permute.xlu0 %2675
    %v2679 = vsel %vm395, %v2674, 0
    %2681 = vmatprep.subr.mxu0 0.0
    %2682 = vmatpush1.msra.mxu0 %v2676
    %2683 = vmatprep.subr.mxu0 0.0
    %2684 = vmatpush1.msra.mxu0 0.0
    %2685 = vmatprep.subr.mxu0 0.0
    %2686 = vmatpush1.msra.mxu0 0.0
    %2687 = vmatprep.subr.mxu0 0.0
    %2688 = vmatpush1.msra.mxu0 0.0
    %2689 = vmatprep.subr.mxu0 0.0
    %2690 = vmatpush1.msra.mxu0 0.0
    %2691 = vmatprep.subr.mxu0 0.0
    %2692 = vmatpush1.msra.mxu0 0.0
    %2693 = vmatprep.subr.mxu0 0.0
    %2694 = vmatpush1.msra.mxu0 0.0
    %2695 = vmatprep.subr.mxu0 0.0
    %2696 = vmatpush1.msra.mxu0 0.0
    %2697 = vmatprep.subr.mxu0 0.0
    %2698 = vmatpush1.msra.mxu0 0.0
    %2699 = vmatprep.subr.mxu0 0.0
    %2700 = vmatpush1.msra.mxu0 0.0
    %2701 = vmatprep.subr.mxu0 0.0
    %2702 = vmatpush1.msra.mxu0 0.0
    %2703 = vmatprep.subr.mxu0 0.0
    %2704 = vmatpush1.msra.mxu0 0.0
    %2705 = vmatprep.subr.mxu0 0.0
    %2706 = vmatpush1.msra.mxu0 0.0
    %2707 = vmatprep.subr.mxu0 0.0
    %2708 = vmatpush1.msra.mxu0 0.0
    %2709 = vmatprep.subr.mxu0 0.0
    %2710 = vmatpush1.msra.mxu0 0.0
    %2711 = vmatprep.subr.mxu0 0.0
    %2712 = vmatpush1.msra.mxu0 0.0
    %2713 = vmatprep.subr.mxu0 0.0
    %2714 = vmatpush1.msra.mxu0 0.0
    %2715 = vmatprep.subr.mxu0 0.0
    %2716 = vmatpush1.msra.mxu0 0.0
    %2717 = vmatprep.subr.mxu0 0.0
    %2718 = vmatpush1.msra.mxu0 0.0
    %2719 = vmatprep.subr.mxu0 0.0
    %2720 = vmatpush1.msra.mxu0 0.0
    %2721 = vmatprep.subr.mxu0 0.0
    %2722 = vmatpush1.msra.mxu0 0.0
    %2723 = vmatprep.subr.mxu0 0.0
    %2724 = vmatpush1.msra.mxu0 0.0
    %2725 = vmatprep.subr.mxu0 0.0
    %2726 = vmatpush1.msra.mxu0 0.0
    %2727 = vmatprep.subr.mxu0 0.0
    %2728 = vmatpush1.msra.mxu0 0.0
    %2729 = vmatprep.subr.mxu0 0.0
    %2730 = vmatpush1.msra.mxu0 0.0
    %2731 = vmatprep.subr.mxu0 0.0
    %2732 = vmatpush1.msra.mxu0 0.0
    %2733 = vmatprep.subr.mxu0 0.0
    %2734 = vmatpush1.msra.mxu0 0.0
    %2735 = vmatprep.subr.mxu0 0.0
    %2736 = vmatpush1.msra.mxu0 0.0
    %2737 = vmatprep.subr.mxu0 0.0
    %2738 = vmatpush1.msra.mxu0 0.0
    %2739 = vmatprep.subr.mxu0 0.0
    %2740 = vmatpush1.msra.mxu0 0.0
    %2741 = vmatprep.subr.mxu0 0.0
    %2742 = vmatpush1.msra.mxu0 0.0
    %2743 = vmatprep.subr.mxu0 0.0
    %2744 = vmatpush1.msra.mxu0 0.0
    %2745 = vmatprep.mubr.f32.mxu0 0.0
    %2746 = vmatmul.mubr.f32.gmra.mrb[0].mxu0 %v2679
    %v2747 = vpop.f32.mrb[0].mxu0
    %v2748 = vadd.f32 0.0, %v2747
    %v2749 = vpop.f32.mrb[0].mxu0
    %2750 = vdwg.mxu0
    %2751 = vrot.lane.b32.xlu0 %v2249, 104
    %v2752 = vpop.permute.xlu0 %2751
    %2753 = vrot.lane.b32.xlu0 %v2249, 72
    %v2754 = vpop.permute.xlu0 %2753
    %v2755 = vsel %vm395, %v2752, 0
    %v2757 = vsel %vm395, %v2754, 0
    %2759 = vmatprep.subr.mxu0 0.0
    %2760 = vmatpush1.xpose.msra.mxu0 %v2757
    %2761 = vmatprep.subr.mxu0 0.0
    %2762 = vmatpush1.xpose.msra.mxu0 0.0
    %2763 = vmatprep.subr.mxu0 0.0
    %2764 = vmatpush1.xpose.msra.mxu0 0.0
    %2765 = vmatprep.subr.mxu0 0.0
    %2766 = vmatpush1.xpose.msra.mxu0 0.0
    %2767 = vmatprep.subr.mxu0 0.0
    %2768 = vmatpush1.xpose.msra.mxu0 0.0
    %2769 = vmatprep.subr.mxu0 0.0
    %2770 = vmatpush1.xpose.msra.mxu0 0.0
    %2771 = vmatprep.subr.mxu0 0.0
    %2772 = vmatpush1.xpose.msra.mxu0 0.0
    %2773 = vmatprep.subr.mxu0 0.0
    %2774 = vmatpush1.xpose.msra.mxu0 0.0
    %2775 = vmatprep.subr.mxu0 0.0
    %2776 = vmatpush1.xpose.msra.mxu0 0.0
    %2777 = vmatprep.subr.mxu0 0.0
    %2778 = vmatpush1.xpose.msra.mxu0 0.0
    %2779 = vmatprep.subr.mxu0 0.0
    %2780 = vmatpush1.xpose.msra.mxu0 0.0
    %2781 = vmatprep.subr.mxu0 0.0
    %2782 = vmatpush1.xpose.msra.mxu0 0.0
    %2783 = vmatprep.subr.mxu0 0.0
    %2784 = vmatpush1.xpose.msra.mxu0 0.0
    %2785 = vmatprep.subr.mxu0 0.0
    %2786 = vmatpush1.xpose.msra.mxu0 0.0
    %2787 = vmatprep.subr.mxu0 0.0
    %2788 = vmatpush1.xpose.msra.mxu0 0.0
    %2789 = vmatprep.subr.mxu0 0.0
    %2790 = vmatpush1.xpose.msra.mxu0 0.0
    %2791 = vmatprep.subr.mxu0 0.0
    %2792 = vmatpush1.xpose.msra.mxu0 0.0
    %2793 = vmatprep.subr.mxu0 0.0
    %2794 = vmatpush1.xpose.msra.mxu0 0.0
    %2795 = vmatprep.subr.mxu0 0.0
    %2796 = vmatpush1.xpose.msra.mxu0 0.0
    %2797 = vmatprep.subr.mxu0 0.0
    %2798 = vmatpush1.xpose.msra.mxu0 0.0
    %2799 = vmatprep.subr.mxu0 0.0
    %2800 = vmatpush1.xpose.msra.mxu0 0.0
    %2801 = vmatprep.subr.mxu0 0.0
    %2802 = vmatpush1.xpose.msra.mxu0 0.0
    %2803 = vmatprep.subr.mxu0 0.0
    %2804 = vmatpush1.xpose.msra.mxu0 0.0
    %2805 = vmatprep.subr.mxu0 0.0
    %2806 = vmatpush1.xpose.msra.mxu0 0.0
    %2807 = vmatprep.subr.mxu0 0.0
    %2808 = vmatpush1.xpose.msra.mxu0 0.0
    %2809 = vmatprep.subr.mxu0 0.0
    %2810 = vmatpush1.xpose.msra.mxu0 0.0
    %2811 = vmatprep.subr.mxu0 0.0
    %2812 = vmatpush1.xpose.msra.mxu0 0.0
    %2813 = vmatprep.subr.mxu0 0.0
    %2814 = vmatpush1.xpose.msra.mxu0 0.0
    %2815 = vmatprep.subr.mxu0 0.0
    %2816 = vmatpush1.xpose.msra.mxu0 0.0
    %2817 = vmatprep.subr.mxu0 0.0
    %2818 = vmatpush1.xpose.msra.mxu0 0.0
    %2819 = vmatprep.subr.mxu0 0.0
    %2820 = vmatpush1.xpose.msra.mxu0 0.0
    %2821 = vmatprep.subr.mxu0 0.0
    %2822 = vmatpush1.xpose.msra.mxu0 0.0
    %2823 = vmatprep.mubr.f32.mxu0 0.0
    %2824 = vmatmul.mubr.f32.gmra.mrb[0].mxu0 %v2755
    %v2825 = vpop.f32.mrb[0].mxu0
    %v2826 = vadd.f32 0.0, %v2825
    %v2827 = vpop.f32.mrb[0].mxu0
    %2828 = vdwg.mxu0
    %v2829 = vsel %vm395, %v2826, -inf
    %2830 = vmax.xlane.f32.xlu0 %v2829
    %v2831 = vpop.xlane.xlu0 %2830
    %v2832 = vsub.f32 %v2826, %v2831
    %v2833 = vmul.f32 %v2832, 1.442695
    %v2834 = vpow.pop %v2833
    %v2835 = vsel %vm395, %v2834, 0.0
    %2836 = vadd.xlane.f32.xlu0 %v2835
    %v2837 = vpop.xlane.xlu0 %2836
    %v2838 = vrcp.pop %v2837
    %v2839 = vmul.f32 %v2834, %v2838
    %2840 = vrot.lane.b32.xlu0 %v2249, 40
    %v2841 = vpop.permute.xlu0 %2840
    %v2844 = vsel %vm395, %v2839, 0
    %2846 = vmatprep.subr.mxu0 0.0
    %2847 = vmatpush1.msra.mxu0 %v2841
    %2848 = vmatprep.subr.mxu0 0.0
    %2849 = vmatpush1.msra.mxu0 0.0
    %2850 = vmatprep.subr.mxu0 0.0
    %2851 = vmatpush1.msra.mxu0 0.0
    %2852 = vmatprep.subr.mxu0 0.0
    %2853 = vmatpush1.msra.mxu0 0.0
    %2854 = vmatprep.subr.mxu0 0.0
    %2855 = vmatpush1.msra.mxu0 0.0
    %2856 = vmatprep.subr.mxu0 0.0
    %2857 = vmatpush1.msra.mxu0 0.0
    %2858 = vmatprep.subr.mxu0 0.0
    %2859 = vmatpush1.msra.mxu0 0.0
    %2860 = vmatprep.subr.mxu0 0.0
    %2861 = vmatpush1.msra.mxu0 0.0
    %2862 = vmatprep.subr.mxu0 0.0
    %2863 = vmatpush1.msra.mxu0 0.0
    %2864 = vmatprep.subr.mxu0 0.0
    %2865 = vmatpush1.msra.mxu0 0.0
    %2866 = vmatprep.subr.mxu0 0.0
    %2867 = vmatpush1.msra.mxu0 0.0
    %2868 = vmatprep.subr.mxu0 0.0
    %2869 = vmatpush1.msra.mxu0 0.0
    %2870 = vmatprep.subr.mxu0 0.0
    %2871 = vmatpush1.msra.mxu0 0.0
    %2872 = vmatprep.subr.mxu0 0.0
    %2873 = vmatpush1.msra.mxu0 0.0
    %2874 = vmatprep.subr.mxu0 0.0
    %2875 = vmatpush1.msra.mxu0 0.0
    %2876 = vmatprep.subr.mxu0 0.0
    %2877 = vmatpush1.msra.mxu0 0.0
    %2878 = vmatprep.subr.mxu0 0.0
    %2879 = vmatpush1.msra.mxu0 0.0
    %2880 = vmatprep.subr.mxu0 0.0
    %2881 = vmatpush1.msra.mxu0 0.0
    %2882 = vmatprep.subr.mxu0 0.0
    %2883 = vmatpush1.msra.mxu0 0.0
    %2884 = vmatprep.subr.mxu0 0.0
    %2885 = vmatpush1.msra.mxu0 0.0
    %2886 = vmatprep.subr.mxu0 0.0
    %2887 = vmatpush1.msra.mxu0 0.0
    %2888 = vmatprep.subr.mxu0 0.0
    %2889 = vmatpush1.msra.mxu0 0.0
    %2890 = vmatprep.subr.mxu0 0.0
    %2891 = vmatpush1.msra.mxu0 0.0
    %2892 = vmatprep.subr.mxu0 0.0
    %2893 = vmatpush1.msra.mxu0 0.0
    %2894 = vmatprep.subr.mxu0 0.0
    %2895 = vmatpush1.msra.mxu0 0.0
    %2896 = vmatprep.subr.mxu0 0.0
    %2897 = vmatpush1.msra.mxu0 0.0
    %2898 = vmatprep.subr.mxu0 0.0
    %2899 = vmatpush1.msra.mxu0 0.0
    %2900 = vmatprep.subr.mxu0 0.0
    %2901 = vmatpush1.msra.mxu0 0.0
    %2902 = vmatprep.subr.mxu0 0.0
    %2903 = vmatpush1.msra.mxu0 0.0
    %2904 = vmatprep.subr.mxu0 0.0
    %2905 = vmatpush1.msra.mxu0 0.0
    %2906 = vmatprep.subr.mxu0 0.0
    %2907 = vmatpush1.msra.mxu0 0.0
    %2908 = vmatprep.subr.mxu0 0.0
    %2909 = vmatpush1.msra.mxu0 0.0
    %2910 = vmatprep.mubr.f32.mxu0 0.0
    %2911 = vmatmul.mubr.f32.gmra.mrb[0].mxu0 %v2844
    %v2912 = vpop.f32.mrb[0].mxu0
    %v2913 = vadd.f32 0.0, %v2912
    %v2914 = vpop.f32.mrb[0].mxu0
    %2915 = vdwg.mxu0
    %2917 = vrot.lane.b32.xlu0 %v2583, 8
    %v2918 = vpop.permute.xlu0 %2917
    %2921 = vrot.lane.b32.xlu0 %v2748, 16
    %v2922 = vpop.permute.xlu0 %2921
    %2925 = vrot.lane.b32.xlu0 %v2913, 24
    %v2926 = vpop.permute.xlu0 %2925
    %v2928 = vsel %vm395, %v2418, %v2918
    %vm2929 = vcmask 130048
    %v2930 = vsel %vm2929, %v2928, %v2922
    %v2931 = vsel %vm34, %v2930, %v2926
    %2933 = vrot.lane.b32.xlu0 %v2254, 96
    %v2934 = vpop.permute.xlu0 %2933
    %v2935 = vsel %vm395, %v2254, 0
    %v2937 = vsel %vm395, %v2934, 0
    %2939 = vmatprep.subr.mxu0 0.0
    %2940 = vmatpush1.xpose.msra.mxu0 %v2937
    %2941 = vmatprep.subr.mxu0 0.0
    %2942 = vmatpush1.xpose.msra.mxu0 0.0
    %2943 = vmatprep.subr.mxu0 0.0
    %2944 = vmatpush1.xpose.msra.mxu0 0.0
    %2945 = vmatprep.subr.mxu0 0.0
    %2946 = vmatpush1.xpose.msra.mxu0 0.0
    %2947 = vmatprep.subr.mxu0 0.0
    %2948 = vmatpush1.xpose.msra.mxu0 0.0
    %2949 = vmatprep.subr.mxu0 0.0
    %2950 = vmatpush1.xpose.msra.mxu0 0.0
    %2951 = vmatprep.subr.mxu0 0.0
    %2952 = vmatpush1.xpose.msra.mxu0 0.0
    %2953 = vmatprep.subr.mxu0 0.0
    %2954 = vmatpush1.xpose.msra.mxu0 0.0
    %2955 = vmatprep.subr.mxu0 0.0
    %2956 = vmatpush1.xpose.msra.mxu0 0.0
    %2957 = vmatprep.subr.mxu0 0.0
    %2958 = vmatpush1.xpose.msra.mxu0 0.0
    %2959 = vmatprep.subr.mxu0 0.0
    %2960 = vmatpush1.xpose.msra.mxu0 0.0
    %2961 = vmatprep.subr.mxu0 0.0
    %2962 = vmatpush1.xpose.msra.mxu0 0.0
    %2963 = vmatprep.subr.mxu0 0.0
    %2964 = vmatpush1.xpose.msra.mxu0 0.0
    %2965 = vmatprep.subr.mxu0 0.0
    %2966 = vmatpush1.xpose.msra.mxu0 0.0
    %2967 = vmatprep.subr.mxu0 0.0
    %2968 = vmatpush1.xpose.msra.mxu0 0.0
    %2969 = vmatprep.subr.mxu0 0.0
    %2970 = vmatpush1.xpose.msra.mxu0 0.0
    %2971 = vmatprep.subr.mxu0 0.0
    %2972 = vmatpush1.xpose.msra.mxu0 0.0
    %2973 = vmatprep.subr.mxu0 0.0
    %2974 = vmatpush1.xpose.msra.mxu0 0.0
    %2975 = vmatprep.subr.mxu0 0.0
    %2976 = vmatpush1.xpose.msra.mxu0 0.0
    %2977 = vmatprep.subr.mxu0 0.0
    %2978 = vmatpush1.xpose.msra.mxu0 0.0
    %2979 = vmatprep.subr.mxu0 0.0
    %2980 = vmatpush1.xpose.msra.mxu0 0.0
    %2981 = vmatprep.subr.mxu0 0.0
    %2982 = vmatpush1.xpose.msra.mxu0 0.0
    %2983 = vmatprep.subr.mxu0 0.0
    %2984 = vmatpush1.xpose.msra.mxu0 0.0
    %2985 = vmatprep.subr.mxu0 0.0
    %2986 = vmatpush1.xpose.msra.mxu0 0.0
    %2987 = vmatprep.subr.mxu0 0.0
    %2988 = vmatpush1.xpose.msra.mxu0 0.0
    %2989 = vmatprep.subr.mxu0 0.0
    %2990 = vmatpush1.xpose.msra.mxu0 0.0
    %2991 = vmatprep.subr.mxu0 0.0
    %2992 = vmatpush1.xpose.msra.mxu0 0.0
    %2993 = vmatprep.subr.mxu0 0.0
    %2994 = vmatpush1.xpose.msra.mxu0 0.0
    %2995 = vmatprep.subr.mxu0 0.0
    %2996 = vmatpush1.xpose.msra.mxu0 0.0
    %2997 = vmatprep.subr.mxu0 0.0
    %2998 = vmatpush1.xpose.msra.mxu0 0.0
    %2999 = vmatprep.subr.mxu0 0.0
    %3000 = vmatpush1.xpose.msra.mxu0 0.0
    %3001 = vmatprep.subr.mxu0 0.0
    %3002 = vmatpush1.xpose.msra.mxu0 0.0
    %3003 = vmatprep.mubr.f32.mxu0 0.0
    %3004 = vmatmul.mubr.f32.gmra.mrb[0].mxu0 %v2935
    %v3005 = vpop.f32.mrb[0].mxu0
    %v3006 = vadd.f32 0.0, %v3005
    %v3007 = vpop.f32.mrb[0].mxu0
    %3008 = vdwg.mxu0
    %v3009 = vsel %vm395, %v3006, -inf
    %3010 = vmax.xlane.f32.xlu0 %v3009
    %v3011 = vpop.xlane.xlu0 %3010
    %v3012 = vsub.f32 %v3006, %v3011
    %v3013 = vmul.f32 %v3012, 1.442695
    %v3014 = vpow.pop %v3013
    %v3015 = vsel %vm395, %v3014, 0.0
    %3016 = vadd.xlane.f32.xlu0 %v3015
    %v3017 = vpop.xlane.xlu0 %3016
    %v3018 = vrcp.pop %v3017
    %v3019 = vmul.f32 %v3014, %v3018
    %3020 = vrot.lane.b32.xlu0 %v2254, 64
    %v3021 = vpop.permute.xlu0 %3020
    %v3024 = vsel %vm395, %v3019, 0
    %3026 = vmatprep.subr.mxu0 0.0
    %3027 = vmatpush1.msra.mxu0 %v3021
    %3028 = vmatprep.subr.mxu0 0.0
    %3029 = vmatpush1.msra.mxu0 0.0
    %3030 = vmatprep.subr.mxu0 0.0
    %3031 = vmatpush1.msra.mxu0 0.0
    %3032 = vmatprep.subr.mxu0 0.0
    %3033 = vmatpush1.msra.mxu0 0.0
    %3034 = vmatprep.subr.mxu0 0.0
    %3035 = vmatpush1.msra.mxu0 0.0
    %3036 = vmatprep.subr.mxu0 0.0
    %3037 = vmatpush1.msra.mxu0 0.0
    %3038 = vmatprep.subr.mxu0 0.0
    %3039 = vmatpush1.msra.mxu0 0.0
    %3040 = vmatprep.subr.mxu0 0.0
    %3041 = vmatpush1.msra.mxu0 0.0
    %3042 = vmatprep.subr.mxu0 0.0
    %3043 = vmatpush1.msra.mxu0 0.0
    %3044 = vmatprep.subr.mxu0 0.0
    %3045 = vmatpush1.msra.mxu0 0.0
    %3046 = vmatprep.subr.mxu0 0.0
    %3047 = vmatpush1.msra.mxu0 0.0
    %3048 = vmatprep.subr.mxu0 0.0
    %3049 = vmatpush1.msra.mxu0 0.0
    %3050 = vmatprep.subr.mxu0 0.0
    %3051 = vmatpush1.msra.mxu0 0.0
    %3052 = vmatprep.subr.mxu0 0.0
    %3053 = vmatpush1.msra.mxu0 0.0
    %3054 = vmatprep.subr.mxu0 0.0
    %3055 = vmatpush1.msra.mxu0 0.0
    %3056 = vmatprep.subr.mxu0 0.0
    %3057 = vmatpush1.msra.mxu0 0.0
    %3058 = vmatprep.subr.mxu0 0.0
    %3059 = vmatpush1.msra.mxu0 0.0
    %3060 = vmatprep.subr.mxu0 0.0
    %3061 = vmatpush1.msra.mxu0 0.0
    %3062 = vmatprep.subr.mxu0 0.0
    %3063 = vmatpush1.msra.mxu0 0.0
    %3064 = vmatprep.subr.mxu0 0.0
    %3065 = vmatpush1.msra.mxu0 0.0
    %3066 = vmatprep.subr.mxu0 0.0
    %3067 = vmatpush1.msra.mxu0 0.0
    %3068 = vmatprep.subr.mxu0 0.0
    %3069 = vmatpush1.msra.mxu0 0.0
    %3070 = vmatprep.subr.mxu0 0.0
    %3071 = vmatpush1.msra.mxu0 0.0
    %3072 = vmatprep.subr.mxu0 0.0
    %3073 = vmatpush1.msra.mxu0 0.0
    %3074 = vmatprep.subr.mxu0 0.0
    %3075 = vmatpush1.msra.mxu0 0.0
    %3076 = vmatprep.subr.mxu0 0.0
    %3077 = vmatpush1.msra.mxu0 0.0
    %3078 = vmatprep.subr.mxu0 0.0
    %3079 = vmatpush1.msra.mxu0 0.0
    %3080 = vmatprep.subr.mxu0 0.0
    %3081 = vmatpush1.msra.mxu0 0.0
    %3082 = vmatprep.subr.mxu0 0.0
    %3083 = vmatpush1.msra.mxu0 0.0
    %3084 = vmatprep.subr.mxu0 0.0
    %3085 = vmatpush1.msra.mxu0 0.0
    %3086 = vmatprep.subr.mxu0 0.0
    %3087 = vmatpush1.msra.mxu0 0.0
    %3088 = vmatprep.subr.mxu0 0.0
    %3089 = vmatpush1.msra.mxu0 0.0
    %3090 = vmatprep.mubr.f32.mxu0 0.0
    %3091 = vmatmul.mubr.f32.gmra.mrb[0].mxu0 %v3024
    %v3092 = vpop.f32.mrb[0].mxu0
    %v3093 = vadd.f32 0.0, %v3092
    %v3094 = vpop.f32.mrb[0].mxu0
    %3095 = vdwg.mxu0
    %3096 = vrot.lane.b32.xlu0 %v2254, 120
    %v3097 = vpop.permute.xlu0 %3096
    %3098 = vrot.lane.b32.xlu0 %v2254, 88
    %v3099 = vpop.permute.xlu0 %3098
    %v3100 = vsel %vm395, %v3097, 0
    %v3102 = vsel %vm395, %v3099, 0
    %3104 = vmatprep.subr.mxu0 0.0
    %3105 = vmatpush1.xpose.msra.mxu0 %v3102
    %3106 = vmatprep.subr.mxu0 0.0
    %3107 = vmatpush1.xpose.msra.mxu0 0.0
    %3108 = vmatprep.subr.mxu0 0.0
    %3109 = vmatpush1.xpose.msra.mxu0 0.0
    %3110 = vmatprep.subr.mxu0 0.0
    %3111 = vmatpush1.xpose.msra.mxu0 0.0
    %3112 = vmatprep.subr.mxu0 0.0
    %3113 = vmatpush1.xpose.msra.mxu0 0.0
    %3114 = vmatprep.subr.mxu0 0.0
    %3115 = vmatpush1.xpose.msra.mxu0 0.0
    %3116 = vmatprep.subr.mxu0 0.0
    %3117 = vmatpush1.xpose.msra.mxu0 0.0
    %3118 = vmatprep.subr.mxu0 0.0
    %3119 = vmatpush1.xpose.msra.mxu0 0.0
    %3120 = vmatprep.subr.mxu0 0.0
    %3121 = vmatpush1.xpose.msra.mxu0 0.0
    %3122 = vmatprep.subr.mxu0 0.0
    %3123 = vmatpush1.xpose.msra.mxu0 0.0
    %3124 = vmatprep.subr.mxu0 0.0
    %3125 = vmatpush1.xpose.msra.mxu0 0.0
    %3126 = vmatprep.subr.mxu0 0.0
    %3127 = vmatpush1.xpose.msra.mxu0 0.0
    %3128 = vmatprep.subr.mxu0 0.0
    %3129 = vmatpush1.xpose.msra.mxu0 0.0
    %3130 = vmatprep.subr.mxu0 0.0
    %3131 = vmatpush1.xpose.msra.mxu0 0.0
    %3132 = vmatprep.subr.mxu0 0.0
    %3133 = vmatpush1.xpose.msra.mxu0 0.0
    %3134 = vmatprep.subr.mxu0 0.0
    %3135 = vmatpush1.xpose.msra.mxu0 0.0
    %3136 = vmatprep.subr.mxu0 0.0
    %3137 = vmatpush1.xpose.msra.mxu0 0.0
    %3138 = vmatprep.subr.mxu0 0.0
    %3139 = vmatpush1.xpose.msra.mxu0 0.0
    %3140 = vmatprep.subr.mxu0 0.0
    %3141 = vmatpush1.xpose.msra.mxu0 0.0
    %3142 = vmatprep.subr.mxu0 0.0
    %3143 = vmatpush1.xpose.msra.mxu0 0.0
    %3144 = vmatprep.subr.mxu0 0.0
    %3145 = vmatpush1.xpose.msra.mxu0 0.0
    %3146 = vmatprep.subr.mxu0 0.0
    %3147 = vmatpush1.xpose.msra.mxu0 0.0
    %3148 = vmatprep.subr.mxu0 0.0
    %3149 = vmatpush1.xpose.msra.mxu0 0.0
    %3150 = vmatprep.subr.mxu0 0.0
    %3151 = vmatpush1.xpose.msra.mxu0 0.0
    %3152 = vmatprep.subr.mxu0 0.0
    %3153 = vmatpush1.xpose.msra.mxu0 0.0
    %3154 = vmatprep.subr.mxu0 0.0
    %3155 = vmatpush1.xpose.msra.mxu0 0.0
    %3156 = vmatprep.subr.mxu0 0.0
    %3157 = vmatpush1.xpose.msra.mxu0 0.0
    %3158 = vmatprep.subr.mxu0 0.0
    %3159 = vmatpush1.xpose.msra.mxu0 0.0
    %3160 = vmatprep.subr.mxu0 0.0
    %3161 = vmatpush1.xpose.msra.mxu0 0.0
    %3162 = vmatprep.subr.mxu0 0.0
    %3163 = vmatpush1.xpose.msra.mxu0 0.0
    %3164 = vmatprep.subr.mxu0 0.0
    %3165 = vmatpush1.xpose.msra.mxu0 0.0
    %3166 = vmatprep.subr.mxu0 0.0
    %3167 = vmatpush1.xpose.msra.mxu0 0.0
    %3168 = vmatprep.mubr.f32.mxu0 0.0
    %3169 = vmatmul.mubr.f32.gmra.mrb[0].mxu0 %v3100
    %v3170 = vpop.f32.mrb[0].mxu0
    %v3171 = vadd.f32 0.0, %v3170
    %v3172 = vpop.f32.mrb[0].mxu0
    %3173 = vdwg.mxu0
    %v3174 = vsel %vm395, %v3171, -inf
    %3175 = vmax.xlane.f32.xlu0 %v3174
    %v3176 = vpop.xlane.xlu0 %3175
    %v3177 = vsub.f32 %v3171, %v3176
    %v3178 = vmul.f32 %v3177, 1.442695
    %v3179 = vpow.pop %v3178
    %v3180 = vsel %vm395, %v3179, 0.0
    %3181 = vadd.xlane.f32.xlu0 %v3180
    %v3182 = vpop.xlane.xlu0 %3181
    %v3183 = vrcp.pop %v3182
    %v3184 = vmul.f32 %v3179, %v3183
    %3185 = vrot.lane.b32.xlu0 %v2254, 56
    %v3186 = vpop.permute.xlu0 %3185
    %v3189 = vsel %vm395, %v3184, 0
    %3191 = vmatprep.subr.mxu0 0.0
    %3192 = vmatpush1.msra.mxu0 %v3186
    %3193 = vmatprep.subr.mxu0 0.0
    %3194 = vmatpush1.msra.mxu0 0.0
    %3195 = vmatprep.subr.mxu0 0.0
    %3196 = vmatpush1.msra.mxu0 0.0
    %3197 = vmatprep.subr.mxu0 0.0
    %3198 = vmatpush1.msra.mxu0 0.0
    %3199 = vmatprep.subr.mxu0 0.0
    %3200 = vmatpush1.msra.mxu0 0.0
    %3201 = vmatprep.subr.mxu0 0.0
    %3202 = vmatpush1.msra.mxu0 0.0
    %3203 = vmatprep.subr.mxu0 0.0
    %3204 = vmatpush1.msra.mxu0 0.0
    %3205 = vmatprep.subr.mxu0 0.0
    %3206 = vmatpush1.msra.mxu0 0.0
    %3207 = vmatprep.subr.mxu0 0.0
    %3208 = vmatpush1.msra.mxu0 0.0
    %3209 = vmatprep.subr.mxu0 0.0
    %3210 = vmatpush1.msra.mxu0 0.0
    %3211 = vmatprep.subr.mxu0 0.0
    %3212 = vmatpush1.msra.mxu0 0.0
    %3213 = vmatprep.subr.mxu0 0.0
    %3214 = vmatpush1.msra.mxu0 0.0
    %3215 = vmatprep.subr.mxu0 0.0
    %3216 = vmatpush1.msra.mxu0 0.0
    %3217 = vmatprep.subr.mxu0 0.0
    %3218 = vmatpush1.msra.mxu0 0.0
    %3219 = vmatprep.subr.mxu0 0.0
    %3220 = vmatpush1.msra.mxu0 0.0
    %3221 = vmatprep.subr.mxu0 0.0
    %3222 = vmatpush1.msra.mxu0 0.0
    %3223 = vmatprep.subr.mxu0 0.0
    %3224 = vmatpush1.msra.mxu0 0.0
    %3225 = vmatprep.subr.mxu0 0.0
    %3226 = vmatpush1.msra.mxu0 0.0
    %3227 = vmatprep.subr.mxu0 0.0
    %3228 = vmatpush1.msra.mxu0 0.0
    %3229 = vmatprep.subr.mxu0 0.0
    %3230 = vmatpush1.msra.mxu0 0.0
    %3231 = vmatprep.subr.mxu0 0.0
    %3232 = vmatpush1.msra.mxu0 0.0
    %3233 = vmatprep.subr.mxu0 0.0
    %3234 = vmatpush1.msra.mxu0 0.0
    %3235 = vmatprep.subr.mxu0 0.0
    %3236 = vmatpush1.msra.mxu0 0.0
    %3237 = vmatprep.subr.mxu0 0.0
    %3238 = vmatpush1.msra.mxu0 0.0
    %3239 = vmatprep.subr.mxu0 0.0
    %3240 = vmatpush1.msra.mxu0 0.0
    %3241 = vmatprep.subr.mxu0 0.0
    %3242 = vmatpush1.msra.mxu0 0.0
    %3243 = vmatprep.subr.mxu0 0.0
    %3244 = vmatpush1.msra.mxu0 0.0
    %3245 = vmatprep.subr.mxu0 0.0
    %3246 = vmatpush1.msra.mxu0 0.0
    %3247 = vmatprep.subr.mxu0 0.0
    %3248 = vmatpush1.msra.mxu0 0.0
    %3249 = vmatprep.subr.mxu0 0.0
    %3250 = vmatpush1.msra.mxu0 0.0
    %3251 = vmatprep.subr.mxu0 0.0
    %3252 = vmatpush1.msra.mxu0 0.0
    %3253 = vmatprep.subr.mxu0 0.0
    %3254 = vmatpush1.msra.mxu0 0.0
    %3255 = vmatprep.mubr.f32.mxu0 0.0
    %3256 = vmatmul.mubr.f32.gmra.mrb[0].mxu0 %v3189
    %v3257 = vpop.f32.mrb[0].mxu0
    %v3258 = vadd.f32 0.0, %v3257
    %v3259 = vpop.f32.mrb[0].mxu0
    %3260 = vdwg.mxu0
    %3261 = vrot.lane.b32.xlu0 %v2254, 112
    %v3262 = vpop.permute.xlu0 %3261
    %3263 = vrot.lane.b32.xlu0 %v2254, 80
    %v3264 = vpop.permute.xlu0 %3263
    %v3265 = vsel %vm395, %v3262, 0
    %v3267 = vsel %vm395, %v3264, 0
    %3269 = vmatprep.subr.mxu0 0.0
    %3270 = vmatpush1.xpose.msra.mxu0 %v3267
    %3271 = vmatprep.subr.mxu0 0.0
    %3272 = vmatpush1.xpose.msra.mxu0 0.0
    %3273 = vmatprep.subr.mxu0 0.0
    %3274 = vmatpush1.xpose.msra.mxu0 0.0
    %3275 = vmatprep.subr.mxu0 0.0
    %3276 = vmatpush1.xpose.msra.mxu0 0.0
    %3277 = vmatprep.subr.mxu0 0.0
    %3278 = vmatpush1.xpose.msra.mxu0 0.0
    %3279 = vmatprep.subr.mxu0 0.0
    %3280 = vmatpush1.xpose.msra.mxu0 0.0
    %3281 = vmatprep.subr.mxu0 0.0
    %3282 = vmatpush1.xpose.msra.mxu0 0.0
    %3283 = vmatprep.subr.mxu0 0.0
    %3284 = vmatpush1.xpose.msra.mxu0 0.0
    %3285 = vmatprep.subr.mxu0 0.0
    %3286 = vmatpush1.xpose.msra.mxu0 0.0
    %3287 = vmatprep.subr.mxu0 0.0
    %3288 = vmatpush1.xpose.msra.mxu0 0.0
    %3289 = vmatprep.subr.mxu0 0.0
    %3290 = vmatpush1.xpose.msra.mxu0 0.0
    %3291 = vmatprep.subr.mxu0 0.0
    %3292 = vmatpush1.xpose.msra.mxu0 0.0
    %3293 = vmatprep.subr.mxu0 0.0
    %3294 = vmatpush1.xpose.msra.mxu0 0.0
    %3295 = vmatprep.subr.mxu0 0.0
    %3296 = vmatpush1.xpose.msra.mxu0 0.0
    %3297 = vmatprep.subr.mxu0 0.0
    %3298 = vmatpush1.xpose.msra.mxu0 0.0
    %3299 = vmatprep.subr.mxu0 0.0
    %3300 = vmatpush1.xpose.msra.mxu0 0.0
    %3301 = vmatprep.subr.mxu0 0.0
    %3302 = vmatpush1.xpose.msra.mxu0 0.0
    %3303 = vmatprep.subr.mxu0 0.0
    %3304 = vmatpush1.xpose.msra.mxu0 0.0
    %3305 = vmatprep.subr.mxu0 0.0
    %3306 = vmatpush1.xpose.msra.mxu0 0.0
    %3307 = vmatprep.subr.mxu0 0.0
    %3308 = vmatpush1.xpose.msra.mxu0 0.0
    %3309 = vmatprep.subr.mxu0 0.0
    %3310 = vmatpush1.xpose.msra.mxu0 0.0
    %3311 = vmatprep.subr.mxu0 0.0
    %3312 = vmatpush1.xpose.msra.mxu0 0.0
    %3313 = vmatprep.subr.mxu0 0.0
    %3314 = vmatpush1.xpose.msra.mxu0 0.0
    %3315 = vmatprep.subr.mxu0 0.0
    %3316 = vmatpush1.xpose.msra.mxu0 0.0
    %3317 = vmatprep.subr.mxu0 0.0
    %3318 = vmatpush1.xpose.msra.mxu0 0.0
    %3319 = vmatprep.subr.mxu0 0.0
    %3320 = vmatpush1.xpose.msra.mxu0 0.0
    %3321 = vmatprep.subr.mxu0 0.0
    %3322 = vmatpush1.xpose.msra.mxu0 0.0
    %3323 = vmatprep.subr.mxu0 0.0
    %3324 = vmatpush1.xpose.msra.mxu0 0.0
    %3325 = vmatprep.subr.mxu0 0.0
    %3326 = vmatpush1.xpose.msra.mxu0 0.0
    %3327 = vmatprep.subr.mxu0 0.0
    %3328 = vmatpush1.xpose.msra.mxu0 0.0
    %3329 = vmatprep.subr.mxu0 0.0
    %3330 = vmatpush1.xpose.msra.mxu0 0.0
    %3331 = vmatprep.subr.mxu0 0.0
    %3332 = vmatpush1.xpose.msra.mxu0 0.0
    %3333 = vmatprep.mubr.f32.mxu0 0.0
    %3334 = vmatmul.mubr.f32.gmra.mrb[0].mxu0 %v3265
    %v3335 = vpop.f32.mrb[0].mxu0
    %v3336 = vadd.f32 0.0, %v3335
    %v3337 = vpop.f32.mrb[0].mxu0
    %3338 = vdwg.mxu0
    %v3339 = vsel %vm395, %v3336, -inf
    %3340 = vmax.xlane.f32.xlu0 %v3339
    %v3341 = vpop.xlane.xlu0 %3340
    %v3342 = vsub.f32 %v3336, %v3341
    %v3343 = vmul.f32 %v3342, 1.442695
    %v3344 = vpow.pop %v3343
    %v3345 = vsel %vm395, %v3344, 0.0
    %3346 = vadd.xlane.f32.xlu0 %v3345
    %v3347 = vpop.xlane.xlu0 %3346
    %v3348 = vrcp.pop %v3347
    %v3349 = vmul.f32 %v3344, %v3348
    %3350 = vrot.lane.b32.xlu0 %v2254, 48
    %v3351 = vpop.permute.xlu0 %3350
    %v3354 = vsel %vm395, %v3349, 0
    %3356 = vmatprep.subr.mxu0 0.0
    %3357 = vmatpush1.msra.mxu0 %v3351
    %3358 = vmatprep.subr.mxu0 0.0
    %3359 = vmatpush1.msra.mxu0 0.0
    %3360 = vmatprep.subr.mxu0 0.0
    %3361 = vmatpush1.msra.mxu0 0.0
    %3362 = vmatprep.subr.mxu0 0.0
    %3363 = vmatpush1.msra.mxu0 0.0
    %3364 = vmatprep.subr.mxu0 0.0
    %3365 = vmatpush1.msra.mxu0 0.0
    %3366 = vmatprep.subr.mxu0 0.0
    %3367 = vmatpush1.msra.mxu0 0.0
    %3368 = vmatprep.subr.mxu0 0.0
    %3369 = vmatpush1.msra.mxu0 0.0
    %3370 = vmatprep.subr.mxu0 0.0
    %3371 = vmatpush1.msra.mxu0 0.0
    %3372 = vmatprep.subr.mxu0 0.0
    %3373 = vmatpush1.msra.mxu0 0.0
    %3374 = vmatprep.subr.mxu0 0.0
    %3375 = vmatpush1.msra.mxu0 0.0
    %3376 = vmatprep.subr.mxu0 0.0
    %3377 = vmatpush1.msra.mxu0 0.0
    %3378 = vmatprep.subr.mxu0 0.0
    %3379 = vmatpush1.msra.mxu0 0.0
    %3380 = vmatprep.subr.mxu0 0.0
    %3381 = vmatpush1.msra.mxu0 0.0
    %3382 = vmatprep.subr.mxu0 0.0
    %3383 = vmatpush1.msra.mxu0 0.0
    %3384 = vmatprep.subr.mxu0 0.0
    %3385 = vmatpush1.msra.mxu0 0.0
    %3386 = vmatprep.subr.mxu0 0.0
    %3387 = vmatpush1.msra.mxu0 0.0
    %3388 = vmatprep.subr.mxu0 0.0
    %3389 = vmatpush1.msra.mxu0 0.0
    %3390 = vmatprep.subr.mxu0 0.0
    %3391 = vmatpush1.msra.mxu0 0.0
    %3392 = vmatprep.subr.mxu0 0.0
    %3393 = vmatpush1.msra.mxu0 0.0
    %3394 = vmatprep.subr.mxu0 0.0
    %3395 = vmatpush1.msra.mxu0 0.0
    %3396 = vmatprep.subr.mxu0 0.0
    %3397 = vmatpush1.msra.mxu0 0.0
    %3398 = vmatprep.subr.mxu0 0.0
    %3399 = vmatpush1.msra.mxu0 0.0
    %3400 = vmatprep.subr.mxu0 0.0
    %3401 = vmatpush1.msra.mxu0 0.0
    %3402 = vmatprep.subr.mxu0 0.0
    %3403 = vmatpush1.msra.mxu0 0.0
    %3404 = vmatprep.subr.mxu0 0.0
    %3405 = vmatpush1.msra.mxu0 0.0
    %3406 = vmatprep.subr.mxu0 0.0
    %3407 = vmatpush1.msra.mxu0 0.0
    %3408 = vmatprep.subr.mxu0 0.0
    %3409 = vmatpush1.msra.mxu0 0.0
    %3410 = vmatprep.subr.mxu0 0.0
    %3411 = vmatpush1.msra.mxu0 0.0
    %3412 = vmatprep.subr.mxu0 0.0
    %3413 = vmatpush1.msra.mxu0 0.0
    %3414 = vmatprep.subr.mxu0 0.0
    %3415 = vmatpush1.msra.mxu0 0.0
    %3416 = vmatprep.subr.mxu0 0.0
    %3417 = vmatpush1.msra.mxu0 0.0
    %3418 = vmatprep.subr.mxu0 0.0
    %3419 = vmatpush1.msra.mxu0 0.0
    %3420 = vmatprep.mubr.f32.mxu0 0.0
    %3421 = vmatmul.mubr.f32.gmra.mrb[0].mxu0 %v3354
    %v3422 = vpop.f32.mrb[0].mxu0
    %v3423 = vadd.f32 0.0, %v3422
    %v3424 = vpop.f32.mrb[0].mxu0
    %3425 = vdwg.mxu0
    %3426 = vrot.lane.b32.xlu0 %v2254, 104
    %v3427 = vpop.permute.xlu0 %3426
    %3428 = vrot.lane.b32.xlu0 %v2254, 72
    %v3429 = vpop.permute.xlu0 %3428
    %v3430 = vsel %vm395, %v3427, 0
    %v3432 = vsel %vm395, %v3429, 0
    %3434 = vmatprep.subr.mxu0 0.0
    %3435 = vmatpush1.xpose.msra.mxu0 %v3432
    %3436 = vmatprep.subr.mxu0 0.0
    %3437 = vmatpush1.xpose.msra.mxu0 0.0
    %3438 = vmatprep.subr.mxu0 0.0
    %3439 = vmatpush1.xpose.msra.mxu0 0.0
    %3440 = vmatprep.subr.mxu0 0.0
    %3441 = vmatpush1.xpose.msra.mxu0 0.0
    %3442 = vmatprep.subr.mxu0 0.0
    %3443 = vmatpush1.xpose.msra.mxu0 0.0
    %3444 = vmatprep.subr.mxu0 0.0
    %3445 = vmatpush1.xpose.msra.mxu0 0.0
    %3446 = vmatprep.subr.mxu0 0.0
    %3447 = vmatpush1.xpose.msra.mxu0 0.0
    %3448 = vmatprep.subr.mxu0 0.0
    %3449 = vmatpush1.xpose.msra.mxu0 0.0
    %3450 = vmatprep.subr.mxu0 0.0
    %3451 = vmatpush1.xpose.msra.mxu0 0.0
    %3452 = vmatprep.subr.mxu0 0.0
    %3453 = vmatpush1.xpose.msra.mxu0 0.0
    %3454 = vmatprep.subr.mxu0 0.0
    %3455 = vmatpush1.xpose.msra.mxu0 0.0
    %3456 = vmatprep.subr.mxu0 0.0
    %3457 = vmatpush1.xpose.msra.mxu0 0.0
    %3458 = vmatprep.subr.mxu0 0.0
    %3459 = vmatpush1.xpose.msra.mxu0 0.0
    %3460 = vmatprep.subr.mxu0 0.0
    %3461 = vmatpush1.xpose.msra.mxu0 0.0
    %3462 = vmatprep.subr.mxu0 0.0
    %3463 = vmatpush1.xpose.msra.mxu0 0.0
    %3464 = vmatprep.subr.mxu0 0.0
    %3465 = vmatpush1.xpose.msra.mxu0 0.0
    %3466 = vmatprep.subr.mxu0 0.0
    %3467 = vmatpush1.xpose.msra.mxu0 0.0
    %3468 = vmatprep.subr.mxu0 0.0
    %3469 = vmatpush1.xpose.msra.mxu0 0.0
    %3470 = vmatprep.subr.mxu0 0.0
    %3471 = vmatpush1.xpose.msra.mxu0 0.0
    %3472 = vmatprep.subr.mxu0 0.0
    %3473 = vmatpush1.xpose.msra.mxu0 0.0
    %3474 = vmatprep.subr.mxu0 0.0
    %3475 = vmatpush1.xpose.msra.mxu0 0.0
    %3476 = vmatprep.subr.mxu0 0.0
    %3477 = vmatpush1.xpose.msra.mxu0 0.0
    %3478 = vmatprep.subr.mxu0 0.0
    %3479 = vmatpush1.xpose.msra.mxu0 0.0
    %3480 = vmatprep.subr.mxu0 0.0
    %3481 = vmatpush1.xpose.msra.mxu0 0.0
    %3482 = vmatprep.subr.mxu0 0.0
    %3483 = vmatpush1.xpose.msra.mxu0 0.0
    %3484 = vmatprep.subr.mxu0 0.0
    %3485 = vmatpush1.xpose.msra.mxu0 0.0
    %3486 = vmatprep.subr.mxu0 0.0
    %3487 = vmatpush1.xpose.msra.mxu0 0.0
    %3488 = vmatprep.subr.mxu0 0.0
    %3489 = vmatpush1.xpose.msra.mxu0 0.0
    %3490 = vmatprep.subr.mxu0 0.0
    %3491 = vmatpush1.xpose.msra.mxu0 0.0
    %3492 = vmatprep.subr.mxu0 0.0
    %3493 = vmatpush1.xpose.msra.mxu0 0.0
    %3494 = vmatprep.subr.mxu0 0.0
    %3495 = vmatpush1.xpose.msra.mxu0 0.0
    %3496 = vmatprep.subr.mxu0 0.0
    %3497 = vmatpush1.xpose.msra.mxu0 0.0
    %3498 = vmatprep.mubr.f32.mxu0 0.0
    %3499 = vmatmul.mubr.f32.gmra.mrb[0].mxu0 %v3430
    %v3500 = vpop.f32.mrb[0].mxu0
    %v3501 = vadd.f32 0.0, %v3500
    %v3502 = vpop.f32.mrb[0].mxu0
    %3503 = vdwg.mxu0
    %v3504 = vsel %vm395, %v3501, -inf
    %3505 = vmax.xlane.f32.xlu0 %v3504
    %v3506 = vpop.xlane.xlu0 %3505
    %v3507 = vsub.f32 %v3501, %v3506
    %v3508 = vmul.f32 %v3507, 1.442695
    %v3509 = vpow.pop %v3508
    %v3510 = vsel %vm395, %v3509, 0.0
    %3511 = vadd.xlane.f32.xlu0 %v3510
    %v3512 = vpop.xlane.xlu0 %3511
    %v3513 = vrcp.pop %v3512
    %v3514 = vmul.f32 %v3509, %v3513
    %3515 = vrot.lane.b32.xlu0 %v2254, 40
    %v3516 = vpop.permute.xlu0 %3515
    %v3519 = vsel %vm395, %v3514, 0
    %3521 = vmatprep.subr.mxu0 0.0
    %3522 = vmatpush1.msra.mxu0 %v3516
    %3523 = vmatprep.subr.mxu0 0.0
    %3524 = vmatpush1.msra.mxu0 0.0
    %3525 = vmatprep.subr.mxu0 0.0
    %3526 = vmatpush1.msra.mxu0 0.0
    %3527 = vmatprep.subr.mxu0 0.0
    %3528 = vmatpush1.msra.mxu0 0.0
    %3529 = vmatprep.subr.mxu0 0.0
    %3530 = vmatpush1.msra.mxu0 0.0
    %3531 = vmatprep.subr.mxu0 0.0
    %3532 = vmatpush1.msra.mxu0 0.0
    %3533 = vmatprep.subr.mxu0 0.0
    %3534 = vmatpush1.msra.mxu0 0.0
    %3535 = vmatprep.subr.mxu0 0.0
    %3536 = vmatpush1.msra.mxu0 0.0
    %3537 = vmatprep.subr.mxu0 0.0
    %3538 = vmatpush1.msra.mxu0 0.0
    %3539 = vmatprep.subr.mxu0 0.0
    %3540 = vmatpush1.msra.mxu0 0.0
    %3541 = vmatprep.subr.mxu0 0.0
    %3542 = vmatpush1.msra.mxu0 0.0
    %3543 = vmatprep.subr.mxu0 0.0
    %3544 = vmatpush1.msra.mxu0 0.0
    %3545 = vmatprep.subr.mxu0 0.0
    %3546 = vmatpush1.msra.mxu0 0.0
    %3547 = vmatprep.subr.mxu0 0.0
    %3548 = vmatpush1.msra.mxu0 0.0
    %3549 = vmatprep.subr.mxu0 0.0
    %3550 = vmatpush1.msra.mxu0 0.0
    %3551 = vmatprep.subr.mxu0 0.0
    %3552 = vmatpush1.msra.mxu0 0.0
    %3553 = vmatprep.subr.mxu0 0.0
    %3554 = vmatpush1.msra.mxu0 0.0
    %3555 = vmatprep.subr.mxu0 0.0
    %3556 = vmatpush1.msra.mxu0 0.0
    %3557 = vmatprep.subr.mxu0 0.0
    %3558 = vmatpush1.msra.mxu0 0.0
    %3559 = vmatprep.subr.mxu0 0.0
    %3560 = vmatpush1.msra.mxu0 0.0
    %3561 = vmatprep.subr.mxu0 0.0
    %3562 = vmatpush1.msra.mxu0 0.0
    %3563 = vmatprep.subr.mxu0 0.0
    %3564 = vmatpush1.msra.mxu0 0.0
    %3565 = vmatprep.subr.mxu0 0.0
    %3566 = vmatpush1.msra.mxu0 0.0
    %3567 = vmatprep.subr.mxu0 0.0
    %3568 = vmatpush1.msra.mxu0 0.0
    %3569 = vmatprep.subr.mxu0 0.0
    %3570 = vmatpush1.msra.mxu0 0.0
    %3571 = vmatprep.subr.mxu0 0.0
    %3572 = vmatpush1.msra.mxu0 0.0
    %3573 = vmatprep.subr.mxu0 0.0
    %3574 = vmatpush1.msra.mxu0 0.0
    %3575 = vmatprep.subr.mxu0 0.0
    %3576 = vmatpush1.msra.mxu0 0.0
    %3577 = vmatprep.subr.mxu0 0.0
    %3578 = vmatpush1.msra.mxu0 0.0
    %3579 = vmatprep.subr.mxu0 0.0
    %3580 = vmatpush1.msra.mxu0 0.0
    %3581 = vmatprep.subr.mxu0 0.0
    %3582 = vmatpush1.msra.mxu0 0.0
    %3583 = vmatprep.subr.mxu0 0.0
    %3584 = vmatpush1.msra.mxu0 0.0
    %3585 = vmatprep.mubr.f32.mxu0 0.0
    %3586 = vmatmul.mubr.f32.gmra.mrb[0].mxu0 %v3519
    %v3587 = vpop.f32.mrb[0].mxu0
    %v3588 = vadd.f32 0.0, %v3587
    %v3589 = vpop.f32.mrb[0].mxu0
    %3590 = vdwg.mxu0
    %3592 = vrot.lane.b32.xlu0 %v3258, 8
    %v3593 = vpop.permute.xlu0 %3592
    %3596 = vrot.lane.b32.xlu0 %v3423, 16
    %v3597 = vpop.permute.xlu0 %3596
    %3600 = vrot.lane.b32.xlu0 %v3588, 24
    %v3601 = vpop.permute.xlu0 %3600
    %v3603 = vsel %vm395, %v3093, %v3593
    %v3604 = vsel %vm2929, %v3603, %v3597
    %v3605 = vsel %vm34, %v3604, %v3601
    %v3606 = vld [vmem:[%s3 + $0x178] sm:$0xff]
    %v3607 = vld [vmem:[%s3 + $0x180] sm:$0xff]
    %v3608 = vld [vmem:[%s3 + $0x188] sm:$0xff]
    %v3609 = vld [vmem:[%s3 + $0x190] sm:$0xff]
    %v3611 = vsel %vm126, %v2931, 0
    %v3614 = vsel %vm126, %v3605, 0
    %3616 = vmatprep.subr.mxu0 0.0
    %3617 = vmatpush1.msra.mxu0 %v3606
    %3618 = vmatprep.subr.mxu0 0.0
    %3619 = vmatpush1.msra.mxu0 %v3607
    %3620 = vmatprep.subr.mxu0 0.0
    %3621 = vmatpush1.msra.mxu0 %v3608
    %3622 = vmatprep.subr.mxu0 0.0
    %3623 = vmatpush1.msra.mxu0 %v3609
    %3624 = vmatprep.subr.mxu0 0.0
    %3625 = vmatpush1.msra.mxu0 0.0
    %3626 = vmatprep.subr.mxu0 0.0
    %3627 = vmatpush1.msra.mxu0 0.0
    %3628 = vmatprep.subr.mxu0 0.0
    %3629 = vmatpush1.msra.mxu0 0.0
    %3630 = vmatprep.subr.mxu0 0.0
    %3631 = vmatpush1.msra.mxu0 0.0
    %3632 = vmatprep.subr.mxu0 0.0
    %3633 = vmatpush1.msra.mxu0 0.0
    %3634 = vmatprep.subr.mxu0 0.0
    %3635 = vmatpush1.msra.mxu0 0.0
    %3636 = vmatprep.subr.mxu0 0.0
    %3637 = vmatpush1.msra.mxu0 0.0
    %3638 = vmatprep.subr.mxu0 0.0
    %3639 = vmatpush1.msra.mxu0 0.0
    %3640 = vmatprep.subr.mxu0 0.0
    %3641 = vmatpush1.msra.mxu0 0.0
    %3642 = vmatprep.subr.mxu0 0.0
    %3643 = vmatpush1.msra.mxu0 0.0
    %3644 = vmatprep.subr.mxu0 0.0
    %3645 = vmatpush1.msra.mxu0 0.0
    %3646 = vmatprep.subr.mxu0 0.0
    %3647 = vmatpush1.msra.mxu0 0.0
    %3648 = vmatprep.subr.mxu0 0.0
    %3649 = vmatpush1.msra.mxu0 0.0
    %3650 = vmatprep.subr.mxu0 0.0
    %3651 = vmatpush1.msra.mxu0 0.0
    %3652 = vmatprep.subr.mxu0 0.0
    %3653 = vmatpush1.msra.mxu0 0.0
    %3654 = vmatprep.subr.mxu0 0.0
    %3655 = vmatpush1.msra.mxu0 0.0
    %3656 = vmatprep.subr.mxu0 0.0
    %3657 = vmatpush1.msra.mxu0 0.0
    %3658 = vmatprep.subr.mxu0 0.0
    %3659 = vmatpush1.msra.mxu0 0.0
    %3660 = vmatprep.subr.mxu0 0.0
    %3661 = vmatpush1.msra.mxu0 0.0
    %3662 = vmatprep.subr.mxu0 0.0
    %3663 = vmatpush1.msra.mxu0 0.0
    %3664 = vmatprep.subr.mxu0 0.0
    %3665 = vmatpush1.msra.mxu0 0.0
    %3666 = vmatprep.subr.mxu0 0.0
    %3667 = vmatpush1.msra.mxu0 0.0
    %3668 = vmatprep.subr.mxu0 0.0
    %3669 = vmatpush1.msra.mxu0 0.0
    %3670 = vmatprep.subr.mxu0 0.0
    %3671 = vmatpush1.msra.mxu0 0.0
    %3672 = vmatprep.subr.mxu0 0.0
    %3673 = vmatpush1.msra.mxu0 0.0
    %3674 = vmatprep.subr.mxu0 0.0
    %3675 = vmatpush1.msra.mxu0 0.0
    %3676 = vmatprep.subr.mxu0 0.0
    %3677 = vmatpush1.msra.mxu0 0.0
    %3678 = vmatprep.subr.mxu0 0.0
    %3679 = vmatpush1.msra.mxu0 0.0
    %3680 = vmatprep.mubr.f32.mxu0 0.0
    %3681 = vmatmul.mubr.f32.gmra.mrb[0].mxu0 %v3611
    %v3682 = vpop.f32.mrb[0].mxu0
    %v3683 = vadd.f32 0.0, %v3682
    %v3684 = vpop.f32.mrb[0].mxu0
    %3685 = vmatprep.mubr.f32.mxu0 0.0
    %3686 = vmatmul.mubr.f32.gmra.mrb[0].mxu0 %v3614
    %v3687 = vpop.f32.mrb[0].mxu0
    %v3688 = vadd.f32 0.0, %v3687
    %v3689 = vpop.f32.mrb[0].mxu0
    %3690 = vdwg.mxu0
    %v3691 = vadd.f32 %v2165, %v3683
    %v3692 = vadd.f32 %v2166, %v3688
    %v3693 = vld [vmem:[%s5 + $0xc] sm:$0x1]
    %v3694 = vlaneseq
    %v3695 = vshrl.u32 %v3694, 7
    %v3696 = vsub.s32 0, %v3695
    %v3697 = vrot.slane %v3693, %v3696
    %v3698 = vadd.f32 %v3691, %v3697
    %v3699 = vadd.f32 %v3692, %v3697
    %v3700 = vsel %vm126, %v3698, 0.0
    %3701 = vadd.xlane.f32.xlu0 %v3700
    %v3702 = vpop.xlane.xlu0 %3701
    %v3703 = vsel %vm126, %v3699, 0.0
    %3704 = vadd.xlane.f32.xlu0 %v3703
    %v3705 = vpop.xlane.xlu0 %3704
    %v3706 = vmul.f32 %v3702, %v133
    %v3707 = vmul.f32 %v3705, %v133
    %v3708 = vsub.f32 %v3698, %v3706
    %v3709 = vsub.f32 %v3699, %v3707
    %v3710 = vmul.f32 %v3708, %v3708
    %v3711 = vmul.f32 %v3709, %v3709
    %v3712 = vsel %vm126, %v3710, 0.0
    %3713 = vadd.xlane.f32.xlu0 %v3712
    %v3714 = vpop.xlane.xlu0 %3713
    %v3715 = vsel %vm126, %v3711, 0.0
    %3716 = vadd.xlane.f32.xlu0 %v3715
    %v3717 = vpop.xlane.xlu0 %3716
    %v3718 = vmul.f32 %v3714, %v133
    %v3719 = vmul.f32 %v3717, %v133
    %v3720 = vadd.f32 %v3718, 1e-05
    %v3721 = vadd.f32 %v3719, 1e-05
    %v3722 = vrsqrt.pop %v3720
    %v3723 = vrsqrt.pop %v3721
    %v3724 = vmul.f32 %v3708, %v3722
    %v3725 = vmul.f32 %v3709, %v3723
    %v3726 = vld [vmem:[%s5 + $0xd] sm:$0x1]
    %v3727 = vlaneseq
    %v3728 = vshrl.u32 %v3727, 7
    %v3729 = vsub.s32 0, %v3728
    %v3730 = vrot.slane %v3726, %v3729
    %v3731 = vmul.f32 %v3724, %v3730
    %v3732 = vmul.f32 %v3725, %v3730
    %v3733 = vld [vmem:[%s5 + $0xe] sm:$0x1]
    %v3734 = vlaneseq
    %v3735 = vshrl.u32 %v3734, 7
    %v3736 = vsub.s32 0, %v3735
    %v3737 = vrot.slane %v3733, %v3736
    %v3738 = vadd.f32 %v3731, %v3737
    %v3739 = vadd.f32 %v3732, %v3737
    %v3740 = vld [vmem:[%s4 + $0x40] sm:$0xff]
    %v3741 = vld [vmem:[%s4 + $0x48] sm:$0xff]
    %v3742 = vld [vmem:[%s4 + $0x50] sm:$0xff]
    %v3743 = vld [vmem:[%s4 + $0x58] sm:$0xff]
    %v3744 = vld [vmem:[%s5 + $0xf] sm:$0x1]
    %v3745 = vlaneseq
    %v3746 = vshrl.u32 %v3745, 7
    %v3747 = vsub.s32 0, %v3746
    %v3748 = vrot.slane %v3744, %v3747
    %v3750 = vsel %vm126, %v3738, 0
    %v3753 = vsel %vm126, %v3739, 0
    %3755 = vmatprep.subr.mxu0 0.0
    %3756 = vmatpush1.msra.mxu0 %v3740
    %3757 = vmatprep.subr.mxu0 0.0
    %3758 = vmatpush1.msra.mxu0 %v3741
    %3759 = vmatprep.subr.mxu0 0.0
    %3760 = vmatpush1.msra.mxu0 %v3742
    %3761 = vmatprep.subr.mxu0 0.0
    %3762 = vmatpush1.msra.mxu0 %v3743
    %3763 = vmatprep.subr.mxu0 0.0
    %3764 = vmatpush1.msra.mxu0 0.0
    %3765 = vmatprep.subr.mxu0 0.0
    %3766 = vmatpush1.msra.mxu0 0.0
    %3767 = vmatprep.subr.mxu0 0.0
    %3768 = vmatpush1.msra.mxu0 0.0
    %3769 = vmatprep.subr.mxu0 0.0
    %3770 = vmatpush1.msra.mxu0 0.0
    %3771 = vmatprep.subr.mxu0 0.0
    %3772 = vmatpush1.msra.mxu0 0.0
    %3773 = vmatprep.subr.mxu0 0.0
    %3774 = vmatpush1.msra.mxu0 0.0
    %3775 = vmatprep.subr.mxu0 0.0
    %3776 = vmatpush1.msra.mxu0 0.0
    %3777 = vmatprep.subr.mxu0 0.0
    %3778 = vmatpush1.msra.mxu0 0.0
    %3779 = vmatprep.subr.mxu0 0.0
    %3780 = vmatpush1.msra.mxu0 0.0
    %3781 = vmatprep.subr.mxu0 0.0
    %3782 = vmatpush1.msra.mxu0 0.0
    %3783 = vmatprep.subr.mxu0 0.0
    %3784 = vmatpush1.msra.mxu0 0.0
    %3785 = vmatprep.subr.mxu0 0.0
    %3786 = vmatpush1.msra.mxu0 0.0
    %3787 = vmatprep.subr.mxu0 0.0
    %3788 = vmatpush1.msra.mxu0 0.0
    %3789 = vmatprep.subr.mxu0 0.0
    %3790 = vmatpush1.msra.mxu0 0.0
    %3791 = vmatprep.subr.mxu0 0.0
    %3792 = vmatpush1.msra.mxu0 0.0
    %3793 = vmatprep.subr.mxu0 0.0
    %3794 = vmatpush1.msra.mxu0 0.0
    %3795 = vmatprep.subr.mxu0 0.0
    %3796 = vmatpush1.msra.mxu0 0.0
    %3797 = vmatprep.subr.mxu0 0.0
    %3798 = vmatpush1.msra.mxu0 0.0
    %3799 = vmatprep.subr.mxu0 0.0
    %3800 = vmatpush1.msra.mxu0 0.0
    %3801 = vmatprep.subr.mxu0 0.0
    %3802 = vmatpush1.msra.mxu0 0.0
    %3803 = vmatprep.subr.mxu0 0.0
    %3804 = vmatpush1.msra.mxu0 0.0
    %3805 = vmatprep.subr.mxu0 0.0
    %3806 = vmatpush1.msra.mxu0 0.0
    %3807 = vmatprep.subr.mxu0 0.0
    %3808 = vmatpush1.msra.mxu0 0.0
    %3809 = vmatprep.subr.mxu0 0.0
    %3810 = vmatpush1.msra.mxu0 0.0
    %3811 = vmatprep.subr.mxu0 0.0
    %3812 = vmatpush1.msra.mxu0 0.0
    %3813 = vmatprep.subr.mxu0 0.0
    %3814 = vmatpush1.msra.mxu0 0.0
    %3815 = vmatprep.subr.mxu0 0.0
    %3816 = vmatpush1.msra.mxu0 0.0
    %3817 = vmatprep.subr.mxu0 0.0
    %3818 = vmatpush1.msra.mxu0 0.0
    %3819 = vmatprep.mubr.f32.mxu0 0.0
    %3820 = vmatmul.mubr.f32.gmra.mrb[0].mxu0 %v3750
    %v3821 = vpop.f32.mrb[0].mxu0
    %v3822 = vadd.f32 %v3748, %v3821
    %v3823 = vpop.f32.mrb[0].mxu0
    %3824 = vmatprep.mubr.f32.mxu0 0.0
    %3825 = vmatmul.mubr.f32.gmra.mrb[0].mxu0 %v3753
    %v3826 = vpop.f32.mrb[0].mxu0
    %v3827 = vadd.f32 %v3748, %v3826
    %v3828 = vpop.f32.mrb[0].mxu0
    %3829 = vdwg.mxu0
    %v3830 = vmul.f32 %v3822, 0.5
    %v3831 = vmul.f32 %v3827, 0.5
    %v3832 = vmul.f32 %v3822, 0.70710677
    %v3833 = vmul.f32 %v3827, 0.70710677
    %v3834 = verf.f32.pop %v3832
    %v3835 = verf.f32.pop %v3833
    %v3836 = vadd.f32 %v3834, 1.0
    %v3837 = vadd.f32 %v3835, 1.0
    %v3838 = vmul.f32 %v3830, %v3836
    %v3839 = vmul.f32 %v3831, %v3837
    %v3840 = vld [vmem:[%s3 + $0x198] sm:$0xff]
    %v3841 = vld [vmem:[%s3 + $0x1a0] sm:$0xff]
    %v3842 = vld [vmem:[%s3 + $0x1a8] sm:$0xff]
    %v3843 = vld [vmem:[%s3 + $0x1b0] sm:$0xff]
    %v3844 = vld [vmem:[%s3 + $0x1b8] sm:$0xff]
    %v3845 = vld [vmem:[%s3 + $0x1c0] sm:$0xff]
    %v3846 = vld [vmem:[%s3 + $0x1c8] sm:$0xff]
    %v3847 = vld [vmem:[%s3 + $0x1d0] sm:$0xff]
    %v3848 = vld [vmem:[%s3 + $0x1d8] sm:$0xff]
    %v3849 = vld [vmem:[%s3 + $0x1e0] sm:$0xff]
    %v3850 = vld [vmem:[%s3 + $0x1e8] sm:$0xff]
    %v3851 = vld [vmem:[%s3 + $0x1f0] sm:$0xff]
    %v3852 = vld [vmem:[%s3 + $0x1f8] sm:$0xff]
    %v3853 = vld [vmem:[%s3 + $0x200] sm:$0xff]
    %v3854 = vld [vmem:[%s3 + $0x208] sm:$0xff]
    %v3855 = vld [vmem:[%s3 + $0x210] sm:$0xff]
    %v3856 = vld [vmem:[%s5 + $0x10] sm:$0x1]
    %v3857 = vlaneseq
    %v3858 = vshrl.u32 %v3857, 7
    %v3859 = vsub.s32 0, %v3858
    %v3860 = vrot.slane %v3856, %v3859
    %3861 = vmatprep.subr.mxu0 0.0
    %3862 = vmatpush1.msra.mxu0 %v3840
    %3863 = vmatprep.subr.mxu0 0.0
    %3864 = vmatpush1.msra.mxu0 %v3841
    %3865 = vmatprep.subr.mxu0 0.0
    %3866 = vmatpush1.msra.mxu0 %v3842
    %3867 = vmatprep.subr.mxu0 0.0
    %3868 = vmatpush1.msra.mxu0 %v3843
    %3869 = vmatprep.subr.mxu0 0.0
    %3870 = vmatpush1.msra.mxu0 %v3844
    %3871 = vmatprep.subr.mxu0 0.0
    %3872 = vmatpush1.msra.mxu0 %v3845
    %3873 = vmatprep.subr.mxu0 0.0
    %3874 = vmatpush1.msra.mxu0 %v3846
    %3875 = vmatprep.subr.mxu0 0.0
    %3876 = vmatpush1.msra.mxu0 %v3847
    %3877 = vmatprep.subr.mxu0 0.0
    %3878 = vmatpush1.msra.mxu0 %v3848
    %3879 = vmatprep.subr.mxu0 0.0
    %3880 = vmatpush1.msra.mxu0 %v3849
    %3881 = vmatprep.subr.mxu0 0.0
    %3882 = vmatpush1.msra.mxu0 %v3850
    %3883 = vmatprep.subr.mxu0 0.0
    %3884 = vmatpush1.msra.mxu0 %v3851
    %3885 = vmatprep.subr.mxu0 0.0
    %3886 = vmatpush1.msra.mxu0 %v3852
    %3887 = vmatprep.subr.mxu0 0.0
    %3888 = vmatpush1.msra.mxu0 %v3853
    %3889 = vmatprep.subr.mxu0 0.0
    %3890 = vmatpush1.msra.mxu0 %v3854
    %3891 = vmatprep.subr.mxu0 0.0
    %3892 = vmatpush1.msra.mxu0 %v3855
    %3893 = vmatprep.subr.mxu0 0.0
    %3894 = vmatpush1.msra.mxu0 0.0
    %3895 = vmatprep.subr.mxu0 0.0
    %3896 = vmatpush1.msra.mxu0 0.0
    %3897 = vmatprep.subr.mxu0 0.0
    %3898 = vmatpush1.msra.mxu0 0.0
    %3899 = vmatprep.subr.mxu0 0.0
    %3900 = vmatpush1.msra.mxu0 0.0
    %3901 = vmatprep.subr.mxu0 0.0
    %3902 = vmatpush1.msra.mxu0 0.0
    %3903 = vmatprep.subr.mxu0 0.0
    %3904 = vmatpush1.msra.mxu0 0.0
    %3905 = vmatprep.subr.mxu0 0.0
    %3906 = vmatpush1.msra.mxu0 0.0
    %3907 = vmatprep.subr.mxu0 0.0
    %3908 = vmatpush1.msra.mxu0 0.0
    %3909 = vmatprep.subr.mxu0 0.0
    %3910 = vmatpush1.msra.mxu0 0.0
    %3911 = vmatprep.subr.mxu0 0.0
    %3912 = vmatpush1.msra.mxu0 0.0
    %3913 = vmatprep.subr.mxu0 0.0
    %3914 = vmatpush1.msra.mxu0 0.0
    %3915 = vmatprep.subr.mxu0 0.0
    %3916 = vmatpush1.msra.mxu0 0.0
    %3917 = vmatprep.subr.mxu0 0.0
    %3918 = vmatpush1.msra.mxu0 0.0
    %3919 = vmatprep.subr.mxu0 0.0
    %3920 = vmatpush1.msra.mxu0 0.0
    %3921 = vmatprep.subr.mxu0 0.0
    %3922 = vmatpush1.msra.mxu0 0.0
    %3923 = vmatprep.subr.mxu0 0.0
    %3924 = vmatpush1.msra.mxu0 0.0
    %3925 = vmatprep.mubr.f32.mxu0 0.0
    %3926 = vmatmul.mubr.f32.gmra.mrb[0].mxu0 %v3838
    %v3927 = vpop.f32.mrb[0].mxu0
    %v3928 = vadd.f32 %v3860, %v3927
    %v3929 = vpop.f32.mrb[0].mxu0
    %3930 = vmatprep.mubr.f32.mxu0 0.0
    %3931 = vmatmul.mubr.f32.gmra.mrb[0].mxu0 %v3839
    %v3932 = vpop.f32.mrb[0].mxu0
    %v3933 = vadd.f32 %v3860, %v3932
    %v3934 = vpop.f32.mrb[0].mxu0
    %3935 = vdwg.mxu0
    %v3936 = vadd.f32 %v3698, %v3928
    %v3937 = vadd.f32 %v3699, %v3933
    %v3938 = vsel %vm126, %v3936, 0.0
    %3939 = vadd.xlane.f32.xlu0 %v3938
    %v3940 = vpop.xlane.xlu0 %3939
    %v3941 = vsel %vm126, %v3937, 0.0
    %3942 = vadd.xlane.f32.xlu0 %v3941
    %v3943 = vpop.xlane.xlu0 %3942
    %v3944 = vmul.f32 %v3940, %v133
    %v3945 = vmul.f32 %v3943, %v133
    %v3946 = vsub.f32 %v3936, %v3944
    %v3947 = vsub.f32 %v3937, %v3945
    %v3948 = vmul.f32 %v3946, %v3946
    %v3949 = vmul.f32 %v3947, %v3947
    %v3950 = vsel %vm126, %v3948, 0.0
    %3951 = vadd.xlane.f32.xlu0 %v3950
    %v3952 = vpop.xlane.xlu0 %3951
    %v3953 = vsel %vm126, %v3949, 0.0
    %3954 = vadd.xlane.f32.xlu0 %v3953
    %v3955 = vpop.xlane.xlu0 %3954
    %v3956 = vmul.f32 %v3952, %v133
    %v3957 = vmul.f32 %v3955, %v133
    %v3958 = vadd.f32 %v3956, 1e-05
    %v3959 = vadd.f32 %v3957, 1e-05
    %v3960 = vrsqrt.pop %v3958
    %v3961 = vrsqrt.pop %v3959
    %v3962 = vmul.f32 %v3946, %v3960
    %v3963 = vmul.f32 %v3947, %v3961
    %v3964 = vld [vmem:[%s5 + $0x11] sm:$0x1]
    %v3965 = vlaneseq
    %v3966 = vshrl.u32 %v3965, 7
    %v3967 = vsub.s32 0, %v3966
    %v3968 = vrot.slane %v3964, %v3967
    %v3969 = vmul.f32 %v3962, %v3968
    %v3970 = vmul.f32 %v3963, %v3968
    %v3971 = vld [vmem:[%s5 + $0x12] sm:$0x1]
    %v3972 = vlaneseq
    %v3973 = vshrl.u32 %v3972, 7
    %v3974 = vsub.s32 0, %v3973
    %v3975 = vrot.slane %v3971, %v3974
    %v3976 = vadd.f32 %v3969, %v3975
    %v3977 = vadd.f32 %v3970, %v3975
    %v3978 = vsel %vm126, %v3976, 0.0
    %3979 = vadd.xlane.f32.xlu0 %v3978
    %v3980 = vpop.xlane.xlu0 %3979
    %v3981 = vsel %vm126, %v3977, 0.0
    %3982 = vadd.xlane.f32.xlu0 %v3981
    %v3983 = vpop.xlane.xlu0 %3982
    %v3984 = vmul.f32 %v3980, %v133
    %v3985 = vmul.f32 %v3983, %v133
    %v3986 = vsub.f32 %v3976, %v3984
    %v3987 = vsub.f32 %v3977, %v3985
    %v3988 = vmul.f32 %v3986, %v3986
    %v3989 = vmul.f32 %v3987, %v3987
    %v3990 = vsel %vm126, %v3988, 0.0
    %3991 = vadd.xlane.f32.xlu0 %v3990
    %v3992 = vpop.xlane.xlu0 %3991
    %v3993 = vsel %vm126, %v3989, 0.0
    %3994 = vadd.xlane.f32.xlu0 %v3993
    %v3995 = vpop.xlane.xlu0 %3994
    %v3996 = vmul.f32 %v3992, %v133
    %v3997 = vmul.f32 %v3995, %v133
    %v3998 = vadd.f32 %v3996, 1e-05
    %v3999 = vadd.f32 %v3997, 1e-05
    %v4000 = vrsqrt.pop %v3998
    %v4001 = vrsqrt.pop %v3999
    %v4002 = vmul.f32 %v3986, %v4000
    %v4003 = vmul.f32 %v3987, %v4001
    %v4004 = vld [vmem:[%s5 + $0x13] sm:$0x1]
    %v4005 = vlaneseq
    %v4006 = vshrl.u32 %v4005, 7
    %v4007 = vsub.s32 0, %v4006
    %v4008 = vrot.slane %v4004, %v4007
    %v4009 = vmul.f32 %v4002, %v4008
    %v4010 = vmul.f32 %v4003, %v4008
    %v4011 = vld [vmem:[%s5 + $0x14] sm:$0x1]
    %v4012 = vlaneseq
    %v4013 = vshrl.u32 %v4012, 7
    %v4014 = vsub.s32 0, %v4013
    %v4015 = vrot.slane %v4011, %v4014
    %v4016 = vadd.f32 %v4009, %v4015
    %v4017 = vadd.f32 %v4010, %v4015
    %v4018 = vld [vmem:[%s3 + $0x218] sm:$0xff]
    %v4019 = vld [vmem:[%s3 + $0x220] sm:$0xff]
    %v4020 = vld [vmem:[%s3 + $0x228] sm:$0xff]
    %v4021 = vld [vmem:[%s3 + $0x230] sm:$0xff]
    %v4022 = vld [vmem:[%s5 + $0x15] sm:$0x1]
    %v4023 = vlaneseq
    %v4024 = vshrl.u32 %v4023, 7
    %v4025 = vsub.s32 0, %v4024
    %v4026 = vrot.slane %v4022, %v4025
    %v4027 = vmul.f32 %v4002, %v4026
    %v4028 = vmul.f32 %v4003, %v4026
    %v4029 = vld [vmem:[%s5 + $0x16] sm:$0x1]
    %v4030 = vlaneseq
    %v4031 = vshrl.u32 %v4030, 7
    %v4032 = vsub.s32 0, %v4031
    %v4033 = vrot.slane %v4029, %v4032
    %v4034 = vadd.f32 %v4027, %v4033
    %v4035 = vadd.f32 %v4028, %v4033
    %v4036 = vld [vmem:[%s4 + $0x60] sm:$0xff]
    %v4037 = vld [vmem:[%s4 + $0x68] sm:$0xff]
    %v4038 = vld [vmem:[%s4 + $0x70] sm:$0xff]
    %v4039 = vld [vmem:[%s4 + $0x78] sm:$0xff]
    %v4040 = vld [vmem:[%s5 + $0x17] sm:$0x1]
    %v4041 = vlaneseq
    %v4042 = vshrl.u32 %v4041, 7
    %v4043 = vsub.s32 0, %v4042
    %v4044 = vrot.slane %v4040, %v4043
    %v4046 = vsel %vm126, %v4034, 0
    %v4049 = vsel %vm126, %v4035, 0
    %4051 = vmatprep.subr.mxu0 0.0
    %4052 = vmatpush1.msra.mxu0 %v4036
    %4053 = vmatprep.subr.mxu0 0.0
    %4054 = vmatpush1.msra.mxu0 %v4037
    %4055 = vmatprep.subr.mxu0 0.0
    %4056 = vmatpush1.msra.mxu0 %v4038
    %4057 = vmatprep.subr.mxu0 0.0
    %4058 = vmatpush1.msra.mxu0 %v4039
    %4059 = vmatprep.subr.mxu0 0.0
    %4060 = vmatpush1.msra.mxu0 0.0
    %4061 = vmatprep.subr.mxu0 0.0
    %4062 = vmatpush1.msra.mxu0 0.0
    %4063 = vmatprep.subr.mxu0 0.0
    %4064 = vmatpush1.msra.mxu0 0.0
    %4065 = vmatprep.subr.mxu0 0.0
    %4066 = vmatpush1.msra.mxu0 0.0
    %4067 = vmatprep.subr.mxu0 0.0
    %4068 = vmatpush1.msra.mxu0 0.0
    %4069 = vmatprep.subr.mxu0 0.0
    %4070 = vmatpush1.msra.mxu0 0.0
    %4071 = vmatprep.subr.mxu0 0.0
    %4072 = vmatpush1.msra.mxu0 0.0
    %4073 = vmatprep.subr.mxu0 0.0
    %4074 = vmatpush1.msra.mxu0 0.0
    %4075 = vmatprep.subr.mxu0 0.0
    %4076 = vmatpush1.msra.mxu0 0.0
    %4077 = vmatprep.subr.mxu0 0.0
    %4078 = vmatpush1.msra.mxu0 0.0
    %4079 = vmatprep.subr.mxu0 0.0
    %4080 = vmatpush1.msra.mxu0 0.0
    %4081 = vmatprep.subr.mxu0 0.0
    %4082 = vmatpush1.msra.mxu0 0.0
    %4083 = vmatprep.subr.mxu0 0.0
    %4084 = vmatpush1.msra.mxu0 0.0
    %4085 = vmatprep.subr.mxu0 0.0
    %4086 = vmatpush1.msra.mxu0 0.0
    %4087 = vmatprep.subr.mxu0 0.0
    %4088 = vmatpush1.msra.mxu0 0.0
    %4089 = vmatprep.subr.mxu0 0.0
    %4090 = vmatpush1.msra.mxu0 0.0
    %4091 = vmatprep.subr.mxu0 0.0
    %4092 = vmatpush1.msra.mxu0 0.0
    %4093 = vmatprep.subr.mxu0 0.0
    %4094 = vmatpush1.msra.mxu0 0.0
    %4095 = vmatprep.subr.mxu0 0.0
    %4096 = vmatpush1.msra.mxu0 0.0
    %4097 = vmatprep.subr.mxu0 0.0
    %4098 = vmatpush1.msra.mxu0 0.0
    %4099 = vmatprep.subr.mxu0 0.0
    %4100 = vmatpush1.msra.mxu0 0.0
    %4101 = vmatprep.subr.mxu0 0.0
    %4102 = vmatpush1.msra.mxu0 0.0
    %4103 = vmatprep.subr.mxu0 0.0
    %4104 = vmatpush1.msra.mxu0 0.0
    %4105 = vmatprep.subr.mxu0 0.0
    %4106 = vmatpush1.msra.mxu0 0.0
    %4107 = vmatprep.subr.mxu0 0.0
    %4108 = vmatpush1.msra.mxu0 0.0
    %4109 = vmatprep.subr.mxu0 0.0
    %4110 = vmatpush1.msra.mxu0 0.0
    %4111 = vmatprep.subr.mxu0 0.0
    %4112 = vmatpush1.msra.mxu0 0.0
    %4113 = vmatprep.subr.mxu0 0.0
    %4114 = vmatpush1.msra.mxu0 0.0
    %4115 = vmatprep.mubr.f32.mxu0 0.0
    %4116 = vmatmul.mubr.f32.gmra.mrb[0].mxu0 %v4046
    %v4117 = vpop.f32.mrb[0].mxu0
    %v4118 = vadd.f32 %v4044, %v4117
    %v4119 = vpop.f32.mrb[0].mxu0
    %4120 = vmatprep.mubr.f32.mxu0 0.0
    %4121 = vmatmul.mubr.f32.gmra.mrb[0].mxu0 %v4049
    %v4122 = vpop.f32.mrb[0].mxu0
    %v4123 = vadd.f32 %v4044, %v4122
    %v4124 = vpop.f32.mrb[0].mxu0
    %4125 = vdwg.mxu0
    %v4126 = vmul.f32 %v4118, 0.5
    %v4127 = vmul.f32 %v4123, 0.5
    %v4128 = vmul.f32 %v4118, 0.70710677
    %v4129 = vmul.f32 %v4123, 0.70710677
    %v4130 = verf.f32.pop %v4128
    %v4131 = verf.f32.pop %v4129
    %v4132 = vadd.f32 %v4130, 1.0
    %v4133 = vadd.f32 %v4131, 1.0
    %v4134 = vmul.f32 %v4126, %v4132
    %v4135 = vmul.f32 %v4127, %v4133
    %v4136 = vld [vmem:[%s3 + $0x238] sm:$0xff]
    %v4137 = vld [vmem:[%s3 + $0x240] sm:$0xff]
    %v4138 = vld [vmem:[%s3 + $0x248] sm:$0xff]
    %v4139 = vld [vmem:[%s3 + $0x250] sm:$0xff]
    %v4140 = vld [vmem:[%s3 + $0x258] sm:$0xff]
    %v4141 = vld [vmem:[%s3 + $0x260] sm:$0xff]
    %v4142 = vld [vmem:[%s3 + $0x268] sm:$0xff]
    %v4143 = vld [vmem:[%s3 + $0x270] sm:$0xff]
    %v4144 = vld [vmem:[%s3 + $0x278] sm:$0xff]
    %v4145 = vld [vmem:[%s3 + $0x280] sm:$0xff]
    %v4146 = vld [vmem:[%s3 + $0x288] sm:$0xff]
    %v4147 = vld [vmem:[%s3 + $0x290] sm:$0xff]
    %v4148 = vld [vmem:[%s3 + $0x298] sm:$0xff]
    %v4149 = vld [vmem:[%s3 + $0x2a0] sm:$0xff]
    %v4150 = vld [vmem:[%s3 + $0x2a8] sm:$0xff]
    %v4151 = vld [vmem:[%s3 + $0x2b0] sm:$0xff]
    %v4152 = vld [vmem:[%s5 + $0x18] sm:$0x1]
    %v4153 = vlaneseq
    %v4154 = vshrl.u32 %v4153, 7
    %v4155 = vsub.s32 0, %v4154
    %v4156 = vrot.slane %v4152, %v4155
    %4157 = vmatprep.subr.mxu0 0.0
    %4158 = vmatpush1.msra.mxu0 %v4136
    %4159 = vmatprep.subr.mxu0 0.0
    %4160 = vmatpush1.msra.mxu0 %v4137
    %4161 = vmatprep.subr.mxu0 0.0
    %4162 = vmatpush1.msra.mxu0 %v4138
    %4163 = vmatprep.subr.mxu0 0.0
    %4164 = vmatpush1.msra.mxu0 %v4139
    %4165 = vmatprep.subr.mxu0 0.0
    %4166 = vmatpush1.msra.mxu0 %v4140
    %4167 = vmatprep.subr.mxu0 0.0
    %4168 = vmatpush1.msra.mxu0 %v4141
    %4169 = vmatprep.subr.mxu0 0.0
    %4170 = vmatpush1.msra.mxu0 %v4142
    %4171 = vmatprep.subr.mxu0 0.0
    %4172 = vmatpush1.msra.mxu0 %v4143
    %4173 = vmatprep.subr.mxu0 0.0
    %4174 = vmatpush1.msra.mxu0 %v4144
    %4175 = vmatprep.subr.mxu0 0.0
    %4176 = vmatpush1.msra.mxu0 %v4145
    %4177 = vmatprep.subr.mxu0 0.0
    %4178 = vmatpush1.msra.mxu0 %v4146
    %4179 = vmatprep.subr.mxu0 0.0
    %4180 = vmatpush1.msra.mxu0 %v4147
    %4181 = vmatprep.subr.mxu0 0.0
    %4182 = vmatpush1.msra.mxu0 %v4148
    %4183 = vmatprep.subr.mxu0 0.0
    %4184 = vmatpush1.msra.mxu0 %v4149
    %4185 = vmatprep.subr.mxu0 0.0
    %4186 = vmatpush1.msra.mxu0 %v4150
    %4187 = vmatprep.subr.mxu0 0.0
    %4188 = vmatpush1.msra.mxu0 %v4151
    %4189 = vmatprep.subr.mxu0 0.0
    %4190 = vmatpush1.msra.mxu0 0.0
    %4191 = vmatprep.subr.mxu0 0.0
    %4192 = vmatpush1.msra.mxu0 0.0
    %4193 = vmatprep.subr.mxu0 0.0
    %4194 = vmatpush1.msra.mxu0 0.0
    %4195 = vmatprep.subr.mxu0 0.0
    %4196 = vmatpush1.msra.mxu0 0.0
    %4197 = vmatprep.subr.mxu0 0.0
    %4198 = vmatpush1.msra.mxu0 0.0
    %4199 = vmatprep.subr.mxu0 0.0
    %4200 = vmatpush1.msra.mxu0 0.0
    %4201 = vmatprep.subr.mxu0 0.0
    %4202 = vmatpush1.msra.mxu0 0.0
    %4203 = vmatprep.subr.mxu0 0.0
    %4204 = vmatpush1.msra.mxu0 0.0
    %4205 = vmatprep.subr.mxu0 0.0
    %4206 = vmatpush1.msra.mxu0 0.0
    %4207 = vmatprep.subr.mxu0 0.0
    %4208 = vmatpush1.msra.mxu0 0.0
    %4209 = vmatprep.subr.mxu0 0.0
    %4210 = vmatpush1.msra.mxu0 0.0
    %4211 = vmatprep.subr.mxu0 0.0
    %4212 = vmatpush1.msra.mxu0 0.0
    %4213 = vmatprep.subr.mxu0 0.0
    %4214 = vmatpush1.msra.mxu0 0.0
    %4215 = vmatprep.subr.mxu0 0.0
    %4216 = vmatpush1.msra.mxu0 0.0
    %4217 = vmatprep.subr.mxu0 0.0
    %4218 = vmatpush1.msra.mxu0 0.0
    %4219 = vmatprep.subr.mxu0 0.0
    %4220 = vmatpush1.msra.mxu0 0.0
    %4221 = vmatprep.mubr.f32.mxu0 0.0
    %4222 = vmatmul.mubr.f32.gmra.mrb[0].mxu0 %v4134
    %v4223 = vpop.f32.mrb[0].mxu0
    %v4224 = vadd.f32 %v4156, %v4223
    %v4225 = vpop.f32.mrb[0].mxu0
    %4226 = vmatprep.mubr.f32.mxu0 0.0
    %4227 = vmatmul.mubr.f32.gmra.mrb[0].mxu0 %v4135
    %v4228 = vpop.f32.mrb[0].mxu0
    %v4229 = vadd.f32 %v4156, %v4228
    %v4230 = vpop.f32.mrb[0].mxu0
    %4231 = vdwg.mxu0
    %v4233 = vsel %vm126, %v4016, 0
    %v4236 = vsel %vm126, %v4017, 0
    %4238 = vmatprep.subr.mxu0 0.0
    %4239 = vmatpush1.msra.mxu0 %v4018
    %4240 = vmatprep.subr.mxu0 0.0
    %4241 = vmatpush1.msra.mxu0 %v4019
    %4242 = vmatprep.subr.mxu0 0.0
    %4243 = vmatpush1.msra.mxu0 %v4020
    %4244 = vmatprep.subr.mxu0 0.0
    %4245 = vmatpush1.msra.mxu0 %v4021
    %4246 = vmatprep.subr.mxu0 0.0
    %4247 = vmatpush1.msra.mxu0 0.0
    %4248 = vmatprep.subr.mxu0 0.0
    %4249 = vmatpush1.msra.mxu0 0.0
    %4250 = vmatprep.subr.mxu0 0.0
    %4251 = vmatpush1.msra.mxu0 0.0
    %4252 = vmatprep.subr.mxu0 0.0
    %4253 = vmatpush1.msra.mxu0 0.0
    %4254 = vmatprep.subr.mxu0 0.0
    %4255 = vmatpush1.msra.mxu0 0.0
    %4256 = vmatprep.subr.mxu0 0.0
    %4257 = vmatpush1.msra.mxu0 0.0
    %4258 = vmatprep.subr.mxu0 0.0
    %4259 = vmatpush1.msra.mxu0 0.0
    %4260 = vmatprep.subr.mxu0 0.0
    %4261 = vmatpush1.msra.mxu0 0.0
    %4262 = vmatprep.subr.mxu0 0.0
    %4263 = vmatpush1.msra.mxu0 0.0
    %4264 = vmatprep.subr.mxu0 0.0
    %4265 = vmatpush1.msra.mxu0 0.0
    %4266 = vmatprep.subr.mxu0 0.0
    %4267 = vmatpush1.msra.mxu0 0.0
    %4268 = vmatprep.subr.mxu0 0.0
    %4269 = vmatpush1.msra.mxu0 0.0
    %4270 = vmatprep.subr.mxu0 0.0
    %4271 = vmatpush1.msra.mxu0 0.0
    %4272 = vmatprep.subr.mxu0 0.0
    %4273 = vmatpush1.msra.mxu0 0.0
    %4274 = vmatprep.subr.mxu0 0.0
    %4275 = vmatpush1.msra.mxu0 0.0
    %4276 = vmatprep.subr.mxu0 0.0
    %4277 = vmatpush1.msra.mxu0 0.0
    %4278 = vmatprep.subr.mxu0 0.0
    %4279 = vmatpush1.msra.mxu0 0.0
    %4280 = vmatprep.subr.mxu0 0.0
    %4281 = vmatpush1.msra.mxu0 0.0
    %4282 = vmatprep.subr.mxu0 0.0
    %4283 = vmatpush1.msra.mxu0 0.0
    %4284 = vmatprep.subr.mxu0 0.0
    %4285 = vmatpush1.msra.mxu0 0.0
    %4286 = vmatprep.subr.mxu0 0.0
    %4287 = vmatpush1.msra.mxu0 0.0
    %4288 = vmatprep.subr.mxu0 0.0
    %4289 = vmatpush1.msra.mxu0 0.0
    %4290 = vmatprep.subr.mxu0 0.0
    %4291 = vmatpush1.msra.mxu0 0.0
    %4292 = vmatprep.subr.mxu0 0.0
    %4293 = vmatpush1.msra.mxu0 0.0
    %4294 = vmatprep.subr.mxu0 0.0
    %4295 = vmatpush1.msra.mxu0 0.0
    %4296 = vmatprep.subr.mxu0 0.0
    %4297 = vmatpush1.msra.mxu0 0.0
    %4298 = vmatprep.subr.mxu0 0.0
    %4299 = vmatpush1.msra.mxu0 0.0
    %4300 = vmatprep.subr.mxu0 0.0
    %4301 = vmatpush1.msra.mxu0 0.0
    %4302 = vmatprep.mubr.f32.mxu0 0.0
    %4303 = vmatmul.mubr.f32.gmra.mrb[0].mxu0 %v4233
    %v4304 = vpop.f32.mrb[0].mxu0
    %v4305 = vadd.f32 %v4224, %v4304
    %v4306 = vpop.f32.mrb[0].mxu0
    %4307 = vmatprep.mubr.f32.mxu0 0.0
    %4308 = vmatmul.mubr.f32.gmra.mrb[0].mxu0 %v4236
    %v4309 = vpop.f32.mrb[0].mxu0
    %v4310 = vadd.f32 %v4229, %v4309
    %v4311 = vpop.f32.mrb[0].mxu0
    %4312 = vdwg.mxu0
    %4313 = vst.msk [vmem:[#allocation2] sm:$0xff] %vm2929, %v4305
    %4314 = vst.msk [vmem:[#allocation2 + $0x8] sm:$0xff] %vm2929, %v4310
    // Predicated region
    $region26: #{share_refiner_forward.1} parent=1 // pred_check
      _
    $region27: #{share_refiner_forward.1} parent=1 // pred_check_branch
      %4316 = sbr.rel (0) target = $region29
    $region28: #{share_refiner_forward.1} parent=1 // pred_region
      %s4318 = ssub.s32 256, 256
      %4319 = vsyncadd [#allocation3], %s4318
      %s4320 = sshll.u32 [#allocation2], 4
      %s4321 = int_to_ptr.vmem [resolvable:$true] %s4320
      %4326 = dma.vmem_to_hbm [thread:$0]  %s4321, 256, %s6, [#allocation3], 128, 128, 8
    $region29: #{share_refiner_forward.1} parent=1 // pred_fallthru
      _
    // Predicated region
    $region30: #{share_refiner_forward.1} parent=1 // pred_check
      _
    $region31: #{share_refiner_forward.1} parent=1 // pred_check_branch
      %4328 = sbr.rel (0) target = $region33
    $region32: #{share_refiner_forward.1} parent=1 // pred_region
      %4329 = dma.done [#allocation3], 256
    $region33: #{share_refiner_forward.1} parent=1 // pred_fallthru
      _
    %4330 = vsyncpa [#allocation3], 1

</llo_original>
